<compile_context>
chip_gen: v7x
topology: tpu7x:2x2x1
jax: 0.10.0
libtpu: 0.0.40
codegen_flags: <defaults>
</compile_context>

<pallas_src>
import functools

import numpy as np
import jax
import jax.numpy as jnp
from jax.experimental import pallas as pl
from jax.experimental.pallas import tpu as pltpu

_LN_EPS = 1e-5      # PyTorch nn.LayerNorm default
_LANES = 128
_SUBLANES = 8
_HIGHEST = jax.lax.Precision.HIGHEST


# ----------------------------------------------------------------------------
# In-kernel helpers
# ----------------------------------------------------------------------------
def _leaky_relu(y):
    return jnp.where(y >= 0, y, 0.01 * y)


def _layernorm(y, g, b):
    """Exact full-row LayerNorm (shared layer)."""
    mu = jnp.mean(y, axis=-1, keepdims=True)
    yc = y - mu
    var = jnp.mean(yc * yc, axis=-1, keepdims=True)
    return yc * jax.lax.rsqrt(var + _LN_EPS) * g + b


def _seg_layernorm(y, segmat, g, b, dot):
    """Per-segment LayerNorm of a stacked activation, one MXU dot.

    segmat[i, j] = 1/seg_size if i, j belong to the same segment else 0, so
    v @ segmat broadcasts each segment's mean to all of its lanes.  E[y] and
    E[y^2] are computed in a single dot by stacking [y; y*y] along sublanes;
    var = E[y^2] - mu^2 (values are O(1), cancellation << 1e-5 at f32).
    """
    n = y.shape[0]
    stacked = jnp.concatenate([y, y * y], axis=0)          # (2B, W)
    moments = dot(stacked, segmat)                         # (2B, W)
    mu = moments[:n]
    var = moments[n:] - mu * mu
    return (y - mu) * jax.lax.rsqrt(var + _LN_EPS) * g + b


# ----------------------------------------------------------------------------
# Fused StateModule kernel (single invocation, everything resident in VMEM)
# ----------------------------------------------------------------------------
def state_module_kernel(x_ref, w_ref, o_ref, *, layout):
    def view(name):
        r0, nr, nc = layout[name]          # static python ints -> free Ref slice
        return w_ref[r0:r0 + nr, :nc]

    dot = functools.partial(jnp.dot, preferred_element_type=jnp.float32,
                            precision=_HIGHEST)

    x = x_ref[...]

    # shared_layer: Linear -> LayerNorm -> LeakyReLU(0.01) -> Dropout(eval = identity)
    h = dot(x, view("ws")) + view("bs")
    h = _leaky_relu(_layernorm(h, view("gs"), view("bts")))

    # All emotion processors fused via stacked / block-diagonal weights.
    y = dot(h, view("w1")) + view("b1")
    y = _leaky_relu(_seg_layernorm(y, view("seg1"), view("g1"), view("bt1"), dot))

    y = dot(y, view("w2")) + view("b2")
    y = _leaky_relu(_seg_layernorm(y, view("seg2"), view("g2"), view("bt2"), dot))

    # lin3 with the EmotionMixingLayer folded in; columns padded to 128 lanes
    # so the final store is a full, unmasked (Bp, 128) tile.
    o_ref[...] = jnp.tanh(dot(y, view("w3")) + view("b3"))


def make_state_module_fn(layout, n_emotions):
    """Returns a jitted wrapper: (x:(B,M), slab:(R,128)) -> (B, n_emotions)."""

    kernel = functools.partial(state_module_kernel, layout=layout)
    vmem_spec = pl.BlockSpec(memory_space=pltpu.MemorySpace.VMEM)

    @jax.jit
    def fn(x, slab):
        b = x.shape[0]
        bp = max(_SUBLANES, ((b + _SUBLANES - 1) // _SUBLANES) * _SUBLANES)
        xp = jnp.pad(x, ((0, bp - b), (0, 0)))          # fill sublanes
        out = pl.pallas_call(
            kernel,
            out_shape=jax.ShapeDtypeStruct((bp, _LANES), jnp.float32),
            in_specs=[vmem_spec, vmem_spec],
            out_specs=vmem_spec,
        )(xp, slab)
        return out[:b, :n_emotions]

    return fn


# ----------------------------------------------------------------------------
# Parameter construction (deterministic, synthetic)
# ----------------------------------------------------------------------------
def _linear(key, fan_in, fan_out):
    kw, kb = jax.random.split(key)
    bound = 1.0 / np.sqrt(fan_in)
    w = jax.random.uniform(kw, (fan_in, fan_out), jnp.float32, -bound, bound)
    b = jax.random.uniform(kb, (1, fan_out), jnp.float32, -bound, bound)
    return w, b


def init_reference_params(key, cfg):
    """Per-emotion (un-stacked) params; weights stored (in, out)."""
    M = cfg["memory_embedding_size"]
    H = cfg["state_hidden_size"]
    H2, H4 = H // 2, H // 4
    names = cfg["emotion_names"]
    E = len(names)

    keys = iter(jax.random.split(key, 4 * E + 4))
    ws, bs = _linear(next(keys), M, H)
    p = {
        "ws": ws, "bs": bs,
        "gs": jnp.ones((1, H), jnp.float32), "bts": jnp.zeros((1, H), jnp.float32),
        "emotions": {},
        "wm": jnp.eye(E, dtype=jnp.float32)
              + 0.01 * jax.random.normal(next(keys), (E, E), jnp.float32),
        "bm": jnp.zeros((1, E), jnp.float32),
    }
    for name in names:
        w1, b1 = _linear(next(keys), H, H2)
        w2, b2 = _linear(next(keys), H2, H4)
        w3, b3 = _linear(next(keys), H4, 1)
        p["emotions"][name] = {
            "w1": w1, "b1": b1,
            "g1": jnp.ones((1, H2), jnp.float32), "bt1": jnp.zeros((1, H2), jnp.float32),
            "w2": w2, "b2": b2,
            "g2": jnp.ones((1, H4), jnp.float32), "bt2": jnp.zeros((1, H4), jnp.float32),
            "w3": w3, "b3": b3,
        }
    return p


# ----------------------------------------------------------------------------
# Packing: one lane-dense slab + static row-offset layout
# ----------------------------------------------------------------------------
def _align(n, m=_SUBLANES):
    return ((n + m - 1) // m) * m


def _seg_mean_matrix(n_seg, seg_size):
    return np.kron(np.eye(n_seg, dtype=np.float32),
                   np.full((seg_size, seg_size), 1.0 / seg_size, np.float32))


def _block_diag(blocks):
    rows = sum(b.shape[0] for b in blocks)
    cols = sum(b.shape[1] for b in blocks)
    out = np.zeros((rows, cols), np.float32)
    r = c = 0
    for blk in blocks:
        out[r:r + blk.shape[0], c:c + blk.shape[1]] = blk
        r += blk.shape[0]
        c += blk.shape[1]
    return out


def pack_params(ref, cfg):
    """Stack/block-diagonalize per-emotion weights, fold the mixing layer into
    lin3, and lay everything out in a single (R, 128) f32 slab."""
    names = cfg["emotion_names"]
    H = cfg["state_hidden_size"]
    H2, H4 = H // 2, H // 4
    E = len(names)
    f = lambda a: np.asarray(a, np.float32)
    eps_ = [ref["emotions"][n] for n in names]

    # lin1: all heads share the same input -> stack along output lanes
    w1 = np.concatenate([f(e["w1"]) for e in eps_], axis=1)        # (H, E*H2)
    b1 = np.concatenate([f(e["b1"]) for e in eps_], axis=1)
    g1 = np.concatenate([f(e["g1"]) for e in eps_], axis=1)
    bt1 = np.concatenate([f(e["bt1"]) for e in eps_], axis=1)
    # lin2 / lin3: heads are independent -> block-diagonal
    w2 = _block_diag([f(e["w2"]) for e in eps_])                   # (E*H2, E*H4)
    b2 = np.concatenate([f(e["b2"]) for e in eps_], axis=1)
    g2 = np.concatenate([f(e["g2"]) for e in eps_], axis=1)
    bt2 = np.concatenate([f(e["bt2"]) for e in eps_], axis=1)
    w3 = _block_diag([f(e["w3"]) for e in eps_])                   # (E*H4, E)
    b3 = np.concatenate([f(e["b3"]) for e in eps_], axis=1)        # (1, E)

    # Fold EmotionMixingLayer into lin3 (exact: both ops are linear, tanh stays
    # in-kernel).  Pad lin3 columns to a full 128 lanes so the kernel's output
    # store is unmasked; extra lanes produce tanh(0) = 0 and are sliced off.
    wm, bm = f(ref["wm"]), f(ref["bm"])
    w3m = w3 @ wm                                                  # (E*H4, E)
    b3m = b3 @ wm + bm                                             # (1, E)
    w3p = np.zeros((E * H4, _LANES), np.float32); w3p[:, :E] = w3m
    b3p = np.zeros((1, _LANES), np.float32);      b3p[:, :E] = b3m

    tensors = [
        ("ws", f(ref["ws"])), ("bs", f(ref["bs"])),
        ("gs", f(ref["gs"])), ("bts", f(ref["bts"])),
        ("w1", w1), ("b1", b1), ("g1", g1), ("bt1", bt1),
        ("seg1", _seg_mean_matrix(E, H2)),
        ("w2", w2), ("b2", b2), ("g2", g2), ("bt2", bt2),
        ("seg2", _seg_mean_matrix(E, H4)),
        ("w3", w3p), ("b3", b3p),
    ]

    layout = {}
    row = 0
    for name, t in tensors:
        r, c = t.shape
        assert c <= _LANES, f"{name} has {c} cols > {_LANES}"
        layout[name] = (row, r, c)
        row = _align(row + r)            # keep every tensor 8-row aligned
    total_rows = _align(row)

    slab = np.zeros((total_rows, _LANES), np.float32)
    for name, t in tensors:
        r0, r, c = layout[name]
        slab[r0:r0 + r, :c] = t
    return jnp.asarray(slab), layout


# ----------------------------------------------------------------------------
# Pure-JAX reference (mirrors the PyTorch module op-by-op)
# ----------------------------------------------------------------------------
def reference_forward(ref, x, names):
    mm = functools.partial(jnp.dot, precision=_HIGHEST)

    def ln(y, g, b):
        mu = y.mean(-1, keepdims=True)
        var = ((y - mu) ** 2).mean(-1, keepdims=True)
        return (y - mu) / jnp.sqrt(var + _LN_EPS) * g + b

    def lrelu(y):
        return jnp.where(y >= 0, y, 0.01 * y)

    shared = lrelu(ln(mm(x, ref["ws"]) + ref["bs"], ref["gs"], ref["bts"]))
    vals = []
    for name in names:
        ep = ref["emotions"][name]
        h = lrelu(ln(mm(shared, ep["w1"]) + ep["b1"], ep["g1"], ep["bt1"]))
        h = lrelu(ln(mm(h, ep["w2"]) + ep["b2"], ep["g2"], ep["bt2"]))
        vals.append(mm(h, ep["w3"]) + ep["b3"])
    cat = jnp.concatenate(vals, axis=1)
    return jnp.tanh(mm(cat, ref["wm"]) + ref["bm"])


# ----------------------------------------------------------------------------
# Main
# ----------------------------------------------------------------------------
if __name__ == "__main__":
    config = {
        "memory_embedding_size": 32,
        "state_hidden_size": 32,
        "num_emotions": 4,
        "emotion_names": ["joy", "sadness", "anger", "fear"],
    }

    root = jax.random.PRNGKey(0)
    k_params, k_input = jax.random.split(root)
    ref_params = init_reference_params(k_params, config)
    slab, layout = pack_params(ref_params, config)

    batch = 2
    x = jax.random.normal(k_input, (batch, config["memory_embedding_size"]), jnp.float32)

    fused = make_state_module_fn(layout, len(config["emotion_names"]))
    mixed = fused(x, slab)                      # (B, E), one fused pallas_call
    jax.block_until_ready(mixed)

    # Correctness check against a pure-JAX reference of the PyTorch module.
    expected = reference_forward(ref_params, x, config["emotion_names"])
    np.testing.assert_allclose(np.asarray(mixed), np.asarray(expected),
                               rtol=5e-5, atol=5e-5)

    # Final dict output, matching StateModule.forward's {name: (B, 1)} result.
    result = {name: mixed[:, i:i + 1] for i, name in enumerate(config["emotion_names"])}
    for name in config["emotion_names"]:
        jax.block_until_ready(result[name])
        assert result[name].shape == (batch, 1)

    print("KERNEL_OK")
</pallas_src>

<mosaic_0001>
module attributes {stable_mosaic.version = 11 : i64} {
  func.func @state_module_kernel(%arg0: memref<8x32xf32, #tpu.memory_space<vmem>>, %arg1: memref<336x128xf32, #tpu.memory_space<vmem>>, %arg2: memref<8x128xf32, #tpu.memory_space<vmem>>) attributes {dimension_semantics = [], scalar_prefetch = 0 : i64, scratch_operands = 0 : i64, tpu.core_type = #tpu.core_type<tc>} {
    %c0 = arith.constant 0 : index
    %c0_0 = arith.constant 0 : index
    %0 = vector.load %arg0[%c0, %c0_0] : memref<8x32xf32, #tpu.memory_space<vmem>>, vector<8x32xf32>
    %c0_1 = arith.constant 0 : index
    %c0_2 = arith.constant 0 : index
    %1 = vector.load %arg1[%c0_1, %c0_2] : memref<336x128xf32, #tpu.memory_space<vmem>>, vector<32x32xf32>
    %cst = arith.constant dense<0.000000e+00> : vector<8x32xf32>
    %2 = tpu.matmul %0, %1, %cst {dimension_numbers = #tpu.dot_dimension_numbers<[1], [0], [0], [1], [0, 0, 1, 1], [], []>, precision = #tpu.contract_precision<fp32>} : vector<8x32xf32>, vector<32x32xf32>, vector<8x32xf32> -> vector<8x32xf32>
    %c32 = arith.constant 32 : index
    %c0_3 = arith.constant 0 : index
    %3 = vector.load %arg1[%c32, %c0_3] : memref<336x128xf32, #tpu.memory_space<vmem>>, vector<1x32xf32>
    %4 = vector.broadcast %3 : vector<1x32xf32> to vector<8x32xf32>
    %5 = arith.addf %2, %4 : vector<8x32xf32>
    %c40 = arith.constant 40 : index
    %c0_4 = arith.constant 0 : index
    %6 = vector.load %arg1[%c40, %c0_4] : memref<336x128xf32, #tpu.memory_space<vmem>>, vector<1x32xf32>
    %c48 = arith.constant 48 : index
    %c0_5 = arith.constant 0 : index
    %7 = vector.load %arg1[%c48, %c0_5] : memref<336x128xf32, #tpu.memory_space<vmem>>, vector<1x32xf32>
    %cst_6 = arith.constant dense<0.000000e+00> : vector<8xf32>
    %8 = vector.multi_reduction <add>, %5, %cst_6 [1] : vector<8x32xf32> to vector<8xf32>
    %9 = vector.shape_cast %8 : vector<8xf32> to vector<8x1xf32>
    %cst_7 = arith.constant 3.200000e+01 : f32
    %10 = vector.broadcast %cst_7 : f32 to vector<8x1xf32>
    %11 = arith.divf %9, %10 : vector<8x1xf32>
    %12 = vector.broadcast %11 : vector<8x1xf32> to vector<8x32xf32>
    %13 = arith.subf %5, %12 : vector<8x32xf32>
    %14 = arith.mulf %13, %13 : vector<8x32xf32>
    %cst_8 = arith.constant dense<0.000000e+00> : vector<8xf32>
    %15 = vector.multi_reduction <add>, %14, %cst_8 [1] : vector<8x32xf32> to vector<8xf32>
    %16 = vector.shape_cast %15 : vector<8xf32> to vector<8x1xf32>
    %cst_9 = arith.constant 3.200000e+01 : f32
    %17 = vector.broadcast %cst_9 : f32 to vector<8x1xf32>
    %18 = arith.divf %16, %17 : vector<8x1xf32>
    %cst_10 = arith.constant 9.99999974E-6 : f32
    %19 = vector.broadcast %cst_10 : f32 to vector<8x1xf32>
    %20 = arith.addf %18, %19 : vector<8x1xf32>
    %21 = math.rsqrt %20 : vector<8x1xf32>
    %22 = vector.broadcast %21 : vector<8x1xf32> to vector<8x32xf32>
    %23 = arith.mulf %13, %22 : vector<8x32xf32>
    %24 = vector.broadcast %6 : vector<1x32xf32> to vector<8x32xf32>
    %25 = arith.mulf %23, %24 : vector<8x32xf32>
    %26 = vector.broadcast %7 : vector<1x32xf32> to vector<8x32xf32>
    %27 = arith.addf %25, %26 : vector<8x32xf32>
    %cst_11 = arith.constant 0.000000e+00 : f32
    %28 = vector.broadcast %cst_11 : f32 to vector<8x32xf32>
    %29 = arith.cmpf oge, %27, %28 : vector<8x32xf32>
    %cst_12 = arith.constant 0.00999999977 : f32
    %30 = vector.broadcast %cst_12 : f32 to vector<8x32xf32>
    %31 = arith.mulf %30, %27 : vector<8x32xf32>
    %32 = arith.select %29, %27, %31 : vector<8x32xi1>, vector<8x32xf32>
    %c56 = arith.constant 56 : index
    %c0_13 = arith.constant 0 : index
    %33 = vector.load %arg1[%c56, %c0_13] : memref<336x128xf32, #tpu.memory_space<vmem>>, vector<32x64xf32>
    %cst_14 = arith.constant dense<0.000000e+00> : vector<8x64xf32>
    %34 = tpu.matmul %32, %33, %cst_14 {dimension_numbers = #tpu.dot_dimension_numbers<[1], [0], [0], [1], [0, 0, 1, 1], [], []>, precision = #tpu.contract_precision<fp32>} : vector<8x32xf32>, vector<32x64xf32>, vector<8x64xf32> -> vector<8x64xf32>
    %c88 = arith.constant 88 : index
    %c0_15 = arith.constant 0 : index
    %35 = vector.load %arg1[%c88, %c0_15] : memref<336x128xf32, #tpu.memory_space<vmem>>, vector<1x64xf32>
    %36 = vector.broadcast %35 : vector<1x64xf32> to vector<8x64xf32>
    %37 = arith.addf %34, %36 : vector<8x64xf32>
    %c112 = arith.constant 112 : index
    %c0_16 = arith.constant 0 : index
    %38 = vector.load %arg1[%c112, %c0_16] : memref<336x128xf32, #tpu.memory_space<vmem>>, vector<64x64xf32>
    %c96 = arith.constant 96 : index
    %c0_17 = arith.constant 0 : index
    %39 = vector.load %arg1[%c96, %c0_17] : memref<336x128xf32, #tpu.memory_space<vmem>>, vector<1x64xf32>
    %c104 = arith.constant 104 : index
    %c0_18 = arith.constant 0 : index
    %40 = vector.load %arg1[%c104, %c0_18] : memref<336x128xf32, #tpu.memory_space<vmem>>, vector<1x64xf32>
    %41 = arith.mulf %37, %37 : vector<8x64xf32>
    %42 = tpu.concatenate %37, %41 in 0 : vector<8x64xf32>, vector<8x64xf32> -> vector<16x64xf32>
    %cst_19 = arith.constant dense<0.000000e+00> : vector<16x64xf32>
    %43 = tpu.matmul %42, %38, %cst_19 {dimension_numbers = #tpu.dot_dimension_numbers<[1], [0], [0], [1], [0, 0, 1, 1], [], []>, precision = #tpu.contract_precision<fp32>} : vector<16x64xf32>, vector<64x64xf32>, vector<16x64xf32> -> vector<16x64xf32>
    %44 = vector.extract_strided_slice %43 {offsets = [0, 0], sizes = [8, 64], strides = [1, 1]} : vector<16x64xf32> to vector<8x64xf32>
    %45 = vector.extract_strided_slice %43 {offsets = [8, 0], sizes = [8, 64], strides = [1, 1]} : vector<16x64xf32> to vector<8x64xf32>
    %46 = arith.mulf %44, %44 : vector<8x64xf32>
    %47 = arith.subf %45, %46 : vector<8x64xf32>
    %48 = arith.subf %37, %44 : vector<8x64xf32>
    %cst_20 = arith.constant 9.99999974E-6 : f32
    %49 = vector.broadcast %cst_20 : f32 to vector<8x64xf32>
    %50 = arith.addf %47, %49 : vector<8x64xf32>
    %51 = math.rsqrt %50 : vector<8x64xf32>
    %52 = arith.mulf %48, %51 : vector<8x64xf32>
    %53 = vector.broadcast %39 : vector<1x64xf32> to vector<8x64xf32>
    %54 = arith.mulf %52, %53 : vector<8x64xf32>
    %55 = vector.broadcast %40 : vector<1x64xf32> to vector<8x64xf32>
    %56 = arith.addf %54, %55 : vector<8x64xf32>
    %cst_21 = arith.constant 0.000000e+00 : f32
    %57 = vector.broadcast %cst_21 : f32 to vector<8x64xf32>
    %58 = arith.cmpf oge, %56, %57 : vector<8x64xf32>
    %cst_22 = arith.constant 0.00999999977 : f32
    %59 = vector.broadcast %cst_22 : f32 to vector<8x64xf32>
    %60 = arith.mulf %59, %56 : vector<8x64xf32>
    %61 = arith.select %58, %56, %60 : vector<8x64xi1>, vector<8x64xf32>
    %c176 = arith.constant 176 : index
    %c0_23 = arith.constant 0 : index
    %62 = vector.load %arg1[%c176, %c0_23] : memref<336x128xf32, #tpu.memory_space<vmem>>, vector<64x32xf32>
    %cst_24 = arith.constant dense<0.000000e+00> : vector<8x32xf32>
    %63 = tpu.matmul %61, %62, %cst_24 {dimension_numbers = #tpu.dot_dimension_numbers<[1], [0], [0], [1], [0, 0, 1, 1], [], []>, precision = #tpu.contract_precision<fp32>} : vector<8x64xf32>, vector<64x32xf32>, vector<8x32xf32> -> vector<8x32xf32>
    %c240 = arith.constant 240 : index
    %c0_25 = arith.constant 0 : index
    %64 = vector.load %arg1[%c240, %c0_25] : memref<336x128xf32, #tpu.memory_space<vmem>>, vector<1x32xf32>
    %65 = vector.broadcast %64 : vector<1x32xf32> to vector<8x32xf32>
    %66 = arith.addf %63, %65 : vector<8x32xf32>
    %c264 = arith.constant 264 : index
    %c0_26 = arith.constant 0 : index
    %67 = vector.load %arg1[%c264, %c0_26] : memref<336x128xf32, #tpu.memory_space<vmem>>, vector<32x32xf32>
    %c248 = arith.constant 248 : index
    %c0_27 = arith.constant 0 : index
    %68 = vector.load %arg1[%c248, %c0_27] : memref<336x128xf32, #tpu.memory_space<vmem>>, vector<1x32xf32>
    %c256 = arith.constant 256 : index
    %c0_28 = arith.constant 0 : index
    %69 = vector.load %arg1[%c256, %c0_28] : memref<336x128xf32, #tpu.memory_space<vmem>>, vector<1x32xf32>
    %70 = arith.mulf %66, %66 : vector<8x32xf32>
    %71 = tpu.concatenate %66, %70 in 0 : vector<8x32xf32>, vector<8x32xf32> -> vector<16x32xf32>
    %cst_29 = arith.constant dense<0.000000e+00> : vector<16x32xf32>
    %72 = tpu.matmul %71, %67, %cst_29 {dimension_numbers = #tpu.dot_dimension_numbers<[1], [0], [0], [1], [0, 0, 1, 1], [], []>, precision = #tpu.contract_precision<fp32>} : vector<16x32xf32>, vector<32x32xf32>, vector<16x32xf32> -> vector<16x32xf32>
    %73 = vector.extract_strided_slice %72 {offsets = [0, 0], sizes = [8, 32], strides = [1, 1]} : vector<16x32xf32> to vector<8x32xf32>
    %74 = vector.extract_strided_slice %72 {offsets = [8, 0], sizes = [8, 32], strides = [1, 1]} : vector<16x32xf32> to vector<8x32xf32>
    %75 = arith.mulf %73, %73 : vector<8x32xf32>
    %76 = arith.subf %74, %75 : vector<8x32xf32>
    %77 = arith.subf %66, %73 : vector<8x32xf32>
    %cst_30 = arith.constant 9.99999974E-6 : f32
    %78 = vector.broadcast %cst_30 : f32 to vector<8x32xf32>
    %79 = arith.addf %76, %78 : vector<8x32xf32>
    %80 = math.rsqrt %79 : vector<8x32xf32>
    %81 = arith.mulf %77, %80 : vector<8x32xf32>
    %82 = vector.broadcast %68 : vector<1x32xf32> to vector<8x32xf32>
    %83 = arith.mulf %81, %82 : vector<8x32xf32>
    %84 = vector.broadcast %69 : vector<1x32xf32> to vector<8x32xf32>
    %85 = arith.addf %83, %84 : vector<8x32xf32>
    %cst_31 = arith.constant 0.000000e+00 : f32
    %86 = vector.broadcast %cst_31 : f32 to vector<8x32xf32>
    %87 = arith.cmpf oge, %85, %86 : vector<8x32xf32>
    %cst_32 = arith.constant 0.00999999977 : f32
    %88 = vector.broadcast %cst_32 : f32 to vector<8x32xf32>
    %89 = arith.mulf %88, %85 : vector<8x32xf32>
    %90 = arith.select %87, %85, %89 : vector<8x32xi1>, vector<8x32xf32>
    %c296 = arith.constant 296 : index
    %c0_33 = arith.constant 0 : index
    %91 = vector.load %arg1[%c296, %c0_33] : memref<336x128xf32, #tpu.memory_space<vmem>>, vector<32x128xf32>
    %cst_34 = arith.constant dense<0.000000e+00> : vector<8x128xf32>
    %92 = tpu.matmul %90, %91, %cst_34 {dimension_numbers = #tpu.dot_dimension_numbers<[1], [0], [0], [1], [0, 0, 1, 1], [], []>, precision = #tpu.contract_precision<fp32>} : vector<8x32xf32>, vector<32x128xf32>, vector<8x128xf32> -> vector<8x128xf32>
    %c328 = arith.constant 328 : index
    %c0_35 = arith.constant 0 : index
    %93 = vector.load %arg1[%c328, %c0_35] : memref<336x128xf32, #tpu.memory_space<vmem>>, vector<1x128xf32>
    %94 = vector.broadcast %93 : vector<1x128xf32> to vector<8x128xf32>
    %95 = arith.addf %92, %94 : vector<8x128xf32>
    %96 = math.tanh %95 : vector<8x128xf32>
    %c0_36 = arith.constant 0 : index
    %c0_37 = arith.constant 0 : index
    %97 = vector.load %arg2[%c0_36, %c0_37] : memref<8x128xf32, #tpu.memory_space<vmem>>, vector<8x128xf32>
    tpu.vector_store %arg2[%c0_36, %c0_37], %96 {strides = array<i32>} : memref<8x128xf32, #tpu.memory_space<vmem>>, vector<8x128xf32>,
    return
  }
}

</mosaic_0001>

<llo_original>
// kernel: fn.1
$region0: #{fn.1}
  #allocation0 [shape = 'u32[]', space=smem, size = 0x4, offset = 0x4, fixed_abs, tag = 'smem constant byte address 0x4 - core index']
  #allocation1 [shape = 'u32[144,128]{1,0:T(1,128)}', space=vmem, size = 0x12000, scoped, tag = 'internal scratch']
  %s0 = inlined_call_operand.vmem [shape: f32[8,32], index: 0, kind: input, shape index: {}]
  %s1 = inlined_call_operand.hbm [shape: f32[336,128], index: 1, kind: input, shape index: {}]
  %s2 = inlined_call_operand.vmem [shape: f32[8,128], index: 2, kind: output, shape index: {}]
  %s3 = sld [smem:[#allocation0]]
  $region22: #{fn.1} parent=0
    _
  %s5 = ssub.s32 1, %s3
  %s6 = scalar_select 0, %s5, %s3
  $region1: #{fn.1} parent=0
    #allocation2 [shape = 'u8[172032]{0}', space=vmem, size = 0x2a000, scoped, tag = 'input window, operand 1, single buffered']
    #allocation3 [shape = 's32[1]{0}', space=sflag, size = 0x4, scoped, tag = 'scoped memory for fn.1']
    %7 = vsyncpa [#allocation3], 0
    // Predicated region
    $region2: #{fn.1} parent=1 // pred_check
      _
    $region3: #{fn.1} parent=1 // pred_check_branch
      %9 = sbr.rel (0) target = $region5
    $region4: #{fn.1} parent=1 // pred_region
      _
    $region5: #{fn.1} parent=1 // pred_fallthru
      _
    // Predicated region
    $region6: #{fn.1} parent=1 // pred_check
      _
    $region7: #{fn.1} parent=1 // pred_check_branch
      %11 = sbr.rel (0) target = $region9
    $region8: #{fn.1} parent=1 // pred_region
      %s13 = ssub.s32 5376, 5376
      %14 = vsyncadd [#allocation3], %s13
      %s15 = sshll.u32 [#allocation2], 4
      %s16 = int_to_ptr.vmem [resolvable:$true] %s15
      %21 = dma.hbm_to_vmem [thread:$0]  %s1, 5376, %s16, [#allocation3], 128, 128, 8
    $region9: #{fn.1} parent=1 // pred_fallthru
      _
    // Predicated region
    $region10: #{fn.1} parent=1 // pred_check
      _
    $region11: #{fn.1} parent=1 // pred_check_branch
      %23 = sbr.rel (0) target = $region13
    $region12: #{fn.1} parent=1 // pred_region
      %24 = dma.done [#allocation3], 5376
    $region13: #{fn.1} parent=1 // pred_fallthru
      _
    %v25 = vld [vmem:[%s0] sm:$0xff]
    %v26 = vld [vmem:[#allocation2] sm:$0xff]
    %v27 = vld [vmem:[#allocation2 + $0x8] sm:$0xff]
    %v28 = vld [vmem:[#allocation2 + $0x10] sm:$0xff]
    %v29 = vld [vmem:[#allocation2 + $0x18] sm:$0xff]
    %v30 = vld [vmem:[#allocation2 + $0x20] sm:$0x1]
    %v31 = vlaneseq
    %v32 = vshrl.u32 %v31, 7
    %v33 = vsub.s32 0, %v32
    %v34 = vrot.slane %v30, %v33
    %vm35 = vcmask 261120
    %v37 = vsel %vm35, %v25, 0
    %39 = vmatprep.subr.mxu0 0.0
    %v40 = vand.u32 %v26, 4294901760
    %41 = vmatpush1.msra.mxu0 %v40
    %42 = vmatprep.subr.mxu0 0.0
    %v43 = vand.u32 %v27, 4294901760
    %44 = vmatpush1.msra.mxu0 %v43
    %45 = vmatprep.subr.mxu0 0.0
    %v46 = vand.u32 %v28, 4294901760
    %47 = vmatpush1.msra.mxu0 %v46
    %48 = vmatprep.subr.mxu0 0.0
    %v49 = vand.u32 %v29, 4294901760
    %50 = vmatpush1.msra.mxu0 %v49
    %51 = vmatprep.subr.mxu0 0.0
    %52 = vmatpush1.msra.mxu0 0.0
    %53 = vmatprep.subr.mxu0 0.0
    %54 = vmatpush1.msra.mxu0 0.0
    %55 = vmatprep.subr.mxu0 0.0
    %56 = vmatpush1.msra.mxu0 0.0
    %57 = vmatprep.subr.mxu0 0.0
    %58 = vmatpush1.msra.mxu0 0.0
    %59 = vmatprep.subr.mxu0 0.0
    %60 = vmatpush1.msra.mxu0 0.0
    %61 = vmatprep.subr.mxu0 0.0
    %62 = vmatpush1.msra.mxu0 0.0
    %63 = vmatprep.subr.mxu0 0.0
    %64 = vmatpush1.msra.mxu0 0.0
    %65 = vmatprep.subr.mxu0 0.0
    %66 = vmatpush1.msra.mxu0 0.0
    %67 = vmatprep.subr.mxu0 0.0
    %68 = vmatpush1.msra.mxu0 0.0
    %69 = vmatprep.subr.mxu0 0.0
    %70 = vmatpush1.msra.mxu0 0.0
    %71 = vmatprep.subr.mxu0 0.0
    %72 = vmatpush1.msra.mxu0 0.0
    %73 = vmatprep.subr.mxu0 0.0
    %74 = vmatpush1.msra.mxu0 0.0
    %75 = vmatprep.subr.mxu0 0.0
    %76 = vmatpush1.msra.mxu0 0.0
    %77 = vmatprep.subr.mxu0 0.0
    %78 = vmatpush1.msra.mxu0 0.0
    %79 = vmatprep.subr.mxu0 0.0
    %80 = vmatpush1.msra.mxu0 0.0
    %81 = vmatprep.subr.mxu0 0.0
    %82 = vmatpush1.msra.mxu0 0.0
    %83 = vmatprep.subr.mxu0 0.0
    %84 = vmatpush1.msra.mxu0 0.0
    %85 = vmatprep.subr.mxu0 0.0
    %86 = vmatpush1.msra.mxu0 0.0
    %87 = vmatprep.subr.mxu0 0.0
    %88 = vmatpush1.msra.mxu0 0.0
    %89 = vmatprep.subr.mxu0 0.0
    %90 = vmatpush1.msra.mxu0 0.0
    %91 = vmatprep.subr.mxu0 0.0
    %92 = vmatpush1.msra.mxu0 0.0
    %93 = vmatprep.subr.mxu0 0.0
    %94 = vmatpush1.msra.mxu0 0.0
    %95 = vmatprep.subr.mxu0 0.0
    %96 = vmatpush1.msra.mxu0 0.0
    %97 = vmatprep.subr.mxu0 0.0
    %98 = vmatpush1.msra.mxu0 0.0
    %99 = vmatprep.subr.mxu0 0.0
    %100 = vmatpush1.msra.mxu0 0.0
    %101 = vmatprep.subr.mxu0 0.0
    %102 = vmatpush1.msra.mxu0 0.0
    %103 = vmatprep.subr.mxu0 0.0
    %104 = vmatpush1.msra.mxu0 0.0
    %105 = vmatprep.subr.mxu0 0.0
    %106 = vmatpush1.msra.mxu0 0.0
    %107 = vmatprep.mubr.f32.mxu0 0.0
    %v108 = vand.u32 %v37, 4294901760
    %v109 = vsub.f32 %v37, %v108
    %v110 = vand.u32 %v109, 4294901760
    %v111 = vsub.f32 %v109, %v110
    %v112 = vand.u32 %v111, 4294901760
    %113 = vmatmul.mubr.f32.gmra.mrb[0].mxu0 %v112
    %v114 = vpop.f32.mrb[0].mxu0
    %v115 = vadd.f32 %v34, %v114
    %v116 = vpop.f32.mrb[0].mxu0
    %117 = vdwg.mxu0
    %118 = vmatprep.subr.mxu0 0.0
    %v119 = vand.u32 %v26, 4294901760
    %v120 = vsub.f32 %v26, %v119
    %v121 = vand.u32 %v120, 4294901760
    %v122 = vsub.f32 %v120, %v121
    %v123 = vand.u32 %v122, 4294901760
    %124 = vmatpush1.msra.mxu0 %v123
    %125 = vmatprep.subr.mxu0 0.0
    %v126 = vand.u32 %v27, 4294901760
    %v127 = vsub.f32 %v27, %v126
    %v128 = vand.u32 %v127, 4294901760
    %v129 = vsub.f32 %v127, %v128
    %v130 = vand.u32 %v129, 4294901760
    %131 = vmatpush1.msra.mxu0 %v130
    %132 = vmatprep.subr.mxu0 0.0
    %v133 = vand.u32 %v28, 4294901760
    %v134 = vsub.f32 %v28, %v133
    %v135 = vand.u32 %v134, 4294901760
    %v136 = vsub.f32 %v134, %v135
    %v137 = vand.u32 %v136, 4294901760
    %138 = vmatpush1.msra.mxu0 %v137
    %139 = vmatprep.subr.mxu0 0.0
    %v140 = vand.u32 %v29, 4294901760
    %v141 = vsub.f32 %v29, %v140
    %v142 = vand.u32 %v141, 4294901760
    %v143 = vsub.f32 %v141, %v142
    %v144 = vand.u32 %v143, 4294901760
    %145 = vmatpush1.msra.mxu0 %v144
    %146 = vmatprep.subr.mxu0 0.0
    %147 = vmatpush1.msra.mxu0 0.0
    %148 = vmatprep.subr.mxu0 0.0
    %149 = vmatpush1.msra.mxu0 0.0
    %150 = vmatprep.subr.mxu0 0.0
    %151 = vmatpush1.msra.mxu0 0.0
    %152 = vmatprep.subr.mxu0 0.0
    %153 = vmatpush1.msra.mxu0 0.0
    %154 = vmatprep.subr.mxu0 0.0
    %155 = vmatpush1.msra.mxu0 0.0
    %156 = vmatprep.subr.mxu0 0.0
    %157 = vmatpush1.msra.mxu0 0.0
    %158 = vmatprep.subr.mxu0 0.0
    %159 = vmatpush1.msra.mxu0 0.0
    %160 = vmatprep.subr.mxu0 0.0
    %161 = vmatpush1.msra.mxu0 0.0
    %162 = vmatprep.subr.mxu0 0.0
    %163 = vmatpush1.msra.mxu0 0.0
    %164 = vmatprep.subr.mxu0 0.0
    %165 = vmatpush1.msra.mxu0 0.0
    %166 = vmatprep.subr.mxu0 0.0
    %167 = vmatpush1.msra.mxu0 0.0
    %168 = vmatprep.subr.mxu0 0.0
    %169 = vmatpush1.msra.mxu0 0.0
    %170 = vmatprep.subr.mxu0 0.0
    %171 = vmatpush1.msra.mxu0 0.0
    %172 = vmatprep.subr.mxu0 0.0
    %173 = vmatpush1.msra.mxu0 0.0
    %174 = vmatprep.subr.mxu0 0.0
    %175 = vmatpush1.msra.mxu0 0.0
    %176 = vmatprep.subr.mxu0 0.0
    %177 = vmatpush1.msra.mxu0 0.0
    %178 = vmatprep.subr.mxu0 0.0
    %179 = vmatpush1.msra.mxu0 0.0
    %180 = vmatprep.subr.mxu0 0.0
    %181 = vmatpush1.msra.mxu0 0.0
    %182 = vmatprep.subr.mxu0 0.0
    %183 = vmatpush1.msra.mxu0 0.0
    %184 = vmatprep.subr.mxu0 0.0
    %185 = vmatpush1.msra.mxu0 0.0
    %186 = vmatprep.subr.mxu0 0.0
    %187 = vmatpush1.msra.mxu0 0.0
    %188 = vmatprep.subr.mxu0 0.0
    %189 = vmatpush1.msra.mxu0 0.0
    %190 = vmatprep.subr.mxu0 0.0
    %191 = vmatpush1.msra.mxu0 0.0
    %192 = vmatprep.subr.mxu0 0.0
    %193 = vmatpush1.msra.mxu0 0.0
    %194 = vmatprep.subr.mxu0 0.0
    %195 = vmatpush1.msra.mxu0 0.0
    %196 = vmatprep.subr.mxu0 0.0
    %197 = vmatpush1.msra.mxu0 0.0
    %198 = vmatprep.subr.mxu0 0.0
    %199 = vmatpush1.msra.mxu0 0.0
    %200 = vmatprep.subr.mxu0 0.0
    %201 = vmatpush1.msra.mxu0 0.0
    %202 = vmatprep.mubr.f32.mxu0 0.0
    %v203 = vand.u32 %v37, 4294901760
    %204 = vmatmul.mubr.f32.gmra.mrb[0].mxu0 %v203
    %v205 = vpop.f32.mrb[0].mxu0
    %v206 = vadd.f32 %v115, %v205
    %v207 = vpop.f32.mrb[0].mxu0
    %208 = vdwg.mxu0
    %209 = vmatprep.subr.mxu0 0.0
    %v210 = vand.u32 %v26, 4294901760
    %v211 = vsub.f32 %v26, %v210
    %212 = vmatpush1.msra.mxu0 %v211
    %213 = vmatprep.subr.mxu0 0.0
    %v214 = vand.u32 %v27, 4294901760
    %v215 = vsub.f32 %v27, %v214
    %216 = vmatpush1.msra.mxu0 %v215
    %217 = vmatprep.subr.mxu0 0.0
    %v218 = vand.u32 %v28, 4294901760
    %v219 = vsub.f32 %v28, %v218
    %220 = vmatpush1.msra.mxu0 %v219
    %221 = vmatprep.subr.mxu0 0.0
    %v222 = vand.u32 %v29, 4294901760
    %v223 = vsub.f32 %v29, %v222
    %224 = vmatpush1.msra.mxu0 %v223
    %225 = vmatprep.subr.mxu0 0.0
    %226 = vmatpush1.msra.mxu0 0.0
    %227 = vmatprep.subr.mxu0 0.0
    %228 = vmatpush1.msra.mxu0 0.0
    %229 = vmatprep.subr.mxu0 0.0
    %230 = vmatpush1.msra.mxu0 0.0
    %231 = vmatprep.subr.mxu0 0.0
    %232 = vmatpush1.msra.mxu0 0.0
    %233 = vmatprep.subr.mxu0 0.0
    %234 = vmatpush1.msra.mxu0 0.0
    %235 = vmatprep.subr.mxu0 0.0
    %236 = vmatpush1.msra.mxu0 0.0
    %237 = vmatprep.subr.mxu0 0.0
    %238 = vmatpush1.msra.mxu0 0.0
    %239 = vmatprep.subr.mxu0 0.0
    %240 = vmatpush1.msra.mxu0 0.0
    %241 = vmatprep.subr.mxu0 0.0
    %242 = vmatpush1.msra.mxu0 0.0
    %243 = vmatprep.subr.mxu0 0.0
    %244 = vmatpush1.msra.mxu0 0.0
    %245 = vmatprep.subr.mxu0 0.0
    %246 = vmatpush1.msra.mxu0 0.0
    %247 = vmatprep.subr.mxu0 0.0
    %248 = vmatpush1.msra.mxu0 0.0
    %249 = vmatprep.subr.mxu0 0.0
    %250 = vmatpush1.msra.mxu0 0.0
    %251 = vmatprep.subr.mxu0 0.0
    %252 = vmatpush1.msra.mxu0 0.0
    %253 = vmatprep.subr.mxu0 0.0
    %254 = vmatpush1.msra.mxu0 0.0
    %255 = vmatprep.subr.mxu0 0.0
    %256 = vmatpush1.msra.mxu0 0.0
    %257 = vmatprep.subr.mxu0 0.0
    %258 = vmatpush1.msra.mxu0 0.0
    %259 = vmatprep.subr.mxu0 0.0
    %260 = vmatpush1.msra.mxu0 0.0
    %261 = vmatprep.subr.mxu0 0.0
    %262 = vmatpush1.msra.mxu0 0.0
    %263 = vmatprep.subr.mxu0 0.0
    %264 = vmatpush1.msra.mxu0 0.0
    %265 = vmatprep.subr.mxu0 0.0
    %266 = vmatpush1.msra.mxu0 0.0
    %267 = vmatprep.subr.mxu0 0.0
    %268 = vmatpush1.msra.mxu0 0.0
    %269 = vmatprep.subr.mxu0 0.0
    %270 = vmatpush1.msra.mxu0 0.0
    %271 = vmatprep.subr.mxu0 0.0
    %272 = vmatpush1.msra.mxu0 0.0
    %273 = vmatprep.subr.mxu0 0.0
    %274 = vmatpush1.msra.mxu0 0.0
    %275 = vmatprep.subr.mxu0 0.0
    %276 = vmatpush1.msra.mxu0 0.0
    %277 = vmatprep.subr.mxu0 0.0
    %278 = vmatpush1.msra.mxu0 0.0
    %279 = vmatprep.subr.mxu0 0.0
    %280 = vmatpush1.msra.mxu0 0.0
    %281 = vmatprep.mubr.f32.mxu0 0.0
    %v282 = vand.u32 %v37, 4294901760
    %v283 = vsub.f32 %v37, %v282
    %284 = vmatmul.mubr.f32.gmra.mrb[0].mxu0 %v283
    %v285 = vpop.f32.mrb[0].mxu0
    %v286 = vadd.f32 %v206, %v285
    %v287 = vpop.f32.mrb[0].mxu0
    %288 = vdwg.mxu0
    %289 = vmatprep.subr.mxu0 0.0
    %v290 = vand.u32 %v26, 4294901760
    %291 = vmatpush1.msra.mxu0 %v290
    %292 = vmatprep.subr.mxu0 0.0
    %v293 = vand.u32 %v27, 4294901760
    %294 = vmatpush1.msra.mxu0 %v293
    %295 = vmatprep.subr.mxu0 0.0
    %v296 = vand.u32 %v28, 4294901760
    %297 = vmatpush1.msra.mxu0 %v296
    %298 = vmatprep.subr.mxu0 0.0
    %v299 = vand.u32 %v29, 4294901760
    %300 = vmatpush1.msra.mxu0 %v299
    %301 = vmatprep.subr.mxu0 0.0
    %302 = vmatpush1.msra.mxu0 0.0
    %303 = vmatprep.subr.mxu0 0.0
    %304 = vmatpush1.msra.mxu0 0.0
    %305 = vmatprep.subr.mxu0 0.0
    %306 = vmatpush1.msra.mxu0 0.0
    %307 = vmatprep.subr.mxu0 0.0
    %308 = vmatpush1.msra.mxu0 0.0
    %309 = vmatprep.subr.mxu0 0.0
    %310 = vmatpush1.msra.mxu0 0.0
    %311 = vmatprep.subr.mxu0 0.0
    %312 = vmatpush1.msra.mxu0 0.0
    %313 = vmatprep.subr.mxu0 0.0
    %314 = vmatpush1.msra.mxu0 0.0
    %315 = vmatprep.subr.mxu0 0.0
    %316 = vmatpush1.msra.mxu0 0.0
    %317 = vmatprep.subr.mxu0 0.0
    %318 = vmatpush1.msra.mxu0 0.0
    %319 = vmatprep.subr.mxu0 0.0
    %320 = vmatpush1.msra.mxu0 0.0
    %321 = vmatprep.subr.mxu0 0.0
    %322 = vmatpush1.msra.mxu0 0.0
    %323 = vmatprep.subr.mxu0 0.0
    %324 = vmatpush1.msra.mxu0 0.0
    %325 = vmatprep.subr.mxu0 0.0
    %326 = vmatpush1.msra.mxu0 0.0
    %327 = vmatprep.subr.mxu0 0.0
    %328 = vmatpush1.msra.mxu0 0.0
    %329 = vmatprep.subr.mxu0 0.0
    %330 = vmatpush1.msra.mxu0 0.0
    %331 = vmatprep.subr.mxu0 0.0
    %332 = vmatpush1.msra.mxu0 0.0
    %333 = vmatprep.subr.mxu0 0.0
    %334 = vmatpush1.msra.mxu0 0.0
    %335 = vmatprep.subr.mxu0 0.0
    %336 = vmatpush1.msra.mxu0 0.0
    %337 = vmatprep.subr.mxu0 0.0
    %338 = vmatpush1.msra.mxu0 0.0
    %339 = vmatprep.subr.mxu0 0.0
    %340 = vmatpush1.msra.mxu0 0.0
    %341 = vmatprep.subr.mxu0 0.0
    %342 = vmatpush1.msra.mxu0 0.0
    %343 = vmatprep.subr.mxu0 0.0
    %344 = vmatpush1.msra.mxu0 0.0
    %345 = vmatprep.subr.mxu0 0.0
    %346 = vmatpush1.msra.mxu0 0.0
    %347 = vmatprep.subr.mxu0 0.0
    %348 = vmatpush1.msra.mxu0 0.0
    %349 = vmatprep.subr.mxu0 0.0
    %350 = vmatpush1.msra.mxu0 0.0
    %351 = vmatprep.subr.mxu0 0.0
    %352 = vmatpush1.msra.mxu0 0.0
    %353 = vmatprep.subr.mxu0 0.0
    %354 = vmatpush1.msra.mxu0 0.0
    %355 = vmatprep.subr.mxu0 0.0
    %356 = vmatpush1.msra.mxu0 0.0
    %357 = vmatprep.mubr.f32.mxu0 0.0
    %v358 = vand.u32 %v37, 4294901760
    %v359 = vsub.f32 %v37, %v358
    %v360 = vand.u32 %v359, 4294901760
    %361 = vmatmul.mubr.f32.gmra.mrb[0].mxu0 %v360
    %v362 = vpop.f32.mrb[0].mxu0
    %v363 = vadd.f32 %v286, %v362
    %v364 = vpop.f32.mrb[0].mxu0
    %365 = vdwg.mxu0
    %366 = vmatprep.subr.mxu0 0.0
    %v367 = vand.u32 %v26, 4294901760
    %v368 = vsub.f32 %v26, %v367
    %v369 = vand.u32 %v368, 4294901760
    %370 = vmatpush1.msra.mxu0 %v369
    %371 = vmatprep.subr.mxu0 0.0
    %v372 = vand.u32 %v27, 4294901760
    %v373 = vsub.f32 %v27, %v372
    %v374 = vand.u32 %v373, 4294901760
    %375 = vmatpush1.msra.mxu0 %v374
    %376 = vmatprep.subr.mxu0 0.0
    %v377 = vand.u32 %v28, 4294901760
    %v378 = vsub.f32 %v28, %v377
    %v379 = vand.u32 %v378, 4294901760
    %380 = vmatpush1.msra.mxu0 %v379
    %381 = vmatprep.subr.mxu0 0.0
    %v382 = vand.u32 %v29, 4294901760
    %v383 = vsub.f32 %v29, %v382
    %v384 = vand.u32 %v383, 4294901760
    %385 = vmatpush1.msra.mxu0 %v384
    %386 = vmatprep.subr.mxu0 0.0
    %387 = vmatpush1.msra.mxu0 0.0
    %388 = vmatprep.subr.mxu0 0.0
    %389 = vmatpush1.msra.mxu0 0.0
    %390 = vmatprep.subr.mxu0 0.0
    %391 = vmatpush1.msra.mxu0 0.0
    %392 = vmatprep.subr.mxu0 0.0
    %393 = vmatpush1.msra.mxu0 0.0
    %394 = vmatprep.subr.mxu0 0.0
    %395 = vmatpush1.msra.mxu0 0.0
    %396 = vmatprep.subr.mxu0 0.0
    %397 = vmatpush1.msra.mxu0 0.0
    %398 = vmatprep.subr.mxu0 0.0
    %399 = vmatpush1.msra.mxu0 0.0
    %400 = vmatprep.subr.mxu0 0.0
    %401 = vmatpush1.msra.mxu0 0.0
    %402 = vmatprep.subr.mxu0 0.0
    %403 = vmatpush1.msra.mxu0 0.0
    %404 = vmatprep.subr.mxu0 0.0
    %405 = vmatpush1.msra.mxu0 0.0
    %406 = vmatprep.subr.mxu0 0.0
    %407 = vmatpush1.msra.mxu0 0.0
    %408 = vmatprep.subr.mxu0 0.0
    %409 = vmatpush1.msra.mxu0 0.0
    %410 = vmatprep.subr.mxu0 0.0
    %411 = vmatpush1.msra.mxu0 0.0
    %412 = vmatprep.subr.mxu0 0.0
    %413 = vmatpush1.msra.mxu0 0.0
    %414 = vmatprep.subr.mxu0 0.0
    %415 = vmatpush1.msra.mxu0 0.0
    %416 = vmatprep.subr.mxu0 0.0
    %417 = vmatpush1.msra.mxu0 0.0
    %418 = vmatprep.subr.mxu0 0.0
    %419 = vmatpush1.msra.mxu0 0.0
    %420 = vmatprep.subr.mxu0 0.0
    %421 = vmatpush1.msra.mxu0 0.0
    %422 = vmatprep.subr.mxu0 0.0
    %423 = vmatpush1.msra.mxu0 0.0
    %424 = vmatprep.subr.mxu0 0.0
    %425 = vmatpush1.msra.mxu0 0.0
    %426 = vmatprep.subr.mxu0 0.0
    %427 = vmatpush1.msra.mxu0 0.0
    %428 = vmatprep.subr.mxu0 0.0
    %429 = vmatpush1.msra.mxu0 0.0
    %430 = vmatprep.subr.mxu0 0.0
    %431 = vmatpush1.msra.mxu0 0.0
    %432 = vmatprep.subr.mxu0 0.0
    %433 = vmatpush1.msra.mxu0 0.0
    %434 = vmatprep.subr.mxu0 0.0
    %435 = vmatpush1.msra.mxu0 0.0
    %436 = vmatprep.subr.mxu0 0.0
    %437 = vmatpush1.msra.mxu0 0.0
    %438 = vmatprep.subr.mxu0 0.0
    %439 = vmatpush1.msra.mxu0 0.0
    %440 = vmatprep.subr.mxu0 0.0
    %441 = vmatpush1.msra.mxu0 0.0
    %442 = vmatprep.mubr.f32.mxu0 0.0
    %v443 = vand.u32 %v37, 4294901760
    %444 = vmatmul.mubr.f32.gmra.mrb[0].mxu0 %v443
    %v445 = vpop.f32.mrb[0].mxu0
    %v446 = vadd.f32 %v363, %v445
    %v447 = vpop.f32.mrb[0].mxu0
    %448 = vdwg.mxu0
    %449 = vmatprep.subr.mxu0 0.0
    %v450 = vand.u32 %v26, 4294901760
    %451 = vmatpush1.msra.mxu0 %v450
    %452 = vmatprep.subr.mxu0 0.0
    %v453 = vand.u32 %v27, 4294901760
    %454 = vmatpush1.msra.mxu0 %v453
    %455 = vmatprep.subr.mxu0 0.0
    %v456 = vand.u32 %v28, 4294901760
    %457 = vmatpush1.msra.mxu0 %v456
    %458 = vmatprep.subr.mxu0 0.0
    %v459 = vand.u32 %v29, 4294901760
    %460 = vmatpush1.msra.mxu0 %v459
    %461 = vmatprep.subr.mxu0 0.0
    %462 = vmatpush1.msra.mxu0 0.0
    %463 = vmatprep.subr.mxu0 0.0
    %464 = vmatpush1.msra.mxu0 0.0
    %465 = vmatprep.subr.mxu0 0.0
    %466 = vmatpush1.msra.mxu0 0.0
    %467 = vmatprep.subr.mxu0 0.0
    %468 = vmatpush1.msra.mxu0 0.0
    %469 = vmatprep.subr.mxu0 0.0
    %470 = vmatpush1.msra.mxu0 0.0
    %471 = vmatprep.subr.mxu0 0.0
    %472 = vmatpush1.msra.mxu0 0.0
    %473 = vmatprep.subr.mxu0 0.0
    %474 = vmatpush1.msra.mxu0 0.0
    %475 = vmatprep.subr.mxu0 0.0
    %476 = vmatpush1.msra.mxu0 0.0
    %477 = vmatprep.subr.mxu0 0.0
    %478 = vmatpush1.msra.mxu0 0.0
    %479 = vmatprep.subr.mxu0 0.0
    %480 = vmatpush1.msra.mxu0 0.0
    %481 = vmatprep.subr.mxu0 0.0
    %482 = vmatpush1.msra.mxu0 0.0
    %483 = vmatprep.subr.mxu0 0.0
    %484 = vmatpush1.msra.mxu0 0.0
    %485 = vmatprep.subr.mxu0 0.0
    %486 = vmatpush1.msra.mxu0 0.0
    %487 = vmatprep.subr.mxu0 0.0
    %488 = vmatpush1.msra.mxu0 0.0
    %489 = vmatprep.subr.mxu0 0.0
    %490 = vmatpush1.msra.mxu0 0.0
    %491 = vmatprep.subr.mxu0 0.0
    %492 = vmatpush1.msra.mxu0 0.0
    %493 = vmatprep.subr.mxu0 0.0
    %494 = vmatpush1.msra.mxu0 0.0
    %495 = vmatprep.subr.mxu0 0.0
    %496 = vmatpush1.msra.mxu0 0.0
    %497 = vmatprep.subr.mxu0 0.0
    %498 = vmatpush1.msra.mxu0 0.0
    %499 = vmatprep.subr.mxu0 0.0
    %500 = vmatpush1.msra.mxu0 0.0
    %501 = vmatprep.subr.mxu0 0.0
    %502 = vmatpush1.msra.mxu0 0.0
    %503 = vmatprep.subr.mxu0 0.0
    %504 = vmatpush1.msra.mxu0 0.0
    %505 = vmatprep.subr.mxu0 0.0
    %506 = vmatpush1.msra.mxu0 0.0
    %507 = vmatprep.subr.mxu0 0.0
    %508 = vmatpush1.msra.mxu0 0.0
    %509 = vmatprep.subr.mxu0 0.0
    %510 = vmatpush1.msra.mxu0 0.0
    %511 = vmatprep.subr.mxu0 0.0
    %512 = vmatpush1.msra.mxu0 0.0
    %513 = vmatprep.subr.mxu0 0.0
    %514 = vmatpush1.msra.mxu0 0.0
    %515 = vmatprep.subr.mxu0 0.0
    %516 = vmatpush1.msra.mxu0 0.0
    %517 = vmatprep.mubr.f32.mxu0 0.0
    %v518 = vand.u32 %v37, 4294901760
    %519 = vmatmul.mubr.f32.gmra.mrb[0].mxu0 %v518
    %v520 = vpop.f32.mrb[0].mxu0
    %v521 = vadd.f32 %v446, %v520
    %v522 = vpop.f32.mrb[0].mxu0
    %523 = vdwg.mxu0
    %v524 = vld [vmem:[#allocation2 + $0x28] sm:$0x1]
    %v525 = vld [vmem:[#allocation2 + $0x30] sm:$0x1]
    %v526 = vsel %vm35, %v521, 0.0
    %527 = vadd.xlane.f32.xlu0 %v526
    %v528 = vpop.xlane.xlu0 %527
    %v529 = vrcp.pop 32.0
    %v530 = vmul.f32 %v528, %v529
    %v531 = vsub.f32 %v521, %v530
    %v532 = vmul.f32 %v531, %v531
    %v533 = vsel %vm35, %v532, 0.0
    %534 = vadd.xlane.f32.xlu0 %v533
    %v535 = vpop.xlane.xlu0 %534
    %v536 = vmul.f32 %v535, %v529
    %v537 = vadd.f32 %v536, 1e-05
    %v538 = vrsqrt.pop %v537
    %v539 = vmul.f32 %v531, %v538
    %v540 = vlaneseq
    %v541 = vshrl.u32 %v540, 7
    %v542 = vsub.s32 0, %v541
    %v543 = vrot.slane %v524, %v542
    %v544 = vmul.f32 %v539, %v543
    %v545 = vlaneseq
    %v546 = vshrl.u32 %v545, 7
    %v547 = vsub.s32 0, %v546
    %v548 = vrot.slane %v525, %v547
    %v549 = vadd.f32 %v544, %v548
    %vm550 = vcmp.ge.f32.partialorder %v549, 0.0
    %v551 = vmul.f32 %v549, 0.01
    %v552 = vsel %vm550, %v549, %v551
    %v553 = vld [vmem:[#allocation2 + $0x38] sm:$0xff]
    %v554 = vld [vmem:[#allocation2 + $0x40] sm:$0xff]
    %v555 = vld [vmem:[#allocation2 + $0x48] sm:$0xff]
    %v556 = vld [vmem:[#allocation2 + $0x50] sm:$0xff]
    %v557 = vld [vmem:[#allocation2 + $0x58] sm:$0x1]
    %v558 = vlaneseq
    %v559 = vshrl.u32 %v558, 7
    %v560 = vsub.s32 0, %v559
    %v561 = vrot.slane %v557, %v560
    %v563 = vsel %vm35, %v552, 0
    %565 = vmatprep.subr.mxu0 0.0
    %v566 = vand.u32 %v553, 4294901760
    %567 = vmatpush1.msra.mxu0 %v566
    %568 = vmatprep.subr.mxu0 0.0
    %v569 = vand.u32 %v554, 4294901760
    %570 = vmatpush1.msra.mxu0 %v569
    %571 = vmatprep.subr.mxu0 0.0
    %v572 = vand.u32 %v555, 4294901760
    %573 = vmatpush1.msra.mxu0 %v572
    %574 = vmatprep.subr.mxu0 0.0
    %v575 = vand.u32 %v556, 4294901760
    %576 = vmatpush1.msra.mxu0 %v575
    %577 = vmatprep.subr.mxu0 0.0
    %578 = vmatpush1.msra.mxu0 0.0
    %579 = vmatprep.subr.mxu0 0.0
    %580 = vmatpush1.msra.mxu0 0.0
    %581 = vmatprep.subr.mxu0 0.0
    %582 = vmatpush1.msra.mxu0 0.0
    %583 = vmatprep.subr.mxu0 0.0
    %584 = vmatpush1.msra.mxu0 0.0
    %585 = vmatprep.subr.mxu0 0.0
    %586 = vmatpush1.msra.mxu0 0.0
    %587 = vmatprep.subr.mxu0 0.0
    %588 = vmatpush1.msra.mxu0 0.0
    %589 = vmatprep.subr.mxu0 0.0
    %590 = vmatpush1.msra.mxu0 0.0
    %591 = vmatprep.subr.mxu0 0.0
    %592 = vmatpush1.msra.mxu0 0.0
    %593 = vmatprep.subr.mxu0 0.0
    %594 = vmatpush1.msra.mxu0 0.0
    %595 = vmatprep.subr.mxu0 0.0
    %596 = vmatpush1.msra.mxu0 0.0
    %597 = vmatprep.subr.mxu0 0.0
    %598 = vmatpush1.msra.mxu0 0.0
    %599 = vmatprep.subr.mxu0 0.0
    %600 = vmatpush1.msra.mxu0 0.0
    %601 = vmatprep.subr.mxu0 0.0
    %602 = vmatpush1.msra.mxu0 0.0
    %603 = vmatprep.subr.mxu0 0.0
    %604 = vmatpush1.msra.mxu0 0.0
    %605 = vmatprep.subr.mxu0 0.0
    %606 = vmatpush1.msra.mxu0 0.0
    %607 = vmatprep.subr.mxu0 0.0
    %608 = vmatpush1.msra.mxu0 0.0
    %609 = vmatprep.subr.mxu0 0.0
    %610 = vmatpush1.msra.mxu0 0.0
    %611 = vmatprep.subr.mxu0 0.0
    %612 = vmatpush1.msra.mxu0 0.0
    %613 = vmatprep.subr.mxu0 0.0
    %614 = vmatpush1.msra.mxu0 0.0
    %615 = vmatprep.subr.mxu0 0.0
    %616 = vmatpush1.msra.mxu0 0.0
    %617 = vmatprep.subr.mxu0 0.0
    %618 = vmatpush1.msra.mxu0 0.0
    %619 = vmatprep.subr.mxu0 0.0
    %620 = vmatpush1.msra.mxu0 0.0
    %621 = vmatprep.subr.mxu0 0.0
    %622 = vmatpush1.msra.mxu0 0.0
    %623 = vmatprep.subr.mxu0 0.0
    %624 = vmatpush1.msra.mxu0 0.0
    %625 = vmatprep.subr.mxu0 0.0
    %626 = vmatpush1.msra.mxu0 0.0
    %627 = vmatprep.subr.mxu0 0.0
    %628 = vmatpush1.msra.mxu0 0.0
    %629 = vmatprep.subr.mxu0 0.0
    %630 = vmatpush1.msra.mxu0 0.0
    %631 = vmatprep.subr.mxu0 0.0
    %632 = vmatpush1.msra.mxu0 0.0
    %633 = vmatprep.mubr.f32.mxu0 0.0
    %v634 = vand.u32 %v563, 4294901760
    %v635 = vsub.f32 %v563, %v634
    %v636 = vand.u32 %v635, 4294901760
    %v637 = vsub.f32 %v635, %v636
    %v638 = vand.u32 %v637, 4294901760
    %639 = vmatmul.mubr.f32.gmra.mrb[0].mxu0 %v638
    %v640 = vpop.f32.mrb[0].mxu0
    %v641 = vadd.f32 %v561, %v640
    %v642 = vpop.f32.mrb[0].mxu0
    %643 = vdwg.mxu0
    %644 = vmatprep.subr.mxu0 0.0
    %v645 = vand.u32 %v553, 4294901760
    %v646 = vsub.f32 %v553, %v645
    %v647 = vand.u32 %v646, 4294901760
    %v648 = vsub.f32 %v646, %v647
    %v649 = vand.u32 %v648, 4294901760
    %650 = vmatpush1.msra.mxu0 %v649
    %651 = vmatprep.subr.mxu0 0.0
    %v652 = vand.u32 %v554, 4294901760
    %v653 = vsub.f32 %v554, %v652
    %v654 = vand.u32 %v653, 4294901760
    %v655 = vsub.f32 %v653, %v654
    %v656 = vand.u32 %v655, 4294901760
    %657 = vmatpush1.msra.mxu0 %v656
    %658 = vmatprep.subr.mxu0 0.0
    %v659 = vand.u32 %v555, 4294901760
    %v660 = vsub.f32 %v555, %v659
    %v661 = vand.u32 %v660, 4294901760
    %v662 = vsub.f32 %v660, %v661
    %v663 = vand.u32 %v662, 4294901760
    %664 = vmatpush1.msra.mxu0 %v663
    %665 = vmatprep.subr.mxu0 0.0
    %v666 = vand.u32 %v556, 4294901760
    %v667 = vsub.f32 %v556, %v666
    %v668 = vand.u32 %v667, 4294901760
    %v669 = vsub.f32 %v667, %v668
    %v670 = vand.u32 %v669, 4294901760
    %671 = vmatpush1.msra.mxu0 %v670
    %672 = vmatprep.subr.mxu0 0.0
    %673 = vmatpush1.msra.mxu0 0.0
    %674 = vmatprep.subr.mxu0 0.0
    %675 = vmatpush1.msra.mxu0 0.0
    %676 = vmatprep.subr.mxu0 0.0
    %677 = vmatpush1.msra.mxu0 0.0
    %678 = vmatprep.subr.mxu0 0.0
    %679 = vmatpush1.msra.mxu0 0.0
    %680 = vmatprep.subr.mxu0 0.0
    %681 = vmatpush1.msra.mxu0 0.0
    %682 = vmatprep.subr.mxu0 0.0
    %683 = vmatpush1.msra.mxu0 0.0
    %684 = vmatprep.subr.mxu0 0.0
    %685 = vmatpush1.msra.mxu0 0.0
    %686 = vmatprep.subr.mxu0 0.0
    %687 = vmatpush1.msra.mxu0 0.0
    %688 = vmatprep.subr.mxu0 0.0
    %689 = vmatpush1.msra.mxu0 0.0
    %690 = vmatprep.subr.mxu0 0.0
    %691 = vmatpush1.msra.mxu0 0.0
    %692 = vmatprep.subr.mxu0 0.0
    %693 = vmatpush1.msra.mxu0 0.0
    %694 = vmatprep.subr.mxu0 0.0
    %695 = vmatpush1.msra.mxu0 0.0
    %696 = vmatprep.subr.mxu0 0.0
    %697 = vmatpush1.msra.mxu0 0.0
    %698 = vmatprep.subr.mxu0 0.0
    %699 = vmatpush1.msra.mxu0 0.0
    %700 = vmatprep.subr.mxu0 0.0
    %701 = vmatpush1.msra.mxu0 0.0
    %702 = vmatprep.subr.mxu0 0.0
    %703 = vmatpush1.msra.mxu0 0.0
    %704 = vmatprep.subr.mxu0 0.0
    %705 = vmatpush1.msra.mxu0 0.0
    %706 = vmatprep.subr.mxu0 0.0
    %707 = vmatpush1.msra.mxu0 0.0
    %708 = vmatprep.subr.mxu0 0.0
    %709 = vmatpush1.msra.mxu0 0.0
    %710 = vmatprep.subr.mxu0 0.0
    %711 = vmatpush1.msra.mxu0 0.0
    %712 = vmatprep.subr.mxu0 0.0
    %713 = vmatpush1.msra.mxu0 0.0
    %714 = vmatprep.subr.mxu0 0.0
    %715 = vmatpush1.msra.mxu0 0.0
    %716 = vmatprep.subr.mxu0 0.0
    %717 = vmatpush1.msra.mxu0 0.0
    %718 = vmatprep.subr.mxu0 0.0
    %719 = vmatpush1.msra.mxu0 0.0
    %720 = vmatprep.subr.mxu0 0.0
    %721 = vmatpush1.msra.mxu0 0.0
    %722 = vmatprep.subr.mxu0 0.0
    %723 = vmatpush1.msra.mxu0 0.0
    %724 = vmatprep.subr.mxu0 0.0
    %725 = vmatpush1.msra.mxu0 0.0
    %726 = vmatprep.subr.mxu0 0.0
    %727 = vmatpush1.msra.mxu0 0.0
    %728 = vmatprep.mubr.f32.mxu0 0.0
    %v729 = vand.u32 %v563, 4294901760
    %730 = vmatmul.mubr.f32.gmra.mrb[0].mxu0 %v729
    %v731 = vpop.f32.mrb[0].mxu0
    %v732 = vadd.f32 %v641, %v731
    %v733 = vpop.f32.mrb[0].mxu0
    %734 = vdwg.mxu0
    %735 = vmatprep.subr.mxu0 0.0
    %v736 = vand.u32 %v553, 4294901760
    %v737 = vsub.f32 %v553, %v736
    %738 = vmatpush1.msra.mxu0 %v737
    %739 = vmatprep.subr.mxu0 0.0
    %v740 = vand.u32 %v554, 4294901760
    %v741 = vsub.f32 %v554, %v740
    %742 = vmatpush1.msra.mxu0 %v741
    %743 = vmatprep.subr.mxu0 0.0
    %v744 = vand.u32 %v555, 4294901760
    %v745 = vsub.f32 %v555, %v744
    %746 = vmatpush1.msra.mxu0 %v745
    %747 = vmatprep.subr.mxu0 0.0
    %v748 = vand.u32 %v556, 4294901760
    %v749 = vsub.f32 %v556, %v748
    %750 = vmatpush1.msra.mxu0 %v749
    %751 = vmatprep.subr.mxu0 0.0
    %752 = vmatpush1.msra.mxu0 0.0
    %753 = vmatprep.subr.mxu0 0.0
    %754 = vmatpush1.msra.mxu0 0.0
    %755 = vmatprep.subr.mxu0 0.0
    %756 = vmatpush1.msra.mxu0 0.0
    %757 = vmatprep.subr.mxu0 0.0
    %758 = vmatpush1.msra.mxu0 0.0
    %759 = vmatprep.subr.mxu0 0.0
    %760 = vmatpush1.msra.mxu0 0.0
    %761 = vmatprep.subr.mxu0 0.0
    %762 = vmatpush1.msra.mxu0 0.0
    %763 = vmatprep.subr.mxu0 0.0
    %764 = vmatpush1.msra.mxu0 0.0
    %765 = vmatprep.subr.mxu0 0.0
    %766 = vmatpush1.msra.mxu0 0.0
    %767 = vmatprep.subr.mxu0 0.0
    %768 = vmatpush1.msra.mxu0 0.0
    %769 = vmatprep.subr.mxu0 0.0
    %770 = vmatpush1.msra.mxu0 0.0
    %771 = vmatprep.subr.mxu0 0.0
    %772 = vmatpush1.msra.mxu0 0.0
    %773 = vmatprep.subr.mxu0 0.0
    %774 = vmatpush1.msra.mxu0 0.0
    %775 = vmatprep.subr.mxu0 0.0
    %776 = vmatpush1.msra.mxu0 0.0
    %777 = vmatprep.subr.mxu0 0.0
    %778 = vmatpush1.msra.mxu0 0.0
    %779 = vmatprep.subr.mxu0 0.0
    %780 = vmatpush1.msra.mxu0 0.0
    %781 = vmatprep.subr.mxu0 0.0
    %782 = vmatpush1.msra.mxu0 0.0
    %783 = vmatprep.subr.mxu0 0.0
    %784 = vmatpush1.msra.mxu0 0.0
    %785 = vmatprep.subr.mxu0 0.0
    %786 = vmatpush1.msra.mxu0 0.0
    %787 = vmatprep.subr.mxu0 0.0
    %788 = vmatpush1.msra.mxu0 0.0
    %789 = vmatprep.subr.mxu0 0.0
    %790 = vmatpush1.msra.mxu0 0.0
    %791 = vmatprep.subr.mxu0 0.0
    %792 = vmatpush1.msra.mxu0 0.0
    %793 = vmatprep.subr.mxu0 0.0
    %794 = vmatpush1.msra.mxu0 0.0
    %795 = vmatprep.subr.mxu0 0.0
    %796 = vmatpush1.msra.mxu0 0.0
    %797 = vmatprep.subr.mxu0 0.0
    %798 = vmatpush1.msra.mxu0 0.0
    %799 = vmatprep.subr.mxu0 0.0
    %800 = vmatpush1.msra.mxu0 0.0
    %801 = vmatprep.subr.mxu0 0.0
    %802 = vmatpush1.msra.mxu0 0.0
    %803 = vmatprep.subr.mxu0 0.0
    %804 = vmatpush1.msra.mxu0 0.0
    %805 = vmatprep.subr.mxu0 0.0
    %806 = vmatpush1.msra.mxu0 0.0
    %807 = vmatprep.mubr.f32.mxu0 0.0
    %v808 = vand.u32 %v563, 4294901760
    %v809 = vsub.f32 %v563, %v808
    %810 = vmatmul.mubr.f32.gmra.mrb[0].mxu0 %v809
    %v811 = vpop.f32.mrb[0].mxu0
    %v812 = vadd.f32 %v732, %v811
    %v813 = vpop.f32.mrb[0].mxu0
    %814 = vdwg.mxu0
    %815 = vmatprep.subr.mxu0 0.0
    %v816 = vand.u32 %v553, 4294901760
    %817 = vmatpush1.msra.mxu0 %v816
    %818 = vmatprep.subr.mxu0 0.0
    %v819 = vand.u32 %v554, 4294901760
    %820 = vmatpush1.msra.mxu0 %v819
    %821 = vmatprep.subr.mxu0 0.0
    %v822 = vand.u32 %v555, 4294901760
    %823 = vmatpush1.msra.mxu0 %v822
    %824 = vmatprep.subr.mxu0 0.0
    %v825 = vand.u32 %v556, 4294901760
    %826 = vmatpush1.msra.mxu0 %v825
    %827 = vmatprep.subr.mxu0 0.0
    %828 = vmatpush1.msra.mxu0 0.0
    %829 = vmatprep.subr.mxu0 0.0
    %830 = vmatpush1.msra.mxu0 0.0
    %831 = vmatprep.subr.mxu0 0.0
    %832 = vmatpush1.msra.mxu0 0.0
    %833 = vmatprep.subr.mxu0 0.0
    %834 = vmatpush1.msra.mxu0 0.0
    %835 = vmatprep.subr.mxu0 0.0
    %836 = vmatpush1.msra.mxu0 0.0
    %837 = vmatprep.subr.mxu0 0.0
    %838 = vmatpush1.msra.mxu0 0.0
    %839 = vmatprep.subr.mxu0 0.0
    %840 = vmatpush1.msra.mxu0 0.0
    %841 = vmatprep.subr.mxu0 0.0
    %842 = vmatpush1.msra.mxu0 0.0
    %843 = vmatprep.subr.mxu0 0.0
    %844 = vmatpush1.msra.mxu0 0.0
    %845 = vmatprep.subr.mxu0 0.0
    %846 = vmatpush1.msra.mxu0 0.0
    %847 = vmatprep.subr.mxu0 0.0
    %848 = vmatpush1.msra.mxu0 0.0
    %849 = vmatprep.subr.mxu0 0.0
    %850 = vmatpush1.msra.mxu0 0.0
    %851 = vmatprep.subr.mxu0 0.0
    %852 = vmatpush1.msra.mxu0 0.0
    %853 = vmatprep.subr.mxu0 0.0
    %854 = vmatpush1.msra.mxu0 0.0
    %855 = vmatprep.subr.mxu0 0.0
    %856 = vmatpush1.msra.mxu0 0.0
    %857 = vmatprep.subr.mxu0 0.0
    %858 = vmatpush1.msra.mxu0 0.0
    %859 = vmatprep.subr.mxu0 0.0
    %860 = vmatpush1.msra.mxu0 0.0
    %861 = vmatprep.subr.mxu0 0.0
    %862 = vmatpush1.msra.mxu0 0.0
    %863 = vmatprep.subr.mxu0 0.0
    %864 = vmatpush1.msra.mxu0 0.0
    %865 = vmatprep.subr.mxu0 0.0
    %866 = vmatpush1.msra.mxu0 0.0
    %867 = vmatprep.subr.mxu0 0.0
    %868 = vmatpush1.msra.mxu0 0.0
    %869 = vmatprep.subr.mxu0 0.0
    %870 = vmatpush1.msra.mxu0 0.0
    %871 = vmatprep.subr.mxu0 0.0
    %872 = vmatpush1.msra.mxu0 0.0
    %873 = vmatprep.subr.mxu0 0.0
    %874 = vmatpush1.msra.mxu0 0.0
    %875 = vmatprep.subr.mxu0 0.0
    %876 = vmatpush1.msra.mxu0 0.0
    %877 = vmatprep.subr.mxu0 0.0
    %878 = vmatpush1.msra.mxu0 0.0
    %879 = vmatprep.subr.mxu0 0.0
    %880 = vmatpush1.msra.mxu0 0.0
    %881 = vmatprep.subr.mxu0 0.0
    %882 = vmatpush1.msra.mxu0 0.0
    %883 = vmatprep.mubr.f32.mxu0 0.0
    %v884 = vand.u32 %v563, 4294901760
    %v885 = vsub.f32 %v563, %v884
    %v886 = vand.u32 %v885, 4294901760
    %887 = vmatmul.mubr.f32.gmra.mrb[0].mxu0 %v886
    %v888 = vpop.f32.mrb[0].mxu0
    %v889 = vadd.f32 %v812, %v888
    %v890 = vpop.f32.mrb[0].mxu0
    %891 = vdwg.mxu0
    %892 = vmatprep.subr.mxu0 0.0
    %v893 = vand.u32 %v553, 4294901760
    %v894 = vsub.f32 %v553, %v893
    %v895 = vand.u32 %v894, 4294901760
    %896 = vmatpush1.msra.mxu0 %v895
    %897 = vmatprep.subr.mxu0 0.0
    %v898 = vand.u32 %v554, 4294901760
    %v899 = vsub.f32 %v554, %v898
    %v900 = vand.u32 %v899, 4294901760
    %901 = vmatpush1.msra.mxu0 %v900
    %902 = vmatprep.subr.mxu0 0.0
    %v903 = vand.u32 %v555, 4294901760
    %v904 = vsub.f32 %v555, %v903
    %v905 = vand.u32 %v904, 4294901760
    %906 = vmatpush1.msra.mxu0 %v905
    %907 = vmatprep.subr.mxu0 0.0
    %v908 = vand.u32 %v556, 4294901760
    %v909 = vsub.f32 %v556, %v908
    %v910 = vand.u32 %v909, 4294901760
    %911 = vmatpush1.msra.mxu0 %v910
    %912 = vmatprep.subr.mxu0 0.0
    %913 = vmatpush1.msra.mxu0 0.0
    %914 = vmatprep.subr.mxu0 0.0
    %915 = vmatpush1.msra.mxu0 0.0
    %916 = vmatprep.subr.mxu0 0.0
    %917 = vmatpush1.msra.mxu0 0.0
    %918 = vmatprep.subr.mxu0 0.0
    %919 = vmatpush1.msra.mxu0 0.0
    %920 = vmatprep.subr.mxu0 0.0
    %921 = vmatpush1.msra.mxu0 0.0
    %922 = vmatprep.subr.mxu0 0.0
    %923 = vmatpush1.msra.mxu0 0.0
    %924 = vmatprep.subr.mxu0 0.0
    %925 = vmatpush1.msra.mxu0 0.0
    %926 = vmatprep.subr.mxu0 0.0
    %927 = vmatpush1.msra.mxu0 0.0
    %928 = vmatprep.subr.mxu0 0.0
    %929 = vmatpush1.msra.mxu0 0.0
    %930 = vmatprep.subr.mxu0 0.0
    %931 = vmatpush1.msra.mxu0 0.0
    %932 = vmatprep.subr.mxu0 0.0
    %933 = vmatpush1.msra.mxu0 0.0
    %934 = vmatprep.subr.mxu0 0.0
    %935 = vmatpush1.msra.mxu0 0.0
    %936 = vmatprep.subr.mxu0 0.0
    %937 = vmatpush1.msra.mxu0 0.0
    %938 = vmatprep.subr.mxu0 0.0
    %939 = vmatpush1.msra.mxu0 0.0
    %940 = vmatprep.subr.mxu0 0.0
    %941 = vmatpush1.msra.mxu0 0.0
    %942 = vmatprep.subr.mxu0 0.0
    %943 = vmatpush1.msra.mxu0 0.0
    %944 = vmatprep.subr.mxu0 0.0
    %945 = vmatpush1.msra.mxu0 0.0
    %946 = vmatprep.subr.mxu0 0.0
    %947 = vmatpush1.msra.mxu0 0.0
    %948 = vmatprep.subr.mxu0 0.0
    %949 = vmatpush1.msra.mxu0 0.0
    %950 = vmatprep.subr.mxu0 0.0
    %951 = vmatpush1.msra.mxu0 0.0
    %952 = vmatprep.subr.mxu0 0.0
    %953 = vmatpush1.msra.mxu0 0.0
    %954 = vmatprep.subr.mxu0 0.0
    %955 = vmatpush1.msra.mxu0 0.0
    %956 = vmatprep.subr.mxu0 0.0
    %957 = vmatpush1.msra.mxu0 0.0
    %958 = vmatprep.subr.mxu0 0.0
    %959 = vmatpush1.msra.mxu0 0.0
    %960 = vmatprep.subr.mxu0 0.0
    %961 = vmatpush1.msra.mxu0 0.0
    %962 = vmatprep.subr.mxu0 0.0
    %963 = vmatpush1.msra.mxu0 0.0
    %964 = vmatprep.subr.mxu0 0.0
    %965 = vmatpush1.msra.mxu0 0.0
    %966 = vmatprep.subr.mxu0 0.0
    %967 = vmatpush1.msra.mxu0 0.0
    %968 = vmatprep.mubr.f32.mxu0 0.0
    %v969 = vand.u32 %v563, 4294901760
    %970 = vmatmul.mubr.f32.gmra.mrb[0].mxu0 %v969
    %v971 = vpop.f32.mrb[0].mxu0
    %v972 = vadd.f32 %v889, %v971
    %v973 = vpop.f32.mrb[0].mxu0
    %974 = vdwg.mxu0
    %975 = vmatprep.subr.mxu0 0.0
    %v976 = vand.u32 %v553, 4294901760
    %977 = vmatpush1.msra.mxu0 %v976
    %978 = vmatprep.subr.mxu0 0.0
    %v979 = vand.u32 %v554, 4294901760
    %980 = vmatpush1.msra.mxu0 %v979
    %981 = vmatprep.subr.mxu0 0.0
    %v982 = vand.u32 %v555, 4294901760
    %983 = vmatpush1.msra.mxu0 %v982
    %984 = vmatprep.subr.mxu0 0.0
    %v985 = vand.u32 %v556, 4294901760
    %986 = vmatpush1.msra.mxu0 %v985
    %987 = vmatprep.subr.mxu0 0.0
    %988 = vmatpush1.msra.mxu0 0.0
    %989 = vmatprep.subr.mxu0 0.0
    %990 = vmatpush1.msra.mxu0 0.0
    %991 = vmatprep.subr.mxu0 0.0
    %992 = vmatpush1.msra.mxu0 0.0
    %993 = vmatprep.subr.mxu0 0.0
    %994 = vmatpush1.msra.mxu0 0.0
    %995 = vmatprep.subr.mxu0 0.0
    %996 = vmatpush1.msra.mxu0 0.0
    %997 = vmatprep.subr.mxu0 0.0
    %998 = vmatpush1.msra.mxu0 0.0
    %999 = vmatprep.subr.mxu0 0.0
    %1000 = vmatpush1.msra.mxu0 0.0
    %1001 = vmatprep.subr.mxu0 0.0
    %1002 = vmatpush1.msra.mxu0 0.0
    %1003 = vmatprep.subr.mxu0 0.0
    %1004 = vmatpush1.msra.mxu0 0.0
    %1005 = vmatprep.subr.mxu0 0.0
    %1006 = vmatpush1.msra.mxu0 0.0
    %1007 = vmatprep.subr.mxu0 0.0
    %1008 = vmatpush1.msra.mxu0 0.0
    %1009 = vmatprep.subr.mxu0 0.0
    %1010 = vmatpush1.msra.mxu0 0.0
    %1011 = vmatprep.subr.mxu0 0.0
    %1012 = vmatpush1.msra.mxu0 0.0
    %1013 = vmatprep.subr.mxu0 0.0
    %1014 = vmatpush1.msra.mxu0 0.0
    %1015 = vmatprep.subr.mxu0 0.0
    %1016 = vmatpush1.msra.mxu0 0.0
    %1017 = vmatprep.subr.mxu0 0.0
    %1018 = vmatpush1.msra.mxu0 0.0
    %1019 = vmatprep.subr.mxu0 0.0
    %1020 = vmatpush1.msra.mxu0 0.0
    %1021 = vmatprep.subr.mxu0 0.0
    %1022 = vmatpush1.msra.mxu0 0.0
    %1023 = vmatprep.subr.mxu0 0.0
    %1024 = vmatpush1.msra.mxu0 0.0
    %1025 = vmatprep.subr.mxu0 0.0
    %1026 = vmatpush1.msra.mxu0 0.0
    %1027 = vmatprep.subr.mxu0 0.0
    %1028 = vmatpush1.msra.mxu0 0.0
    %1029 = vmatprep.subr.mxu0 0.0
    %1030 = vmatpush1.msra.mxu0 0.0
    %1031 = vmatprep.subr.mxu0 0.0
    %1032 = vmatpush1.msra.mxu0 0.0
    %1033 = vmatprep.subr.mxu0 0.0
    %1034 = vmatpush1.msra.mxu0 0.0
    %1035 = vmatprep.subr.mxu0 0.0
    %1036 = vmatpush1.msra.mxu0 0.0
    %1037 = vmatprep.subr.mxu0 0.0
    %1038 = vmatpush1.msra.mxu0 0.0
    %1039 = vmatprep.subr.mxu0 0.0
    %1040 = vmatpush1.msra.mxu0 0.0
    %1041 = vmatprep.subr.mxu0 0.0
    %1042 = vmatpush1.msra.mxu0 0.0
    %1043 = vmatprep.mubr.f32.mxu0 0.0
    %v1044 = vand.u32 %v563, 4294901760
    %1045 = vmatmul.mubr.f32.gmra.mrb[0].mxu0 %v1044
    %v1046 = vpop.f32.mrb[0].mxu0
    %v1047 = vadd.f32 %v972, %v1046
    %v1048 = vpop.f32.mrb[0].mxu0
    %1049 = vdwg.mxu0
    %v1050 = vld [vmem:[#allocation2 + $0x70] sm:$0xff]
    %v1051 = vld [vmem:[#allocation2 + $0x78] sm:$0xff]
    %v1052 = vld [vmem:[#allocation2 + $0x80] sm:$0xff]
    %v1053 = vld [vmem:[#allocation2 + $0x88] sm:$0xff]
    %v1054 = vld [vmem:[#allocation2 + $0x90] sm:$0xff]
    %v1055 = vld [vmem:[#allocation2 + $0x98] sm:$0xff]
    %v1056 = vld [vmem:[#allocation2 + $0xa0] sm:$0xff]
    %v1057 = vld [vmem:[#allocation2 + $0xa8] sm:$0xff]
    %v1058 = vld [vmem:[#allocation2 + $0x60] sm:$0x1]
    %v1059 = vld [vmem:[#allocation2 + $0x68] sm:$0x1]
    %v1060 = vmul.f32 %v1047, %v1047
    %vm1061 = vcmask 523264
    %v1063 = vsel %vm1061, %v1047, 0
    %v1066 = vsel %vm1061, %v1060, 0
    %1068 = vmatprep.subr.mxu0 0.0
    %v1069 = vand.u32 %v1050, 4294901760
    %1070 = vmatpush1.msra.mxu0 %v1069
    %1071 = vmatprep.subr.mxu0 0.0
    %v1072 = vand.u32 %v1051, 4294901760
    %1073 = vmatpush1.msra.mxu0 %v1072
    %1074 = vmatprep.subr.mxu0 0.0
    %v1075 = vand.u32 %v1052, 4294901760
    %1076 = vmatpush1.msra.mxu0 %v1075
    %1077 = vmatprep.subr.mxu0 0.0
    %v1078 = vand.u32 %v1053, 4294901760
    %1079 = vmatpush1.msra.mxu0 %v1078
    %1080 = vmatprep.subr.mxu0 0.0
    %v1081 = vand.u32 %v1054, 4294901760
    %1082 = vmatpush1.msra.mxu0 %v1081
    %1083 = vmatprep.subr.mxu0 0.0
    %v1084 = vand.u32 %v1055, 4294901760
    %1085 = vmatpush1.msra.mxu0 %v1084
    %1086 = vmatprep.subr.mxu0 0.0
    %v1087 = vand.u32 %v1056, 4294901760
    %1088 = vmatpush1.msra.mxu0 %v1087
    %1089 = vmatprep.subr.mxu0 0.0
    %v1090 = vand.u32 %v1057, 4294901760
    %1091 = vmatpush1.msra.mxu0 %v1090
    %1092 = vmatprep.subr.mxu0 0.0
    %1093 = vmatpush1.msra.mxu0 0.0
    %1094 = vmatprep.subr.mxu0 0.0
    %1095 = vmatpush1.msra.mxu0 0.0
    %1096 = vmatprep.subr.mxu0 0.0
    %1097 = vmatpush1.msra.mxu0 0.0
    %1098 = vmatprep.subr.mxu0 0.0
    %1099 = vmatpush1.msra.mxu0 0.0
    %1100 = vmatprep.subr.mxu0 0.0
    %1101 = vmatpush1.msra.mxu0 0.0
    %1102 = vmatprep.subr.mxu0 0.0
    %1103 = vmatpush1.msra.mxu0 0.0
    %1104 = vmatprep.subr.mxu0 0.0
    %1105 = vmatpush1.msra.mxu0 0.0
    %1106 = vmatprep.subr.mxu0 0.0
    %1107 = vmatpush1.msra.mxu0 0.0
    %1108 = vmatprep.subr.mxu0 0.0
    %1109 = vmatpush1.msra.mxu0 0.0
    %1110 = vmatprep.subr.mxu0 0.0
    %1111 = vmatpush1.msra.mxu0 0.0
    %1112 = vmatprep.subr.mxu0 0.0
    %1113 = vmatpush1.msra.mxu0 0.0
    %1114 = vmatprep.subr.mxu0 0.0
    %1115 = vmatpush1.msra.mxu0 0.0
    %1116 = vmatprep.subr.mxu0 0.0
    %1117 = vmatpush1.msra.mxu0 0.0
    %1118 = vmatprep.subr.mxu0 0.0
    %1119 = vmatpush1.msra.mxu0 0.0
    %1120 = vmatprep.subr.mxu0 0.0
    %1121 = vmatpush1.msra.mxu0 0.0
    %1122 = vmatprep.subr.mxu0 0.0
    %1123 = vmatpush1.msra.mxu0 0.0
    %1124 = vmatprep.subr.mxu0 0.0
    %1125 = vmatpush1.msra.mxu0 0.0
    %1126 = vmatprep.subr.mxu0 0.0
    %1127 = vmatpush1.msra.mxu0 0.0
    %1128 = vmatprep.subr.mxu0 0.0
    %1129 = vmatpush1.msra.mxu0 0.0
    %1130 = vmatprep.subr.mxu0 0.0
    %1131 = vmatpush1.msra.mxu0 0.0
    %1132 = vmatprep.subr.mxu0 0.0
    %1133 = vmatpush1.msra.mxu0 0.0
    %1134 = vmatprep.subr.mxu0 0.0
    %1135 = vmatpush1.msra.mxu0 0.0
    %1136 = vmatprep.subr.mxu0 0.0
    %1137 = vmatpush1.msra.mxu0 0.0
    %1138 = vmatprep.subr.mxu0 0.0
    %1139 = vmatpush1.msra.mxu0 0.0
    %1140 = vmatprep.mubr.f32.mxu0 0.0
    %v1141 = vand.u32 %v1063, 4294901760
    %v1142 = vsub.f32 %v1063, %v1141
    %v1143 = vand.u32 %v1142, 4294901760
    %v1144 = vsub.f32 %v1142, %v1143
    %v1145 = vand.u32 %v1144, 4294901760
    %1146 = vmatmul.mubr.f32.gmra.mrb[0].mxu0 %v1145
    %v1147 = vpop.f32.mrb[0].mxu0
    %v1148 = vadd.f32 0.0, %v1147
    %v1149 = vpop.f32.mrb[0].mxu0
    %1150 = vmatprep.mubr.f32.mxu0 0.0
    %v1151 = vand.u32 %v1066, 4294901760
    %v1152 = vsub.f32 %v1066, %v1151
    %v1153 = vand.u32 %v1152, 4294901760
    %v1154 = vsub.f32 %v1152, %v1153
    %v1155 = vand.u32 %v1154, 4294901760
    %1156 = vmatmul.mubr.f32.gmra.mrb[0].mxu0 %v1155
    %v1157 = vpop.f32.mrb[0].mxu0
    %v1158 = vadd.f32 0.0, %v1157
    %v1159 = vpop.f32.mrb[0].mxu0
    %1160 = vdwg.mxu0
    %1161 = vmatprep.subr.mxu0 0.0
    %v1162 = vand.u32 %v1050, 4294901760
    %v1163 = vsub.f32 %v1050, %v1162
    %v1164 = vand.u32 %v1163, 4294901760
    %v1165 = vsub.f32 %v1163, %v1164
    %v1166 = vand.u32 %v1165, 4294901760
    %1167 = vmatpush1.msra.mxu0 %v1166
    %1168 = vmatprep.subr.mxu0 0.0
    %v1169 = vand.u32 %v1051, 4294901760
    %v1170 = vsub.f32 %v1051, %v1169
    %v1171 = vand.u32 %v1170, 4294901760
    %v1172 = vsub.f32 %v1170, %v1171
    %v1173 = vand.u32 %v1172, 4294901760
    %1174 = vmatpush1.msra.mxu0 %v1173
    %1175 = vmatprep.subr.mxu0 0.0
    %v1176 = vand.u32 %v1052, 4294901760
    %v1177 = vsub.f32 %v1052, %v1176
    %v1178 = vand.u32 %v1177, 4294901760
    %v1179 = vsub.f32 %v1177, %v1178
    %v1180 = vand.u32 %v1179, 4294901760
    %1181 = vmatpush1.msra.mxu0 %v1180
    %1182 = vmatprep.subr.mxu0 0.0
    %v1183 = vand.u32 %v1053, 4294901760
    %v1184 = vsub.f32 %v1053, %v1183
    %v1185 = vand.u32 %v1184, 4294901760
    %v1186 = vsub.f32 %v1184, %v1185
    %v1187 = vand.u32 %v1186, 4294901760
    %1188 = vmatpush1.msra.mxu0 %v1187
    %1189 = vmatprep.subr.mxu0 0.0
    %v1190 = vand.u32 %v1054, 4294901760
    %v1191 = vsub.f32 %v1054, %v1190
    %v1192 = vand.u32 %v1191, 4294901760
    %v1193 = vsub.f32 %v1191, %v1192
    %v1194 = vand.u32 %v1193, 4294901760
    %1195 = vmatpush1.msra.mxu0 %v1194
    %1196 = vmatprep.subr.mxu0 0.0
    %v1197 = vand.u32 %v1055, 4294901760
    %v1198 = vsub.f32 %v1055, %v1197
    %v1199 = vand.u32 %v1198, 4294901760
    %v1200 = vsub.f32 %v1198, %v1199
    %v1201 = vand.u32 %v1200, 4294901760
    %1202 = vmatpush1.msra.mxu0 %v1201
    %1203 = vmatprep.subr.mxu0 0.0
    %v1204 = vand.u32 %v1056, 4294901760
    %v1205 = vsub.f32 %v1056, %v1204
    %v1206 = vand.u32 %v1205, 4294901760
    %v1207 = vsub.f32 %v1205, %v1206
    %v1208 = vand.u32 %v1207, 4294901760
    %1209 = vmatpush1.msra.mxu0 %v1208
    %1210 = vmatprep.subr.mxu0 0.0
    %v1211 = vand.u32 %v1057, 4294901760
    %v1212 = vsub.f32 %v1057, %v1211
    %v1213 = vand.u32 %v1212, 4294901760
    %v1214 = vsub.f32 %v1212, %v1213
    %v1215 = vand.u32 %v1214, 4294901760
    %1216 = vmatpush1.msra.mxu0 %v1215
    %1217 = vmatprep.subr.mxu0 0.0
    %1218 = vmatpush1.msra.mxu0 0.0
    %1219 = vmatprep.subr.mxu0 0.0
    %1220 = vmatpush1.msra.mxu0 0.0
    %1221 = vmatprep.subr.mxu0 0.0
    %1222 = vmatpush1.msra.mxu0 0.0
    %1223 = vmatprep.subr.mxu0 0.0
    %1224 = vmatpush1.msra.mxu0 0.0
    %1225 = vmatprep.subr.mxu0 0.0
    %1226 = vmatpush1.msra.mxu0 0.0
    %1227 = vmatprep.subr.mxu0 0.0
    %1228 = vmatpush1.msra.mxu0 0.0
    %1229 = vmatprep.subr.mxu0 0.0
    %1230 = vmatpush1.msra.mxu0 0.0
    %1231 = vmatprep.subr.mxu0 0.0
    %1232 = vmatpush1.msra.mxu0 0.0
    %1233 = vmatprep.subr.mxu0 0.0
    %1234 = vmatpush1.msra.mxu0 0.0
    %1235 = vmatprep.subr.mxu0 0.0
    %1236 = vmatpush1.msra.mxu0 0.0
    %1237 = vmatprep.subr.mxu0 0.0
    %1238 = vmatpush1.msra.mxu0 0.0
    %1239 = vmatprep.subr.mxu0 0.0
    %1240 = vmatpush1.msra.mxu0 0.0
    %1241 = vmatprep.subr.mxu0 0.0
    %1242 = vmatpush1.msra.mxu0 0.0
    %1243 = vmatprep.subr.mxu0 0.0
    %1244 = vmatpush1.msra.mxu0 0.0
    %1245 = vmatprep.subr.mxu0 0.0
    %1246 = vmatpush1.msra.mxu0 0.0
    %1247 = vmatprep.subr.mxu0 0.0
    %1248 = vmatpush1.msra.mxu0 0.0
    %1249 = vmatprep.subr.mxu0 0.0
    %1250 = vmatpush1.msra.mxu0 0.0
    %1251 = vmatprep.subr.mxu0 0.0
    %1252 = vmatpush1.msra.mxu0 0.0
    %1253 = vmatprep.subr.mxu0 0.0
    %1254 = vmatpush1.msra.mxu0 0.0
    %1255 = vmatprep.subr.mxu0 0.0
    %1256 = vmatpush1.msra.mxu0 0.0
    %1257 = vmatprep.subr.mxu0 0.0
    %1258 = vmatpush1.msra.mxu0 0.0
    %1259 = vmatprep.subr.mxu0 0.0
    %1260 = vmatpush1.msra.mxu0 0.0
    %1261 = vmatprep.subr.mxu0 0.0
    %1262 = vmatpush1.msra.mxu0 0.0
    %1263 = vmatprep.subr.mxu0 0.0
    %1264 = vmatpush1.msra.mxu0 0.0
    %1265 = vmatprep.mubr.f32.mxu0 0.0
    %v1266 = vand.u32 %v1063, 4294901760
    %1267 = vmatmul.mubr.f32.gmra.mrb[0].mxu0 %v1266
    %v1268 = vpop.f32.mrb[0].mxu0
    %v1269 = vadd.f32 %v1148, %v1268
    %v1270 = vpop.f32.mrb[0].mxu0
    %1271 = vmatprep.mubr.f32.mxu0 0.0
    %v1272 = vand.u32 %v1066, 4294901760
    %1273 = vmatmul.mubr.f32.gmra.mrb[0].mxu0 %v1272
    %v1274 = vpop.f32.mrb[0].mxu0
    %v1275 = vadd.f32 %v1158, %v1274
    %v1276 = vpop.f32.mrb[0].mxu0
    %1277 = vdwg.mxu0
    %1278 = vmatprep.subr.mxu0 0.0
    %v1279 = vand.u32 %v1050, 4294901760
    %v1280 = vsub.f32 %v1050, %v1279
    %1281 = vmatpush1.msra.mxu0 %v1280
    %1282 = vmatprep.subr.mxu0 0.0
    %v1283 = vand.u32 %v1051, 4294901760
    %v1284 = vsub.f32 %v1051, %v1283
    %1285 = vmatpush1.msra.mxu0 %v1284
    %1286 = vmatprep.subr.mxu0 0.0
    %v1287 = vand.u32 %v1052, 4294901760
    %v1288 = vsub.f32 %v1052, %v1287
    %1289 = vmatpush1.msra.mxu0 %v1288
    %1290 = vmatprep.subr.mxu0 0.0
    %v1291 = vand.u32 %v1053, 4294901760
    %v1292 = vsub.f32 %v1053, %v1291
    %1293 = vmatpush1.msra.mxu0 %v1292
    %1294 = vmatprep.subr.mxu0 0.0
    %v1295 = vand.u32 %v1054, 4294901760
    %v1296 = vsub.f32 %v1054, %v1295
    %1297 = vmatpush1.msra.mxu0 %v1296
    %1298 = vmatprep.subr.mxu0 0.0
    %v1299 = vand.u32 %v1055, 4294901760
    %v1300 = vsub.f32 %v1055, %v1299
    %1301 = vmatpush1.msra.mxu0 %v1300
    %1302 = vmatprep.subr.mxu0 0.0
    %v1303 = vand.u32 %v1056, 4294901760
    %v1304 = vsub.f32 %v1056, %v1303
    %1305 = vmatpush1.msra.mxu0 %v1304
    %1306 = vmatprep.subr.mxu0 0.0
    %v1307 = vand.u32 %v1057, 4294901760
    %v1308 = vsub.f32 %v1057, %v1307
    %1309 = vmatpush1.msra.mxu0 %v1308
    %1310 = vmatprep.subr.mxu0 0.0
    %1311 = vmatpush1.msra.mxu0 0.0
    %1312 = vmatprep.subr.mxu0 0.0
    %1313 = vmatpush1.msra.mxu0 0.0
    %1314 = vmatprep.subr.mxu0 0.0
    %1315 = vmatpush1.msra.mxu0 0.0
    %1316 = vmatprep.subr.mxu0 0.0
    %1317 = vmatpush1.msra.mxu0 0.0
    %1318 = vmatprep.subr.mxu0 0.0
    %1319 = vmatpush1.msra.mxu0 0.0
    %1320 = vmatprep.subr.mxu0 0.0
    %1321 = vmatpush1.msra.mxu0 0.0
    %1322 = vmatprep.subr.mxu0 0.0
    %1323 = vmatpush1.msra.mxu0 0.0
    %1324 = vmatprep.subr.mxu0 0.0
    %1325 = vmatpush1.msra.mxu0 0.0
    %1326 = vmatprep.subr.mxu0 0.0
    %1327 = vmatpush1.msra.mxu0 0.0
    %1328 = vmatprep.subr.mxu0 0.0
    %1329 = vmatpush1.msra.mxu0 0.0
    %1330 = vmatprep.subr.mxu0 0.0
    %1331 = vmatpush1.msra.mxu0 0.0
    %1332 = vmatprep.subr.mxu0 0.0
    %1333 = vmatpush1.msra.mxu0 0.0
    %1334 = vmatprep.subr.mxu0 0.0
    %1335 = vmatpush1.msra.mxu0 0.0
    %1336 = vmatprep.subr.mxu0 0.0
    %1337 = vmatpush1.msra.mxu0 0.0
    %1338 = vmatprep.subr.mxu0 0.0
    %1339 = vmatpush1.msra.mxu0 0.0
    %1340 = vmatprep.subr.mxu0 0.0
    %1341 = vmatpush1.msra.mxu0 0.0
    %1342 = vmatprep.subr.mxu0 0.0
    %1343 = vmatpush1.msra.mxu0 0.0
    %1344 = vmatprep.subr.mxu0 0.0
    %1345 = vmatpush1.msra.mxu0 0.0
    %1346 = vmatprep.subr.mxu0 0.0
    %1347 = vmatpush1.msra.mxu0 0.0
    %1348 = vmatprep.subr.mxu0 0.0
    %1349 = vmatpush1.msra.mxu0 0.0
    %1350 = vmatprep.subr.mxu0 0.0
    %1351 = vmatpush1.msra.mxu0 0.0
    %1352 = vmatprep.subr.mxu0 0.0
    %1353 = vmatpush1.msra.mxu0 0.0
    %1354 = vmatprep.subr.mxu0 0.0
    %1355 = vmatpush1.msra.mxu0 0.0
    %1356 = vmatprep.subr.mxu0 0.0
    %1357 = vmatpush1.msra.mxu0 0.0
    %1358 = vmatprep.mubr.f32.mxu0 0.0
    %v1359 = vand.u32 %v1063, 4294901760
    %v1360 = vsub.f32 %v1063, %v1359
    %1361 = vmatmul.mubr.f32.gmra.mrb[0].mxu0 %v1360
    %v1362 = vpop.f32.mrb[0].mxu0
    %v1363 = vadd.f32 %v1269, %v1362
    %v1364 = vpop.f32.mrb[0].mxu0
    %1365 = vmatprep.mubr.f32.mxu0 0.0
    %v1366 = vand.u32 %v1066, 4294901760
    %v1367 = vsub.f32 %v1066, %v1366
    %1368 = vmatmul.mubr.f32.gmra.mrb[0].mxu0 %v1367
    %v1369 = vpop.f32.mrb[0].mxu0
    %v1370 = vadd.f32 %v1275, %v1369
    %v1371 = vpop.f32.mrb[0].mxu0
    %1372 = vdwg.mxu0
    %1373 = vmatprep.subr.mxu0 0.0
    %v1374 = vand.u32 %v1050, 4294901760
    %1375 = vmatpush1.msra.mxu0 %v1374
    %1376 = vmatprep.subr.mxu0 0.0
    %v1377 = vand.u32 %v1051, 4294901760
    %1378 = vmatpush1.msra.mxu0 %v1377
    %1379 = vmatprep.subr.mxu0 0.0
    %v1380 = vand.u32 %v1052, 4294901760
    %1381 = vmatpush1.msra.mxu0 %v1380
    %1382 = vmatprep.subr.mxu0 0.0
    %v1383 = vand.u32 %v1053, 4294901760
    %1384 = vmatpush1.msra.mxu0 %v1383
    %1385 = vmatprep.subr.mxu0 0.0
    %v1386 = vand.u32 %v1054, 4294901760
    %1387 = vmatpush1.msra.mxu0 %v1386
    %1388 = vmatprep.subr.mxu0 0.0
    %v1389 = vand.u32 %v1055, 4294901760
    %1390 = vmatpush1.msra.mxu0 %v1389
    %1391 = vmatprep.subr.mxu0 0.0
    %v1392 = vand.u32 %v1056, 4294901760
    %1393 = vmatpush1.msra.mxu0 %v1392
    %1394 = vmatprep.subr.mxu0 0.0
    %v1395 = vand.u32 %v1057, 4294901760
    %1396 = vmatpush1.msra.mxu0 %v1395
    %1397 = vmatprep.subr.mxu0 0.0
    %1398 = vmatpush1.msra.mxu0 0.0
    %1399 = vmatprep.subr.mxu0 0.0
    %1400 = vmatpush1.msra.mxu0 0.0
    %1401 = vmatprep.subr.mxu0 0.0
    %1402 = vmatpush1.msra.mxu0 0.0
    %1403 = vmatprep.subr.mxu0 0.0
    %1404 = vmatpush1.msra.mxu0 0.0
    %1405 = vmatprep.subr.mxu0 0.0
    %1406 = vmatpush1.msra.mxu0 0.0
    %1407 = vmatprep.subr.mxu0 0.0
    %1408 = vmatpush1.msra.mxu0 0.0
    %1409 = vmatprep.subr.mxu0 0.0
    %1410 = vmatpush1.msra.mxu0 0.0
    %1411 = vmatprep.subr.mxu0 0.0
    %1412 = vmatpush1.msra.mxu0 0.0
    %1413 = vmatprep.subr.mxu0 0.0
    %1414 = vmatpush1.msra.mxu0 0.0
    %1415 = vmatprep.subr.mxu0 0.0
    %1416 = vmatpush1.msra.mxu0 0.0
    %1417 = vmatprep.subr.mxu0 0.0
    %1418 = vmatpush1.msra.mxu0 0.0
    %1419 = vmatprep.subr.mxu0 0.0
    %1420 = vmatpush1.msra.mxu0 0.0
    %1421 = vmatprep.subr.mxu0 0.0
    %1422 = vmatpush1.msra.mxu0 0.0
    %1423 = vmatprep.subr.mxu0 0.0
    %1424 = vmatpush1.msra.mxu0 0.0
    %1425 = vmatprep.subr.mxu0 0.0
    %1426 = vmatpush1.msra.mxu0 0.0
    %1427 = vmatprep.subr.mxu0 0.0
    %1428 = vmatpush1.msra.mxu0 0.0
    %1429 = vmatprep.subr.mxu0 0.0
    %1430 = vmatpush1.msra.mxu0 0.0
    %1431 = vmatprep.subr.mxu0 0.0
    %1432 = vmatpush1.msra.mxu0 0.0
    %1433 = vmatprep.subr.mxu0 0.0
    %1434 = vmatpush1.msra.mxu0 0.0
    %1435 = vmatprep.subr.mxu0 0.0
    %1436 = vmatpush1.msra.mxu0 0.0
    %1437 = vmatprep.subr.mxu0 0.0
    %1438 = vmatpush1.msra.mxu0 0.0
    %1439 = vmatprep.subr.mxu0 0.0
    %1440 = vmatpush1.msra.mxu0 0.0
    %1441 = vmatprep.subr.mxu0 0.0
    %1442 = vmatpush1.msra.mxu0 0.0
    %1443 = vmatprep.subr.mxu0 0.0
    %1444 = vmatpush1.msra.mxu0 0.0
    %1445 = vmatprep.mubr.f32.mxu0 0.0
    %v1446 = vand.u32 %v1063, 4294901760
    %v1447 = vsub.f32 %v1063, %v1446
    %v1448 = vand.u32 %v1447, 4294901760
    %1449 = vmatmul.mubr.f32.gmra.mrb[0].mxu0 %v1448
    %v1450 = vpop.f32.mrb[0].mxu0
    %v1451 = vadd.f32 %v1363, %v1450
    %v1452 = vpop.f32.mrb[0].mxu0
    %1453 = vmatprep.mubr.f32.mxu0 0.0
    %v1454 = vand.u32 %v1066, 4294901760
    %v1455 = vsub.f32 %v1066, %v1454
    %v1456 = vand.u32 %v1455, 4294901760
    %1457 = vmatmul.mubr.f32.gmra.mrb[0].mxu0 %v1456
    %v1458 = vpop.f32.mrb[0].mxu0
    %v1459 = vadd.f32 %v1370, %v1458
    %v1460 = vpop.f32.mrb[0].mxu0
    %1461 = vdwg.mxu0
    %1462 = vmatprep.subr.mxu0 0.0
    %v1463 = vand.u32 %v1050, 4294901760
    %v1464 = vsub.f32 %v1050, %v1463
    %v1465 = vand.u32 %v1464, 4294901760
    %1466 = vmatpush1.msra.mxu0 %v1465
    %1467 = vmatprep.subr.mxu0 0.0
    %v1468 = vand.u32 %v1051, 4294901760
    %v1469 = vsub.f32 %v1051, %v1468
    %v1470 = vand.u32 %v1469, 4294901760
    %1471 = vmatpush1.msra.mxu0 %v1470
    %1472 = vmatprep.subr.mxu0 0.0
    %v1473 = vand.u32 %v1052, 4294901760
    %v1474 = vsub.f32 %v1052, %v1473
    %v1475 = vand.u32 %v1474, 4294901760
    %1476 = vmatpush1.msra.mxu0 %v1475
    %1477 = vmatprep.subr.mxu0 0.0
    %v1478 = vand.u32 %v1053, 4294901760
    %v1479 = vsub.f32 %v1053, %v1478
    %v1480 = vand.u32 %v1479, 4294901760
    %1481 = vmatpush1.msra.mxu0 %v1480
    %1482 = vmatprep.subr.mxu0 0.0
    %v1483 = vand.u32 %v1054, 4294901760
    %v1484 = vsub.f32 %v1054, %v1483
    %v1485 = vand.u32 %v1484, 4294901760
    %1486 = vmatpush1.msra.mxu0 %v1485
    %1487 = vmatprep.subr.mxu0 0.0
    %v1488 = vand.u32 %v1055, 4294901760
    %v1489 = vsub.f32 %v1055, %v1488
    %v1490 = vand.u32 %v1489, 4294901760
    %1491 = vmatpush1.msra.mxu0 %v1490
    %1492 = vmatprep.subr.mxu0 0.0
    %v1493 = vand.u32 %v1056, 4294901760
    %v1494 = vsub.f32 %v1056, %v1493
    %v1495 = vand.u32 %v1494, 4294901760
    %1496 = vmatpush1.msra.mxu0 %v1495
    %1497 = vmatprep.subr.mxu0 0.0
    %v1498 = vand.u32 %v1057, 4294901760
    %v1499 = vsub.f32 %v1057, %v1498
    %v1500 = vand.u32 %v1499, 4294901760
    %1501 = vmatpush1.msra.mxu0 %v1500
    %1502 = vmatprep.subr.mxu0 0.0
    %1503 = vmatpush1.msra.mxu0 0.0
    %1504 = vmatprep.subr.mxu0 0.0
    %1505 = vmatpush1.msra.mxu0 0.0
    %1506 = vmatprep.subr.mxu0 0.0
    %1507 = vmatpush1.msra.mxu0 0.0
    %1508 = vmatprep.subr.mxu0 0.0
    %1509 = vmatpush1.msra.mxu0 0.0
    %1510 = vmatprep.subr.mxu0 0.0
    %1511 = vmatpush1.msra.mxu0 0.0
    %1512 = vmatprep.subr.mxu0 0.0
    %1513 = vmatpush1.msra.mxu0 0.0
    %1514 = vmatprep.subr.mxu0 0.0
    %1515 = vmatpush1.msra.mxu0 0.0
    %1516 = vmatprep.subr.mxu0 0.0
    %1517 = vmatpush1.msra.mxu0 0.0
    %1518 = vmatprep.subr.mxu0 0.0
    %1519 = vmatpush1.msra.mxu0 0.0
    %1520 = vmatprep.subr.mxu0 0.0
    %1521 = vmatpush1.msra.mxu0 0.0
    %1522 = vmatprep.subr.mxu0 0.0
    %1523 = vmatpush1.msra.mxu0 0.0
    %1524 = vmatprep.subr.mxu0 0.0
    %1525 = vmatpush1.msra.mxu0 0.0
    %1526 = vmatprep.subr.mxu0 0.0
    %1527 = vmatpush1.msra.mxu0 0.0
    %1528 = vmatprep.subr.mxu0 0.0
    %1529 = vmatpush1.msra.mxu0 0.0
    %1530 = vmatprep.subr.mxu0 0.0
    %1531 = vmatpush1.msra.mxu0 0.0
    %1532 = vmatprep.subr.mxu0 0.0
    %1533 = vmatpush1.msra.mxu0 0.0
    %1534 = vmatprep.subr.mxu0 0.0
    %1535 = vmatpush1.msra.mxu0 0.0
    %1536 = vmatprep.subr.mxu0 0.0
    %1537 = vmatpush1.msra.mxu0 0.0
    %1538 = vmatprep.subr.mxu0 0.0
    %1539 = vmatpush1.msra.mxu0 0.0
    %1540 = vmatprep.subr.mxu0 0.0
    %1541 = vmatpush1.msra.mxu0 0.0
    %1542 = vmatprep.subr.mxu0 0.0
    %1543 = vmatpush1.msra.mxu0 0.0
    %1544 = vmatprep.subr.mxu0 0.0
    %1545 = vmatpush1.msra.mxu0 0.0
    %1546 = vmatprep.subr.mxu0 0.0
    %1547 = vmatpush1.msra.mxu0 0.0
    %1548 = vmatprep.subr.mxu0 0.0
    %1549 = vmatpush1.msra.mxu0 0.0
    %1550 = vmatprep.mubr.f32.mxu0 0.0
    %v1551 = vand.u32 %v1063, 4294901760
    %1552 = vmatmul.mubr.f32.gmra.mrb[0].mxu0 %v1551
    %v1553 = vpop.f32.mrb[0].mxu0
    %v1554 = vadd.f32 %v1451, %v1553
    %v1555 = vpop.f32.mrb[0].mxu0
    %1556 = vmatprep.mubr.f32.mxu0 0.0
    %v1557 = vand.u32 %v1066, 4294901760
    %1558 = vmatmul.mubr.f32.gmra.mrb[0].mxu0 %v1557
    %v1559 = vpop.f32.mrb[0].mxu0
    %v1560 = vadd.f32 %v1459, %v1559
    %v1561 = vpop.f32.mrb[0].mxu0
    %1562 = vdwg.mxu0
    %1563 = vmatprep.subr.mxu0 0.0
    %v1564 = vand.u32 %v1050, 4294901760
    %1565 = vmatpush1.msra.mxu0 %v1564
    %1566 = vmatprep.subr.mxu0 0.0
    %v1567 = vand.u32 %v1051, 4294901760
    %1568 = vmatpush1.msra.mxu0 %v1567
    %1569 = vmatprep.subr.mxu0 0.0
    %v1570 = vand.u32 %v1052, 4294901760
    %1571 = vmatpush1.msra.mxu0 %v1570
    %1572 = vmatprep.subr.mxu0 0.0
    %v1573 = vand.u32 %v1053, 4294901760
    %1574 = vmatpush1.msra.mxu0 %v1573
    %1575 = vmatprep.subr.mxu0 0.0
    %v1576 = vand.u32 %v1054, 4294901760
    %1577 = vmatpush1.msra.mxu0 %v1576
    %1578 = vmatprep.subr.mxu0 0.0
    %v1579 = vand.u32 %v1055, 4294901760
    %1580 = vmatpush1.msra.mxu0 %v1579
    %1581 = vmatprep.subr.mxu0 0.0
    %v1582 = vand.u32 %v1056, 4294901760
    %1583 = vmatpush1.msra.mxu0 %v1582
    %1584 = vmatprep.subr.mxu0 0.0
    %v1585 = vand.u32 %v1057, 4294901760
    %1586 = vmatpush1.msra.mxu0 %v1585
    %1587 = vmatprep.subr.mxu0 0.0
    %1588 = vmatpush1.msra.mxu0 0.0
    %1589 = vmatprep.subr.mxu0 0.0
    %1590 = vmatpush1.msra.mxu0 0.0
    %1591 = vmatprep.subr.mxu0 0.0
    %1592 = vmatpush1.msra.mxu0 0.0
    %1593 = vmatprep.subr.mxu0 0.0
    %1594 = vmatpush1.msra.mxu0 0.0
    %1595 = vmatprep.subr.mxu0 0.0
    %1596 = vmatpush1.msra.mxu0 0.0
    %1597 = vmatprep.subr.mxu0 0.0
    %1598 = vmatpush1.msra.mxu0 0.0
    %1599 = vmatprep.subr.mxu0 0.0
    %1600 = vmatpush1.msra.mxu0 0.0
    %1601 = vmatprep.subr.mxu0 0.0
    %1602 = vmatpush1.msra.mxu0 0.0
    %1603 = vmatprep.subr.mxu0 0.0
    %1604 = vmatpush1.msra.mxu0 0.0
    %1605 = vmatprep.subr.mxu0 0.0
    %1606 = vmatpush1.msra.mxu0 0.0
    %1607 = vmatprep.subr.mxu0 0.0
    %1608 = vmatpush1.msra.mxu0 0.0
    %1609 = vmatprep.subr.mxu0 0.0
    %1610 = vmatpush1.msra.mxu0 0.0
    %1611 = vmatprep.subr.mxu0 0.0
    %1612 = vmatpush1.msra.mxu0 0.0
    %1613 = vmatprep.subr.mxu0 0.0
    %1614 = vmatpush1.msra.mxu0 0.0
    %1615 = vmatprep.subr.mxu0 0.0
    %1616 = vmatpush1.msra.mxu0 0.0
    %1617 = vmatprep.subr.mxu0 0.0
    %1618 = vmatpush1.msra.mxu0 0.0
    %1619 = vmatprep.subr.mxu0 0.0
    %1620 = vmatpush1.msra.mxu0 0.0
    %1621 = vmatprep.subr.mxu0 0.0
    %1622 = vmatpush1.msra.mxu0 0.0
    %1623 = vmatprep.subr.mxu0 0.0
    %1624 = vmatpush1.msra.mxu0 0.0
    %1625 = vmatprep.subr.mxu0 0.0
    %1626 = vmatpush1.msra.mxu0 0.0
    %1627 = vmatprep.subr.mxu0 0.0
    %1628 = vmatpush1.msra.mxu0 0.0
    %1629 = vmatprep.subr.mxu0 0.0
    %1630 = vmatpush1.msra.mxu0 0.0
    %1631 = vmatprep.subr.mxu0 0.0
    %1632 = vmatpush1.msra.mxu0 0.0
    %1633 = vmatprep.subr.mxu0 0.0
    %1634 = vmatpush1.msra.mxu0 0.0
    %1635 = vmatprep.mubr.f32.mxu0 0.0
    %v1636 = vand.u32 %v1063, 4294901760
    %1637 = vmatmul.mubr.f32.gmra.mrb[0].mxu0 %v1636
    %v1638 = vpop.f32.mrb[0].mxu0
    %v1639 = vadd.f32 %v1554, %v1638
    %v1640 = vpop.f32.mrb[0].mxu0
    %1641 = vmatprep.mubr.f32.mxu0 0.0
    %v1642 = vand.u32 %v1066, 4294901760
    %1643 = vmatmul.mubr.f32.gmra.mrb[0].mxu0 %v1642
    %v1644 = vpop.f32.mrb[0].mxu0
    %v1645 = vadd.f32 %v1560, %v1644
    %v1646 = vpop.f32.mrb[0].mxu0
    %1647 = vdwg.mxu0
    %v1648 = vmul.f32 %v1639, %v1639
    %v1649 = vsub.f32 %v1645, %v1648
    %v1650 = vsub.f32 %v1047, %v1639
    %v1651 = vadd.f32 %v1649, 1e-05
    %v1652 = vrsqrt.pop %v1651
    %v1653 = vmul.f32 %v1650, %v1652
    %v1654 = vlaneseq
    %v1655 = vshrl.u32 %v1654, 7
    %v1656 = vsub.s32 0, %v1655
    %v1657 = vrot.slane %v1058, %v1656
    %v1658 = vmul.f32 %v1653, %v1657
    %v1659 = vlaneseq
    %v1660 = vshrl.u32 %v1659, 7
    %v1661 = vsub.s32 0, %v1660
    %v1662 = vrot.slane %v1059, %v1661
    %v1663 = vadd.f32 %v1658, %v1662
    %vm1664 = vcmp.ge.f32.partialorder %v1663, 0.0
    %v1665 = vmul.f32 %v1663, 0.01
    %v1666 = vsel %vm1664, %v1663, %v1665
    %v1667 = vld [vmem:[#allocation2 + $0xb0] sm:$0xff]
    %v1668 = vld [vmem:[#allocation2 + $0xb8] sm:$0xff]
    %v1669 = vld [vmem:[#allocation2 + $0xc0] sm:$0xff]
    %v1670 = vld [vmem:[#allocation2 + $0xc8] sm:$0xff]
    %v1671 = vld [vmem:[#allocation2 + $0xd0] sm:$0xff]
    %v1672 = vld [vmem:[#allocation2 + $0xd8] sm:$0xff]
    %v1673 = vld [vmem:[#allocation2 + $0xe0] sm:$0xff]
    %v1674 = vld [vmem:[#allocation2 + $0xe8] sm:$0xff]
    %v1675 = vld [vmem:[#allocation2 + $0xf0] sm:$0x1]
    %v1676 = vlaneseq
    %v1677 = vshrl.u32 %v1676, 7
    %v1678 = vsub.s32 0, %v1677
    %v1679 = vrot.slane %v1675, %v1678
    %v1681 = vsel %vm1061, %v1666, 0
    %1683 = vmatprep.subr.mxu0 0.0
    %v1684 = vand.u32 %v1667, 4294901760
    %1685 = vmatpush1.msra.mxu0 %v1684
    %1686 = vmatprep.subr.mxu0 0.0
    %v1687 = vand.u32 %v1668, 4294901760
    %1688 = vmatpush1.msra.mxu0 %v1687
    %1689 = vmatprep.subr.mxu0 0.0
    %v1690 = vand.u32 %v1669, 4294901760
    %1691 = vmatpush1.msra.mxu0 %v1690
    %1692 = vmatprep.subr.mxu0 0.0
    %v1693 = vand.u32 %v1670, 4294901760
    %1694 = vmatpush1.msra.mxu0 %v1693
    %1695 = vmatprep.subr.mxu0 0.0
    %v1696 = vand.u32 %v1671, 4294901760
    %1697 = vmatpush1.msra.mxu0 %v1696
    %1698 = vmatprep.subr.mxu0 0.0
    %v1699 = vand.u32 %v1672, 4294901760
    %1700 = vmatpush1.msra.mxu0 %v1699
    %1701 = vmatprep.subr.mxu0 0.0
    %v1702 = vand.u32 %v1673, 4294901760
    %1703 = vmatpush1.msra.mxu0 %v1702
    %1704 = vmatprep.subr.mxu0 0.0
    %v1705 = vand.u32 %v1674, 4294901760
    %1706 = vmatpush1.msra.mxu0 %v1705
    %1707 = vmatprep.subr.mxu0 0.0
    %1708 = vmatpush1.msra.mxu0 0.0
    %1709 = vmatprep.subr.mxu0 0.0
    %1710 = vmatpush1.msra.mxu0 0.0
    %1711 = vmatprep.subr.mxu0 0.0
    %1712 = vmatpush1.msra.mxu0 0.0
    %1713 = vmatprep.subr.mxu0 0.0
    %1714 = vmatpush1.msra.mxu0 0.0
    %1715 = vmatprep.subr.mxu0 0.0
    %1716 = vmatpush1.msra.mxu0 0.0
    %1717 = vmatprep.subr.mxu0 0.0
    %1718 = vmatpush1.msra.mxu0 0.0
    %1719 = vmatprep.subr.mxu0 0.0
    %1720 = vmatpush1.msra.mxu0 0.0
    %1721 = vmatprep.subr.mxu0 0.0
    %1722 = vmatpush1.msra.mxu0 0.0
    %1723 = vmatprep.subr.mxu0 0.0
    %1724 = vmatpush1.msra.mxu0 0.0
    %1725 = vmatprep.subr.mxu0 0.0
    %1726 = vmatpush1.msra.mxu0 0.0
    %1727 = vmatprep.subr.mxu0 0.0
    %1728 = vmatpush1.msra.mxu0 0.0
    %1729 = vmatprep.subr.mxu0 0.0
    %1730 = vmatpush1.msra.mxu0 0.0
    %1731 = vmatprep.subr.mxu0 0.0
    %1732 = vmatpush1.msra.mxu0 0.0
    %1733 = vmatprep.subr.mxu0 0.0
    %1734 = vmatpush1.msra.mxu0 0.0
    %1735 = vmatprep.subr.mxu0 0.0
    %1736 = vmatpush1.msra.mxu0 0.0
    %1737 = vmatprep.subr.mxu0 0.0
    %1738 = vmatpush1.msra.mxu0 0.0
    %1739 = vmatprep.subr.mxu0 0.0
    %1740 = vmatpush1.msra.mxu0 0.0
    %1741 = vmatprep.subr.mxu0 0.0
    %1742 = vmatpush1.msra.mxu0 0.0
    %1743 = vmatprep.subr.mxu0 0.0
    %1744 = vmatpush1.msra.mxu0 0.0
    %1745 = vmatprep.subr.mxu0 0.0
    %1746 = vmatpush1.msra.mxu0 0.0
    %1747 = vmatprep.subr.mxu0 0.0
    %1748 = vmatpush1.msra.mxu0 0.0
    %1749 = vmatprep.subr.mxu0 0.0
    %1750 = vmatpush1.msra.mxu0 0.0
    %1751 = vmatprep.subr.mxu0 0.0
    %1752 = vmatpush1.msra.mxu0 0.0
    %1753 = vmatprep.subr.mxu0 0.0
    %1754 = vmatpush1.msra.mxu0 0.0
    %1755 = vmatprep.mubr.f32.mxu0 0.0
    %v1756 = vand.u32 %v1681, 4294901760
    %v1757 = vsub.f32 %v1681, %v1756
    %v1758 = vand.u32 %v1757, 4294901760
    %v1759 = vsub.f32 %v1757, %v1758
    %v1760 = vand.u32 %v1759, 4294901760
    %1761 = vmatmul.mubr.f32.gmra.mrb[0].mxu0 %v1760
    %v1762 = vpop.f32.mrb[0].mxu0
    %v1763 = vadd.f32 %v1679, %v1762
    %v1764 = vpop.f32.mrb[0].mxu0
    %1765 = vdwg.mxu0
    %1766 = vmatprep.subr.mxu0 0.0
    %v1767 = vand.u32 %v1667, 4294901760
    %v1768 = vsub.f32 %v1667, %v1767
    %v1769 = vand.u32 %v1768, 4294901760
    %v1770 = vsub.f32 %v1768, %v1769
    %v1771 = vand.u32 %v1770, 4294901760
    %1772 = vmatpush1.msra.mxu0 %v1771
    %1773 = vmatprep.subr.mxu0 0.0
    %v1774 = vand.u32 %v1668, 4294901760
    %v1775 = vsub.f32 %v1668, %v1774
    %v1776 = vand.u32 %v1775, 4294901760
    %v1777 = vsub.f32 %v1775, %v1776
    %v1778 = vand.u32 %v1777, 4294901760
    %1779 = vmatpush1.msra.mxu0 %v1778
    %1780 = vmatprep.subr.mxu0 0.0
    %v1781 = vand.u32 %v1669, 4294901760
    %v1782 = vsub.f32 %v1669, %v1781
    %v1783 = vand.u32 %v1782, 4294901760
    %v1784 = vsub.f32 %v1782, %v1783
    %v1785 = vand.u32 %v1784, 4294901760
    %1786 = vmatpush1.msra.mxu0 %v1785
    %1787 = vmatprep.subr.mxu0 0.0
    %v1788 = vand.u32 %v1670, 4294901760
    %v1789 = vsub.f32 %v1670, %v1788
    %v1790 = vand.u32 %v1789, 4294901760
    %v1791 = vsub.f32 %v1789, %v1790
    %v1792 = vand.u32 %v1791, 4294901760
    %1793 = vmatpush1.msra.mxu0 %v1792
    %1794 = vmatprep.subr.mxu0 0.0
    %v1795 = vand.u32 %v1671, 4294901760
    %v1796 = vsub.f32 %v1671, %v1795
    %v1797 = vand.u32 %v1796, 4294901760
    %v1798 = vsub.f32 %v1796, %v1797
    %v1799 = vand.u32 %v1798, 4294901760
    %1800 = vmatpush1.msra.mxu0 %v1799
    %1801 = vmatprep.subr.mxu0 0.0
    %v1802 = vand.u32 %v1672, 4294901760
    %v1803 = vsub.f32 %v1672, %v1802
    %v1804 = vand.u32 %v1803, 4294901760
    %v1805 = vsub.f32 %v1803, %v1804
    %v1806 = vand.u32 %v1805, 4294901760
    %1807 = vmatpush1.msra.mxu0 %v1806
    %1808 = vmatprep.subr.mxu0 0.0
    %v1809 = vand.u32 %v1673, 4294901760
    %v1810 = vsub.f32 %v1673, %v1809
    %v1811 = vand.u32 %v1810, 4294901760
    %v1812 = vsub.f32 %v1810, %v1811
    %v1813 = vand.u32 %v1812, 4294901760
    %1814 = vmatpush1.msra.mxu0 %v1813
    %1815 = vmatprep.subr.mxu0 0.0
    %v1816 = vand.u32 %v1674, 4294901760
    %v1817 = vsub.f32 %v1674, %v1816
    %v1818 = vand.u32 %v1817, 4294901760
    %v1819 = vsub.f32 %v1817, %v1818
    %v1820 = vand.u32 %v1819, 4294901760
    %1821 = vmatpush1.msra.mxu0 %v1820
    %1822 = vmatprep.subr.mxu0 0.0
    %1823 = vmatpush1.msra.mxu0 0.0
    %1824 = vmatprep.subr.mxu0 0.0
    %1825 = vmatpush1.msra.mxu0 0.0
    %1826 = vmatprep.subr.mxu0 0.0
    %1827 = vmatpush1.msra.mxu0 0.0
    %1828 = vmatprep.subr.mxu0 0.0
    %1829 = vmatpush1.msra.mxu0 0.0
    %1830 = vmatprep.subr.mxu0 0.0
    %1831 = vmatpush1.msra.mxu0 0.0
    %1832 = vmatprep.subr.mxu0 0.0
    %1833 = vmatpush1.msra.mxu0 0.0
    %1834 = vmatprep.subr.mxu0 0.0
    %1835 = vmatpush1.msra.mxu0 0.0
    %1836 = vmatprep.subr.mxu0 0.0
    %1837 = vmatpush1.msra.mxu0 0.0
    %1838 = vmatprep.subr.mxu0 0.0
    %1839 = vmatpush1.msra.mxu0 0.0
    %1840 = vmatprep.subr.mxu0 0.0
    %1841 = vmatpush1.msra.mxu0 0.0
    %1842 = vmatprep.subr.mxu0 0.0
    %1843 = vmatpush1.msra.mxu0 0.0
    %1844 = vmatprep.subr.mxu0 0.0
    %1845 = vmatpush1.msra.mxu0 0.0
    %1846 = vmatprep.subr.mxu0 0.0
    %1847 = vmatpush1.msra.mxu0 0.0
    %1848 = vmatprep.subr.mxu0 0.0
    %1849 = vmatpush1.msra.mxu0 0.0
    %1850 = vmatprep.subr.mxu0 0.0
    %1851 = vmatpush1.msra.mxu0 0.0
    %1852 = vmatprep.subr.mxu0 0.0
    %1853 = vmatpush1.msra.mxu0 0.0
    %1854 = vmatprep.subr.mxu0 0.0
    %1855 = vmatpush1.msra.mxu0 0.0
    %1856 = vmatprep.subr.mxu0 0.0
    %1857 = vmatpush1.msra.mxu0 0.0
    %1858 = vmatprep.subr.mxu0 0.0
    %1859 = vmatpush1.msra.mxu0 0.0
    %1860 = vmatprep.subr.mxu0 0.0
    %1861 = vmatpush1.msra.mxu0 0.0
    %1862 = vmatprep.subr.mxu0 0.0
    %1863 = vmatpush1.msra.mxu0 0.0
    %1864 = vmatprep.subr.mxu0 0.0
    %1865 = vmatpush1.msra.mxu0 0.0
    %1866 = vmatprep.subr.mxu0 0.0
    %1867 = vmatpush1.msra.mxu0 0.0
    %1868 = vmatprep.subr.mxu0 0.0
    %1869 = vmatpush1.msra.mxu0 0.0
    %1870 = vmatprep.mubr.f32.mxu0 0.0
    %v1871 = vand.u32 %v1681, 4294901760
    %1872 = vmatmul.mubr.f32.gmra.mrb[0].mxu0 %v1871
    %v1873 = vpop.f32.mrb[0].mxu0
    %v1874 = vadd.f32 %v1763, %v1873
    %v1875 = vpop.f32.mrb[0].mxu0
    %1876 = vdwg.mxu0
    %1877 = vmatprep.subr.mxu0 0.0
    %v1878 = vand.u32 %v1667, 4294901760
    %v1879 = vsub.f32 %v1667, %v1878
    %1880 = vmatpush1.msra.mxu0 %v1879
    %1881 = vmatprep.subr.mxu0 0.0
    %v1882 = vand.u32 %v1668, 4294901760
    %v1883 = vsub.f32 %v1668, %v1882
    %1884 = vmatpush1.msra.mxu0 %v1883
    %1885 = vmatprep.subr.mxu0 0.0
    %v1886 = vand.u32 %v1669, 4294901760
    %v1887 = vsub.f32 %v1669, %v1886
    %1888 = vmatpush1.msra.mxu0 %v1887
    %1889 = vmatprep.subr.mxu0 0.0
    %v1890 = vand.u32 %v1670, 4294901760
    %v1891 = vsub.f32 %v1670, %v1890
    %1892 = vmatpush1.msra.mxu0 %v1891
    %1893 = vmatprep.subr.mxu0 0.0
    %v1894 = vand.u32 %v1671, 4294901760
    %v1895 = vsub.f32 %v1671, %v1894
    %1896 = vmatpush1.msra.mxu0 %v1895
    %1897 = vmatprep.subr.mxu0 0.0
    %v1898 = vand.u32 %v1672, 4294901760
    %v1899 = vsub.f32 %v1672, %v1898
    %1900 = vmatpush1.msra.mxu0 %v1899
    %1901 = vmatprep.subr.mxu0 0.0
    %v1902 = vand.u32 %v1673, 4294901760
    %v1903 = vsub.f32 %v1673, %v1902
    %1904 = vmatpush1.msra.mxu0 %v1903
    %1905 = vmatprep.subr.mxu0 0.0
    %v1906 = vand.u32 %v1674, 4294901760
    %v1907 = vsub.f32 %v1674, %v1906
    %1908 = vmatpush1.msra.mxu0 %v1907
    %1909 = vmatprep.subr.mxu0 0.0
    %1910 = vmatpush1.msra.mxu0 0.0
    %1911 = vmatprep.subr.mxu0 0.0
    %1912 = vmatpush1.msra.mxu0 0.0
    %1913 = vmatprep.subr.mxu0 0.0
    %1914 = vmatpush1.msra.mxu0 0.0
    %1915 = vmatprep.subr.mxu0 0.0
    %1916 = vmatpush1.msra.mxu0 0.0
    %1917 = vmatprep.subr.mxu0 0.0
    %1918 = vmatpush1.msra.mxu0 0.0
    %1919 = vmatprep.subr.mxu0 0.0
    %1920 = vmatpush1.msra.mxu0 0.0
    %1921 = vmatprep.subr.mxu0 0.0
    %1922 = vmatpush1.msra.mxu0 0.0
    %1923 = vmatprep.subr.mxu0 0.0
    %1924 = vmatpush1.msra.mxu0 0.0
    %1925 = vmatprep.subr.mxu0 0.0
    %1926 = vmatpush1.msra.mxu0 0.0
    %1927 = vmatprep.subr.mxu0 0.0
    %1928 = vmatpush1.msra.mxu0 0.0
    %1929 = vmatprep.subr.mxu0 0.0
    %1930 = vmatpush1.msra.mxu0 0.0
    %1931 = vmatprep.subr.mxu0 0.0
    %1932 = vmatpush1.msra.mxu0 0.0
    %1933 = vmatprep.subr.mxu0 0.0
    %1934 = vmatpush1.msra.mxu0 0.0
    %1935 = vmatprep.subr.mxu0 0.0
    %1936 = vmatpush1.msra.mxu0 0.0
    %1937 = vmatprep.subr.mxu0 0.0
    %1938 = vmatpush1.msra.mxu0 0.0
    %1939 = vmatprep.subr.mxu0 0.0
    %1940 = vmatpush1.msra.mxu0 0.0
    %1941 = vmatprep.subr.mxu0 0.0
    %1942 = vmatpush1.msra.mxu0 0.0
    %1943 = vmatprep.subr.mxu0 0.0
    %1944 = vmatpush1.msra.mxu0 0.0
    %1945 = vmatprep.subr.mxu0 0.0
    %1946 = vmatpush1.msra.mxu0 0.0
    %1947 = vmatprep.subr.mxu0 0.0
    %1948 = vmatpush1.msra.mxu0 0.0
    %1949 = vmatprep.subr.mxu0 0.0
    %1950 = vmatpush1.msra.mxu0 0.0
    %1951 = vmatprep.subr.mxu0 0.0
    %1952 = vmatpush1.msra.mxu0 0.0
    %1953 = vmatprep.subr.mxu0 0.0
    %1954 = vmatpush1.msra.mxu0 0.0
    %1955 = vmatprep.subr.mxu0 0.0
    %1956 = vmatpush1.msra.mxu0 0.0
    %1957 = vmatprep.mubr.f32.mxu0 0.0
    %v1958 = vand.u32 %v1681, 4294901760
    %v1959 = vsub.f32 %v1681, %v1958
    %1960 = vmatmul.mubr.f32.gmra.mrb[0].mxu0 %v1959
    %v1961 = vpop.f32.mrb[0].mxu0
    %v1962 = vadd.f32 %v1874, %v1961
    %v1963 = vpop.f32.mrb[0].mxu0
    %1964 = vdwg.mxu0
    %1965 = vmatprep.subr.mxu0 0.0
    %v1966 = vand.u32 %v1667, 4294901760
    %1967 = vmatpush1.msra.mxu0 %v1966
    %1968 = vmatprep.subr.mxu0 0.0
    %v1969 = vand.u32 %v1668, 4294901760
    %1970 = vmatpush1.msra.mxu0 %v1969
    %1971 = vmatprep.subr.mxu0 0.0
    %v1972 = vand.u32 %v1669, 4294901760
    %1973 = vmatpush1.msra.mxu0 %v1972
    %1974 = vmatprep.subr.mxu0 0.0
    %v1975 = vand.u32 %v1670, 4294901760
    %1976 = vmatpush1.msra.mxu0 %v1975
    %1977 = vmatprep.subr.mxu0 0.0
    %v1978 = vand.u32 %v1671, 4294901760
    %1979 = vmatpush1.msra.mxu0 %v1978
    %1980 = vmatprep.subr.mxu0 0.0
    %v1981 = vand.u32 %v1672, 4294901760
    %1982 = vmatpush1.msra.mxu0 %v1981
    %1983 = vmatprep.subr.mxu0 0.0
    %v1984 = vand.u32 %v1673, 4294901760
    %1985 = vmatpush1.msra.mxu0 %v1984
    %1986 = vmatprep.subr.mxu0 0.0
    %v1987 = vand.u32 %v1674, 4294901760
    %1988 = vmatpush1.msra.mxu0 %v1987
    %1989 = vmatprep.subr.mxu0 0.0
    %1990 = vmatpush1.msra.mxu0 0.0
    %1991 = vmatprep.subr.mxu0 0.0
    %1992 = vmatpush1.msra.mxu0 0.0
    %1993 = vmatprep.subr.mxu0 0.0
    %1994 = vmatpush1.msra.mxu0 0.0
    %1995 = vmatprep.subr.mxu0 0.0
    %1996 = vmatpush1.msra.mxu0 0.0
    %1997 = vmatprep.subr.mxu0 0.0
    %1998 = vmatpush1.msra.mxu0 0.0
    %1999 = vmatprep.subr.mxu0 0.0
    %2000 = vmatpush1.msra.mxu0 0.0
    %2001 = vmatprep.subr.mxu0 0.0
    %2002 = vmatpush1.msra.mxu0 0.0
    %2003 = vmatprep.subr.mxu0 0.0
    %2004 = vmatpush1.msra.mxu0 0.0
    %2005 = vmatprep.subr.mxu0 0.0
    %2006 = vmatpush1.msra.mxu0 0.0
    %2007 = vmatprep.subr.mxu0 0.0
    %2008 = vmatpush1.msra.mxu0 0.0
    %2009 = vmatprep.subr.mxu0 0.0
    %2010 = vmatpush1.msra.mxu0 0.0
    %2011 = vmatprep.subr.mxu0 0.0
    %2012 = vmatpush1.msra.mxu0 0.0
    %2013 = vmatprep.subr.mxu0 0.0
    %2014 = vmatpush1.msra.mxu0 0.0
    %2015 = vmatprep.subr.mxu0 0.0
    %2016 = vmatpush1.msra.mxu0 0.0
    %2017 = vmatprep.subr.mxu0 0.0
    %2018 = vmatpush1.msra.mxu0 0.0
    %2019 = vmatprep.subr.mxu0 0.0
    %2020 = vmatpush1.msra.mxu0 0.0
    %2021 = vmatprep.subr.mxu0 0.0
    %2022 = vmatpush1.msra.mxu0 0.0
    %2023 = vmatprep.subr.mxu0 0.0
    %2024 = vmatpush1.msra.mxu0 0.0
    %2025 = vmatprep.subr.mxu0 0.0
    %2026 = vmatpush1.msra.mxu0 0.0
    %2027 = vmatprep.subr.mxu0 0.0
    %2028 = vmatpush1.msra.mxu0 0.0
    %2029 = vmatprep.subr.mxu0 0.0
    %2030 = vmatpush1.msra.mxu0 0.0
    %2031 = vmatprep.subr.mxu0 0.0
    %2032 = vmatpush1.msra.mxu0 0.0
    %2033 = vmatprep.subr.mxu0 0.0
    %2034 = vmatpush1.msra.mxu0 0.0
    %2035 = vmatprep.subr.mxu0 0.0
    %2036 = vmatpush1.msra.mxu0 0.0
    %2037 = vmatprep.mubr.f32.mxu0 0.0
    %v2038 = vand.u32 %v1681, 4294901760
    %v2039 = vsub.f32 %v1681, %v2038
    %v2040 = vand.u32 %v2039, 4294901760
    %2041 = vmatmul.mubr.f32.gmra.mrb[0].mxu0 %v2040
    %v2042 = vpop.f32.mrb[0].mxu0
    %v2043 = vadd.f32 %v1962, %v2042
    %v2044 = vpop.f32.mrb[0].mxu0
    %2045 = vdwg.mxu0
    %2046 = vmatprep.subr.mxu0 0.0
    %v2047 = vand.u32 %v1667, 4294901760
    %v2048 = vsub.f32 %v1667, %v2047
    %v2049 = vand.u32 %v2048, 4294901760
    %2050 = vmatpush1.msra.mxu0 %v2049
    %2051 = vmatprep.subr.mxu0 0.0
    %v2052 = vand.u32 %v1668, 4294901760
    %v2053 = vsub.f32 %v1668, %v2052
    %v2054 = vand.u32 %v2053, 4294901760
    %2055 = vmatpush1.msra.mxu0 %v2054
    %2056 = vmatprep.subr.mxu0 0.0
    %v2057 = vand.u32 %v1669, 4294901760
    %v2058 = vsub.f32 %v1669, %v2057
    %v2059 = vand.u32 %v2058, 4294901760
    %2060 = vmatpush1.msra.mxu0 %v2059
    %2061 = vmatprep.subr.mxu0 0.0
    %v2062 = vand.u32 %v1670, 4294901760
    %v2063 = vsub.f32 %v1670, %v2062
    %v2064 = vand.u32 %v2063, 4294901760
    %2065 = vmatpush1.msra.mxu0 %v2064
    %2066 = vmatprep.subr.mxu0 0.0
    %v2067 = vand.u32 %v1671, 4294901760
    %v2068 = vsub.f32 %v1671, %v2067
    %v2069 = vand.u32 %v2068, 4294901760
    %2070 = vmatpush1.msra.mxu0 %v2069
    %2071 = vmatprep.subr.mxu0 0.0
    %v2072 = vand.u32 %v1672, 4294901760
    %v2073 = vsub.f32 %v1672, %v2072
    %v2074 = vand.u32 %v2073, 4294901760
    %2075 = vmatpush1.msra.mxu0 %v2074
    %2076 = vmatprep.subr.mxu0 0.0
    %v2077 = vand.u32 %v1673, 4294901760
    %v2078 = vsub.f32 %v1673, %v2077
    %v2079 = vand.u32 %v2078, 4294901760
    %2080 = vmatpush1.msra.mxu0 %v2079
    %2081 = vmatprep.subr.mxu0 0.0
    %v2082 = vand.u32 %v1674, 4294901760
    %v2083 = vsub.f32 %v1674, %v2082
    %v2084 = vand.u32 %v2083, 4294901760
    %2085 = vmatpush1.msra.mxu0 %v2084
    %2086 = vmatprep.subr.mxu0 0.0
    %2087 = vmatpush1.msra.mxu0 0.0
    %2088 = vmatprep.subr.mxu0 0.0
    %2089 = vmatpush1.msra.mxu0 0.0
    %2090 = vmatprep.subr.mxu0 0.0
    %2091 = vmatpush1.msra.mxu0 0.0
    %2092 = vmatprep.subr.mxu0 0.0
    %2093 = vmatpush1.msra.mxu0 0.0
    %2094 = vmatprep.subr.mxu0 0.0
    %2095 = vmatpush1.msra.mxu0 0.0
    %2096 = vmatprep.subr.mxu0 0.0
    %2097 = vmatpush1.msra.mxu0 0.0
    %2098 = vmatprep.subr.mxu0 0.0
    %2099 = vmatpush1.msra.mxu0 0.0
    %2100 = vmatprep.subr.mxu0 0.0
    %2101 = vmatpush1.msra.mxu0 0.0
    %2102 = vmatprep.subr.mxu0 0.0
    %2103 = vmatpush1.msra.mxu0 0.0
    %2104 = vmatprep.subr.mxu0 0.0
    %2105 = vmatpush1.msra.mxu0 0.0
    %2106 = vmatprep.subr.mxu0 0.0
    %2107 = vmatpush1.msra.mxu0 0.0
    %2108 = vmatprep.subr.mxu0 0.0
    %2109 = vmatpush1.msra.mxu0 0.0
    %2110 = vmatprep.subr.mxu0 0.0
    %2111 = vmatpush1.msra.mxu0 0.0
    %2112 = vmatprep.subr.mxu0 0.0
    %2113 = vmatpush1.msra.mxu0 0.0
    %2114 = vmatprep.subr.mxu0 0.0
    %2115 = vmatpush1.msra.mxu0 0.0
    %2116 = vmatprep.subr.mxu0 0.0
    %2117 = vmatpush1.msra.mxu0 0.0
    %2118 = vmatprep.subr.mxu0 0.0
    %2119 = vmatpush1.msra.mxu0 0.0
    %2120 = vmatprep.subr.mxu0 0.0
    %2121 = vmatpush1.msra.mxu0 0.0
    %2122 = vmatprep.subr.mxu0 0.0
    %2123 = vmatpush1.msra.mxu0 0.0
    %2124 = vmatprep.subr.mxu0 0.0
    %2125 = vmatpush1.msra.mxu0 0.0
    %2126 = vmatprep.subr.mxu0 0.0
    %2127 = vmatpush1.msra.mxu0 0.0
    %2128 = vmatprep.subr.mxu0 0.0
    %2129 = vmatpush1.msra.mxu0 0.0
    %2130 = vmatprep.subr.mxu0 0.0
    %2131 = vmatpush1.msra.mxu0 0.0
    %2132 = vmatprep.subr.mxu0 0.0
    %2133 = vmatpush1.msra.mxu0 0.0
    %2134 = vmatprep.mubr.f32.mxu0 0.0
    %v2135 = vand.u32 %v1681, 4294901760
    %2136 = vmatmul.mubr.f32.gmra.mrb[0].mxu0 %v2135
    %v2137 = vpop.f32.mrb[0].mxu0
    %v2138 = vadd.f32 %v2043, %v2137
    %v2139 = vpop.f32.mrb[0].mxu0
    %2140 = vdwg.mxu0
    %2141 = vmatprep.subr.mxu0 0.0
    %v2142 = vand.u32 %v1667, 4294901760
    %2143 = vmatpush1.msra.mxu0 %v2142
    %2144 = vmatprep.subr.mxu0 0.0
    %v2145 = vand.u32 %v1668, 4294901760
    %2146 = vmatpush1.msra.mxu0 %v2145
    %2147 = vmatprep.subr.mxu0 0.0
    %v2148 = vand.u32 %v1669, 4294901760
    %2149 = vmatpush1.msra.mxu0 %v2148
    %2150 = vmatprep.subr.mxu0 0.0
    %v2151 = vand.u32 %v1670, 4294901760
    %2152 = vmatpush1.msra.mxu0 %v2151
    %2153 = vmatprep.subr.mxu0 0.0
    %v2154 = vand.u32 %v1671, 4294901760
    %2155 = vmatpush1.msra.mxu0 %v2154
    %2156 = vmatprep.subr.mxu0 0.0
    %v2157 = vand.u32 %v1672, 4294901760
    %2158 = vmatpush1.msra.mxu0 %v2157
    %2159 = vmatprep.subr.mxu0 0.0
    %v2160 = vand.u32 %v1673, 4294901760
    %2161 = vmatpush1.msra.mxu0 %v2160
    %2162 = vmatprep.subr.mxu0 0.0
    %v2163 = vand.u32 %v1674, 4294901760
    %2164 = vmatpush1.msra.mxu0 %v2163
    %2165 = vmatprep.subr.mxu0 0.0
    %2166 = vmatpush1.msra.mxu0 0.0
    %2167 = vmatprep.subr.mxu0 0.0
    %2168 = vmatpush1.msra.mxu0 0.0
    %2169 = vmatprep.subr.mxu0 0.0
    %2170 = vmatpush1.msra.mxu0 0.0
    %2171 = vmatprep.subr.mxu0 0.0
    %2172 = vmatpush1.msra.mxu0 0.0
    %2173 = vmatprep.subr.mxu0 0.0
    %2174 = vmatpush1.msra.mxu0 0.0
    %2175 = vmatprep.subr.mxu0 0.0
    %2176 = vmatpush1.msra.mxu0 0.0
    %2177 = vmatprep.subr.mxu0 0.0
    %2178 = vmatpush1.msra.mxu0 0.0
    %2179 = vmatprep.subr.mxu0 0.0
    %2180 = vmatpush1.msra.mxu0 0.0
    %2181 = vmatprep.subr.mxu0 0.0
    %2182 = vmatpush1.msra.mxu0 0.0
    %2183 = vmatprep.subr.mxu0 0.0
    %2184 = vmatpush1.msra.mxu0 0.0
    %2185 = vmatprep.subr.mxu0 0.0
    %2186 = vmatpush1.msra.mxu0 0.0
    %2187 = vmatprep.subr.mxu0 0.0
    %2188 = vmatpush1.msra.mxu0 0.0
    %2189 = vmatprep.subr.mxu0 0.0
    %2190 = vmatpush1.msra.mxu0 0.0
    %2191 = vmatprep.subr.mxu0 0.0
    %2192 = vmatpush1.msra.mxu0 0.0
    %2193 = vmatprep.subr.mxu0 0.0
    %2194 = vmatpush1.msra.mxu0 0.0
    %2195 = vmatprep.subr.mxu0 0.0
    %2196 = vmatpush1.msra.mxu0 0.0
    %2197 = vmatprep.subr.mxu0 0.0
    %2198 = vmatpush1.msra.mxu0 0.0
    %2199 = vmatprep.subr.mxu0 0.0
    %2200 = vmatpush1.msra.mxu0 0.0
    %2201 = vmatprep.subr.mxu0 0.0
    %2202 = vmatpush1.msra.mxu0 0.0
    %2203 = vmatprep.subr.mxu0 0.0
    %2204 = vmatpush1.msra.mxu0 0.0
    %2205 = vmatprep.subr.mxu0 0.0
    %2206 = vmatpush1.msra.mxu0 0.0
    %2207 = vmatprep.subr.mxu0 0.0
    %2208 = vmatpush1.msra.mxu0 0.0
    %2209 = vmatprep.subr.mxu0 0.0
    %2210 = vmatpush1.msra.mxu0 0.0
    %2211 = vmatprep.subr.mxu0 0.0
    %2212 = vmatpush1.msra.mxu0 0.0
    %2213 = vmatprep.mubr.f32.mxu0 0.0
    %v2214 = vand.u32 %v1681, 4294901760
    %2215 = vmatmul.mubr.f32.gmra.mrb[0].mxu0 %v2214
    %v2216 = vpop.f32.mrb[0].mxu0
    %v2217 = vadd.f32 %v2138, %v2216
    %v2218 = vpop.f32.mrb[0].mxu0
    %2219 = vdwg.mxu0
    %v2220 = vld [vmem:[#allocation2 + $0x108] sm:$0xff]
    %v2221 = vld [vmem:[#allocation2 + $0x110] sm:$0xff]
    %v2222 = vld [vmem:[#allocation2 + $0x118] sm:$0xff]
    %v2223 = vld [vmem:[#allocation2 + $0x120] sm:$0xff]
    %v2224 = vld [vmem:[#allocation2 + $0xf8] sm:$0x1]
    %v2225 = vld [vmem:[#allocation2 + $0x100] sm:$0x1]
    %v2226 = vmul.f32 %v2217, %v2217
    %v2228 = vsel %vm35, %v2217, 0
    %v2231 = vsel %vm35, %v2226, 0
    %2233 = vmatprep.subr.mxu0 0.0
    %v2234 = vand.u32 %v2220, 4294901760
    %2235 = vmatpush1.msra.mxu0 %v2234
    %2236 = vmatprep.subr.mxu0 0.0
    %v2237 = vand.u32 %v2221, 4294901760
    %2238 = vmatpush1.msra.mxu0 %v2237
    %2239 = vmatprep.subr.mxu0 0.0
    %v2240 = vand.u32 %v2222, 4294901760
    %2241 = vmatpush1.msra.mxu0 %v2240
    %2242 = vmatprep.subr.mxu0 0.0
    %v2243 = vand.u32 %v2223, 4294901760
    %2244 = vmatpush1.msra.mxu0 %v2243
    %2245 = vmatprep.subr.mxu0 0.0
    %2246 = vmatpush1.msra.mxu0 0.0
    %2247 = vmatprep.subr.mxu0 0.0
    %2248 = vmatpush1.msra.mxu0 0.0
    %2249 = vmatprep.subr.mxu0 0.0
    %2250 = vmatpush1.msra.mxu0 0.0
    %2251 = vmatprep.subr.mxu0 0.0
    %2252 = vmatpush1.msra.mxu0 0.0
    %2253 = vmatprep.subr.mxu0 0.0
    %2254 = vmatpush1.msra.mxu0 0.0
    %2255 = vmatprep.subr.mxu0 0.0
    %2256 = vmatpush1.msra.mxu0 0.0
    %2257 = vmatprep.subr.mxu0 0.0
    %2258 = vmatpush1.msra.mxu0 0.0
    %2259 = vmatprep.subr.mxu0 0.0
    %2260 = vmatpush1.msra.mxu0 0.0
    %2261 = vmatprep.subr.mxu0 0.0
    %2262 = vmatpush1.msra.mxu0 0.0
    %2263 = vmatprep.subr.mxu0 0.0
    %2264 = vmatpush1.msra.mxu0 0.0
    %2265 = vmatprep.subr.mxu0 0.0
    %2266 = vmatpush1.msra.mxu0 0.0
    %2267 = vmatprep.subr.mxu0 0.0
    %2268 = vmatpush1.msra.mxu0 0.0
    %2269 = vmatprep.subr.mxu0 0.0
    %2270 = vmatpush1.msra.mxu0 0.0
    %2271 = vmatprep.subr.mxu0 0.0
    %2272 = vmatpush1.msra.mxu0 0.0
    %2273 = vmatprep.subr.mxu0 0.0
    %2274 = vmatpush1.msra.mxu0 0.0
    %2275 = vmatprep.subr.mxu0 0.0
    %2276 = vmatpush1.msra.mxu0 0.0
    %2277 = vmatprep.subr.mxu0 0.0
    %2278 = vmatpush1.msra.mxu0 0.0
    %2279 = vmatprep.subr.mxu0 0.0
    %2280 = vmatpush1.msra.mxu0 0.0
    %2281 = vmatprep.subr.mxu0 0.0
    %2282 = vmatpush1.msra.mxu0 0.0
    %2283 = vmatprep.subr.mxu0 0.0
    %2284 = vmatpush1.msra.mxu0 0.0
    %2285 = vmatprep.subr.mxu0 0.0
    %2286 = vmatpush1.msra.mxu0 0.0
    %2287 = vmatprep.subr.mxu0 0.0
    %2288 = vmatpush1.msra.mxu0 0.0
    %2289 = vmatprep.subr.mxu0 0.0
    %2290 = vmatpush1.msra.mxu0 0.0
    %2291 = vmatprep.subr.mxu0 0.0
    %2292 = vmatpush1.msra.mxu0 0.0
    %2293 = vmatprep.subr.mxu0 0.0
    %2294 = vmatpush1.msra.mxu0 0.0
    %2295 = vmatprep.subr.mxu0 0.0
    %2296 = vmatpush1.msra.mxu0 0.0
    %2297 = vmatprep.subr.mxu0 0.0
    %2298 = vmatpush1.msra.mxu0 0.0
    %2299 = vmatprep.subr.mxu0 0.0
    %2300 = vmatpush1.msra.mxu0 0.0
    %2301 = vmatprep.mubr.f32.mxu0 0.0
    %v2302 = vand.u32 %v2228, 4294901760
    %v2303 = vsub.f32 %v2228, %v2302
    %v2304 = vand.u32 %v2303, 4294901760
    %v2305 = vsub.f32 %v2303, %v2304
    %v2306 = vand.u32 %v2305, 4294901760
    %2307 = vmatmul.mubr.f32.gmra.mrb[0].mxu0 %v2306
    %v2308 = vpop.f32.mrb[0].mxu0
    %v2309 = vadd.f32 0.0, %v2308
    %v2310 = vpop.f32.mrb[0].mxu0
    %2311 = vmatprep.mubr.f32.mxu0 0.0
    %v2312 = vand.u32 %v2231, 4294901760
    %v2313 = vsub.f32 %v2231, %v2312
    %v2314 = vand.u32 %v2313, 4294901760
    %v2315 = vsub.f32 %v2313, %v2314
    %v2316 = vand.u32 %v2315, 4294901760
    %2317 = vmatmul.mubr.f32.gmra.mrb[0].mxu0 %v2316
    %v2318 = vpop.f32.mrb[0].mxu0
    %v2319 = vadd.f32 0.0, %v2318
    %v2320 = vpop.f32.mrb[0].mxu0
    %2321 = vdwg.mxu0
    %2322 = vmatprep.subr.mxu0 0.0
    %v2323 = vand.u32 %v2220, 4294901760
    %v2324 = vsub.f32 %v2220, %v2323
    %v2325 = vand.u32 %v2324, 4294901760
    %v2326 = vsub.f32 %v2324, %v2325
    %v2327 = vand.u32 %v2326, 4294901760
    %2328 = vmatpush1.msra.mxu0 %v2327
    %2329 = vmatprep.subr.mxu0 0.0
    %v2330 = vand.u32 %v2221, 4294901760
    %v2331 = vsub.f32 %v2221, %v2330
    %v2332 = vand.u32 %v2331, 4294901760
    %v2333 = vsub.f32 %v2331, %v2332
    %v2334 = vand.u32 %v2333, 4294901760
    %2335 = vmatpush1.msra.mxu0 %v2334
    %2336 = vmatprep.subr.mxu0 0.0
    %v2337 = vand.u32 %v2222, 4294901760
    %v2338 = vsub.f32 %v2222, %v2337
    %v2339 = vand.u32 %v2338, 4294901760
    %v2340 = vsub.f32 %v2338, %v2339
    %v2341 = vand.u32 %v2340, 4294901760
    %2342 = vmatpush1.msra.mxu0 %v2341
    %2343 = vmatprep.subr.mxu0 0.0
    %v2344 = vand.u32 %v2223, 4294901760
    %v2345 = vsub.f32 %v2223, %v2344
    %v2346 = vand.u32 %v2345, 4294901760
    %v2347 = vsub.f32 %v2345, %v2346
    %v2348 = vand.u32 %v2347, 4294901760
    %2349 = vmatpush1.msra.mxu0 %v2348
    %2350 = vmatprep.subr.mxu0 0.0
    %2351 = vmatpush1.msra.mxu0 0.0
    %2352 = vmatprep.subr.mxu0 0.0
    %2353 = vmatpush1.msra.mxu0 0.0
    %2354 = vmatprep.subr.mxu0 0.0
    %2355 = vmatpush1.msra.mxu0 0.0
    %2356 = vmatprep.subr.mxu0 0.0
    %2357 = vmatpush1.msra.mxu0 0.0
    %2358 = vmatprep.subr.mxu0 0.0
    %2359 = vmatpush1.msra.mxu0 0.0
    %2360 = vmatprep.subr.mxu0 0.0
    %2361 = vmatpush1.msra.mxu0 0.0
    %2362 = vmatprep.subr.mxu0 0.0
    %2363 = vmatpush1.msra.mxu0 0.0
    %2364 = vmatprep.subr.mxu0 0.0
    %2365 = vmatpush1.msra.mxu0 0.0
    %2366 = vmatprep.subr.mxu0 0.0
    %2367 = vmatpush1.msra.mxu0 0.0
    %2368 = vmatprep.subr.mxu0 0.0
    %2369 = vmatpush1.msra.mxu0 0.0
    %2370 = vmatprep.subr.mxu0 0.0
    %2371 = vmatpush1.msra.mxu0 0.0
    %2372 = vmatprep.subr.mxu0 0.0
    %2373 = vmatpush1.msra.mxu0 0.0
    %2374 = vmatprep.subr.mxu0 0.0
    %2375 = vmatpush1.msra.mxu0 0.0
    %2376 = vmatprep.subr.mxu0 0.0
    %2377 = vmatpush1.msra.mxu0 0.0
    %2378 = vmatprep.subr.mxu0 0.0
    %2379 = vmatpush1.msra.mxu0 0.0
    %2380 = vmatprep.subr.mxu0 0.0
    %2381 = vmatpush1.msra.mxu0 0.0
    %2382 = vmatprep.subr.mxu0 0.0
    %2383 = vmatpush1.msra.mxu0 0.0
    %2384 = vmatprep.subr.mxu0 0.0
    %2385 = vmatpush1.msra.mxu0 0.0
    %2386 = vmatprep.subr.mxu0 0.0
    %2387 = vmatpush1.msra.mxu0 0.0
    %2388 = vmatprep.subr.mxu0 0.0
    %2389 = vmatpush1.msra.mxu0 0.0
    %2390 = vmatprep.subr.mxu0 0.0
    %2391 = vmatpush1.msra.mxu0 0.0
    %2392 = vmatprep.subr.mxu0 0.0
    %2393 = vmatpush1.msra.mxu0 0.0
    %2394 = vmatprep.subr.mxu0 0.0
    %2395 = vmatpush1.msra.mxu0 0.0
    %2396 = vmatprep.subr.mxu0 0.0
    %2397 = vmatpush1.msra.mxu0 0.0
    %2398 = vmatprep.subr.mxu0 0.0
    %2399 = vmatpush1.msra.mxu0 0.0
    %2400 = vmatprep.subr.mxu0 0.0
    %2401 = vmatpush1.msra.mxu0 0.0
    %2402 = vmatprep.subr.mxu0 0.0
    %2403 = vmatpush1.msra.mxu0 0.0
    %2404 = vmatprep.subr.mxu0 0.0
    %2405 = vmatpush1.msra.mxu0 0.0
    %2406 = vmatprep.mubr.f32.mxu0 0.0
    %v2407 = vand.u32 %v2228, 4294901760
    %2408 = vmatmul.mubr.f32.gmra.mrb[0].mxu0 %v2407
    %v2409 = vpop.f32.mrb[0].mxu0
    %v2410 = vadd.f32 %v2309, %v2409
    %v2411 = vpop.f32.mrb[0].mxu0
    %2412 = vmatprep.mubr.f32.mxu0 0.0
    %v2413 = vand.u32 %v2231, 4294901760
    %2414 = vmatmul.mubr.f32.gmra.mrb[0].mxu0 %v2413
    %v2415 = vpop.f32.mrb[0].mxu0
    %v2416 = vadd.f32 %v2319, %v2415
    %v2417 = vpop.f32.mrb[0].mxu0
    %2418 = vdwg.mxu0
    %2419 = vmatprep.subr.mxu0 0.0
    %v2420 = vand.u32 %v2220, 4294901760
    %v2421 = vsub.f32 %v2220, %v2420
    %2422 = vmatpush1.msra.mxu0 %v2421
    %2423 = vmatprep.subr.mxu0 0.0
    %v2424 = vand.u32 %v2221, 4294901760
    %v2425 = vsub.f32 %v2221, %v2424
    %2426 = vmatpush1.msra.mxu0 %v2425
    %2427 = vmatprep.subr.mxu0 0.0
    %v2428 = vand.u32 %v2222, 4294901760
    %v2429 = vsub.f32 %v2222, %v2428
    %2430 = vmatpush1.msra.mxu0 %v2429
    %2431 = vmatprep.subr.mxu0 0.0
    %v2432 = vand.u32 %v2223, 4294901760
    %v2433 = vsub.f32 %v2223, %v2432
    %2434 = vmatpush1.msra.mxu0 %v2433
    %2435 = vmatprep.subr.mxu0 0.0
    %2436 = vmatpush1.msra.mxu0 0.0
    %2437 = vmatprep.subr.mxu0 0.0
    %2438 = vmatpush1.msra.mxu0 0.0
    %2439 = vmatprep.subr.mxu0 0.0
    %2440 = vmatpush1.msra.mxu0 0.0
    %2441 = vmatprep.subr.mxu0 0.0
    %2442 = vmatpush1.msra.mxu0 0.0
    %2443 = vmatprep.subr.mxu0 0.0
    %2444 = vmatpush1.msra.mxu0 0.0
    %2445 = vmatprep.subr.mxu0 0.0
    %2446 = vmatpush1.msra.mxu0 0.0
    %2447 = vmatprep.subr.mxu0 0.0
    %2448 = vmatpush1.msra.mxu0 0.0
    %2449 = vmatprep.subr.mxu0 0.0
    %2450 = vmatpush1.msra.mxu0 0.0
    %2451 = vmatprep.subr.mxu0 0.0
    %2452 = vmatpush1.msra.mxu0 0.0
    %2453 = vmatprep.subr.mxu0 0.0
    %2454 = vmatpush1.msra.mxu0 0.0
    %2455 = vmatprep.subr.mxu0 0.0
    %2456 = vmatpush1.msra.mxu0 0.0
    %2457 = vmatprep.subr.mxu0 0.0
    %2458 = vmatpush1.msra.mxu0 0.0
    %2459 = vmatprep.subr.mxu0 0.0
    %2460 = vmatpush1.msra.mxu0 0.0
    %2461 = vmatprep.subr.mxu0 0.0
    %2462 = vmatpush1.msra.mxu0 0.0
    %2463 = vmatprep.subr.mxu0 0.0
    %2464 = vmatpush1.msra.mxu0 0.0
    %2465 = vmatprep.subr.mxu0 0.0
    %2466 = vmatpush1.msra.mxu0 0.0
    %2467 = vmatprep.subr.mxu0 0.0
    %2468 = vmatpush1.msra.mxu0 0.0
    %2469 = vmatprep.subr.mxu0 0.0
    %2470 = vmatpush1.msra.mxu0 0.0
    %2471 = vmatprep.subr.mxu0 0.0
    %2472 = vmatpush1.msra.mxu0 0.0
    %2473 = vmatprep.subr.mxu0 0.0
    %2474 = vmatpush1.msra.mxu0 0.0
    %2475 = vmatprep.subr.mxu0 0.0
    %2476 = vmatpush1.msra.mxu0 0.0
    %2477 = vmatprep.subr.mxu0 0.0
    %2478 = vmatpush1.msra.mxu0 0.0
    %2479 = vmatprep.subr.mxu0 0.0
    %2480 = vmatpush1.msra.mxu0 0.0
    %2481 = vmatprep.subr.mxu0 0.0
    %2482 = vmatpush1.msra.mxu0 0.0
    %2483 = vmatprep.subr.mxu0 0.0
    %2484 = vmatpush1.msra.mxu0 0.0
    %2485 = vmatprep.subr.mxu0 0.0
    %2486 = vmatpush1.msra.mxu0 0.0
    %2487 = vmatprep.subr.mxu0 0.0
    %2488 = vmatpush1.msra.mxu0 0.0
    %2489 = vmatprep.subr.mxu0 0.0
    %2490 = vmatpush1.msra.mxu0 0.0
    %2491 = vmatprep.mubr.f32.mxu0 0.0
    %v2492 = vand.u32 %v2228, 4294901760
    %v2493 = vsub.f32 %v2228, %v2492
    %2494 = vmatmul.mubr.f32.gmra.mrb[0].mxu0 %v2493
    %v2495 = vpop.f32.mrb[0].mxu0
    %v2496 = vadd.f32 %v2410, %v2495
    %v2497 = vpop.f32.mrb[0].mxu0
    %2498 = vmatprep.mubr.f32.mxu0 0.0
    %v2499 = vand.u32 %v2231, 4294901760
    %v2500 = vsub.f32 %v2231, %v2499
    %2501 = vmatmul.mubr.f32.gmra.mrb[0].mxu0 %v2500
    %v2502 = vpop.f32.mrb[0].mxu0
    %v2503 = vadd.f32 %v2416, %v2502
    %v2504 = vpop.f32.mrb[0].mxu0
    %2505 = vdwg.mxu0
    %2506 = vmatprep.subr.mxu0 0.0
    %v2507 = vand.u32 %v2220, 4294901760
    %2508 = vmatpush1.msra.mxu0 %v2507
    %2509 = vmatprep.subr.mxu0 0.0
    %v2510 = vand.u32 %v2221, 4294901760
    %2511 = vmatpush1.msra.mxu0 %v2510
    %2512 = vmatprep.subr.mxu0 0.0
    %v2513 = vand.u32 %v2222, 4294901760
    %2514 = vmatpush1.msra.mxu0 %v2513
    %2515 = vmatprep.subr.mxu0 0.0
    %v2516 = vand.u32 %v2223, 4294901760
    %2517 = vmatpush1.msra.mxu0 %v2516
    %2518 = vmatprep.subr.mxu0 0.0
    %2519 = vmatpush1.msra.mxu0 0.0
    %2520 = vmatprep.subr.mxu0 0.0
    %2521 = vmatpush1.msra.mxu0 0.0
    %2522 = vmatprep.subr.mxu0 0.0
    %2523 = vmatpush1.msra.mxu0 0.0
    %2524 = vmatprep.subr.mxu0 0.0
    %2525 = vmatpush1.msra.mxu0 0.0
    %2526 = vmatprep.subr.mxu0 0.0
    %2527 = vmatpush1.msra.mxu0 0.0
    %2528 = vmatprep.subr.mxu0 0.0
    %2529 = vmatpush1.msra.mxu0 0.0
    %2530 = vmatprep.subr.mxu0 0.0
    %2531 = vmatpush1.msra.mxu0 0.0
    %2532 = vmatprep.subr.mxu0 0.0
    %2533 = vmatpush1.msra.mxu0 0.0
    %2534 = vmatprep.subr.mxu0 0.0
    %2535 = vmatpush1.msra.mxu0 0.0
    %2536 = vmatprep.subr.mxu0 0.0
    %2537 = vmatpush1.msra.mxu0 0.0
    %2538 = vmatprep.subr.mxu0 0.0
    %2539 = vmatpush1.msra.mxu0 0.0
    %2540 = vmatprep.subr.mxu0 0.0
    %2541 = vmatpush1.msra.mxu0 0.0
    %2542 = vmatprep.subr.mxu0 0.0
    %2543 = vmatpush1.msra.mxu0 0.0
    %2544 = vmatprep.subr.mxu0 0.0
    %2545 = vmatpush1.msra.mxu0 0.0
    %2546 = vmatprep.subr.mxu0 0.0
    %2547 = vmatpush1.msra.mxu0 0.0
    %2548 = vmatprep.subr.mxu0 0.0
    %2549 = vmatpush1.msra.mxu0 0.0
    %2550 = vmatprep.subr.mxu0 0.0
    %2551 = vmatpush1.msra.mxu0 0.0
    %2552 = vmatprep.subr.mxu0 0.0
    %2553 = vmatpush1.msra.mxu0 0.0
    %2554 = vmatprep.subr.mxu0 0.0
    %2555 = vmatpush1.msra.mxu0 0.0
    %2556 = vmatprep.subr.mxu0 0.0
    %2557 = vmatpush1.msra.mxu0 0.0
    %2558 = vmatprep.subr.mxu0 0.0
    %2559 = vmatpush1.msra.mxu0 0.0
    %2560 = vmatprep.subr.mxu0 0.0
    %2561 = vmatpush1.msra.mxu0 0.0
    %2562 = vmatprep.subr.mxu0 0.0
    %2563 = vmatpush1.msra.mxu0 0.0
    %2564 = vmatprep.subr.mxu0 0.0
    %2565 = vmatpush1.msra.mxu0 0.0
    %2566 = vmatprep.subr.mxu0 0.0
    %2567 = vmatpush1.msra.mxu0 0.0
    %2568 = vmatprep.subr.mxu0 0.0
    %2569 = vmatpush1.msra.mxu0 0.0
    %2570 = vmatprep.subr.mxu0 0.0
    %2571 = vmatpush1.msra.mxu0 0.0
    %2572 = vmatprep.subr.mxu0 0.0
    %2573 = vmatpush1.msra.mxu0 0.0
    %2574 = vmatprep.mubr.f32.mxu0 0.0
    %v2575 = vand.u32 %v2228, 4294901760
    %v2576 = vsub.f32 %v2228, %v2575
    %v2577 = vand.u32 %v2576, 4294901760
    %2578 = vmatmul.mubr.f32.gmra.mrb[0].mxu0 %v2577
    %v2579 = vpop.f32.mrb[0].mxu0
    %v2580 = vadd.f32 %v2496, %v2579
    %v2581 = vpop.f32.mrb[0].mxu0
    %2582 = vmatprep.mubr.f32.mxu0 0.0
    %v2583 = vand.u32 %v2231, 4294901760
    %v2584 = vsub.f32 %v2231, %v2583
    %v2585 = vand.u32 %v2584, 4294901760
    %2586 = vmatmul.mubr.f32.gmra.mrb[0].mxu0 %v2585
    %v2587 = vpop.f32.mrb[0].mxu0
    %v2588 = vadd.f32 %v2503, %v2587
    %v2589 = vpop.f32.mrb[0].mxu0
    %2590 = vdwg.mxu0
    %2591 = vmatprep.subr.mxu0 0.0
    %v2592 = vand.u32 %v2220, 4294901760
    %v2593 = vsub.f32 %v2220, %v2592
    %v2594 = vand.u32 %v2593, 4294901760
    %2595 = vmatpush1.msra.mxu0 %v2594
    %2596 = vmatprep.subr.mxu0 0.0
    %v2597 = vand.u32 %v2221, 4294901760
    %v2598 = vsub.f32 %v2221, %v2597
    %v2599 = vand.u32 %v2598, 4294901760
    %2600 = vmatpush1.msra.mxu0 %v2599
    %2601 = vmatprep.subr.mxu0 0.0
    %v2602 = vand.u32 %v2222, 4294901760
    %v2603 = vsub.f32 %v2222, %v2602
    %v2604 = vand.u32 %v2603, 4294901760
    %2605 = vmatpush1.msra.mxu0 %v2604
    %2606 = vmatprep.subr.mxu0 0.0
    %v2607 = vand.u32 %v2223, 4294901760
    %v2608 = vsub.f32 %v2223, %v2607
    %v2609 = vand.u32 %v2608, 4294901760
    %2610 = vmatpush1.msra.mxu0 %v2609
    %2611 = vmatprep.subr.mxu0 0.0
    %2612 = vmatpush1.msra.mxu0 0.0
    %2613 = vmatprep.subr.mxu0 0.0
    %2614 = vmatpush1.msra.mxu0 0.0
    %2615 = vmatprep.subr.mxu0 0.0
    %2616 = vmatpush1.msra.mxu0 0.0
    %2617 = vmatprep.subr.mxu0 0.0
    %2618 = vmatpush1.msra.mxu0 0.0
    %2619 = vmatprep.subr.mxu0 0.0
    %2620 = vmatpush1.msra.mxu0 0.0
    %2621 = vmatprep.subr.mxu0 0.0
    %2622 = vmatpush1.msra.mxu0 0.0
    %2623 = vmatprep.subr.mxu0 0.0
    %2624 = vmatpush1.msra.mxu0 0.0
    %2625 = vmatprep.subr.mxu0 0.0
    %2626 = vmatpush1.msra.mxu0 0.0
    %2627 = vmatprep.subr.mxu0 0.0
    %2628 = vmatpush1.msra.mxu0 0.0
    %2629 = vmatprep.subr.mxu0 0.0
    %2630 = vmatpush1.msra.mxu0 0.0
    %2631 = vmatprep.subr.mxu0 0.0
    %2632 = vmatpush1.msra.mxu0 0.0
    %2633 = vmatprep.subr.mxu0 0.0
    %2634 = vmatpush1.msra.mxu0 0.0
    %2635 = vmatprep.subr.mxu0 0.0
    %2636 = vmatpush1.msra.mxu0 0.0
    %2637 = vmatprep.subr.mxu0 0.0
    %2638 = vmatpush1.msra.mxu0 0.0
    %2639 = vmatprep.subr.mxu0 0.0
    %2640 = vmatpush1.msra.mxu0 0.0
    %2641 = vmatprep.subr.mxu0 0.0
    %2642 = vmatpush1.msra.mxu0 0.0
    %2643 = vmatprep.subr.mxu0 0.0
    %2644 = vmatpush1.msra.mxu0 0.0
    %2645 = vmatprep.subr.mxu0 0.0
    %2646 = vmatpush1.msra.mxu0 0.0
    %2647 = vmatprep.subr.mxu0 0.0
    %2648 = vmatpush1.msra.mxu0 0.0
    %2649 = vmatprep.subr.mxu0 0.0
    %2650 = vmatpush1.msra.mxu0 0.0
    %2651 = vmatprep.subr.mxu0 0.0
    %2652 = vmatpush1.msra.mxu0 0.0
    %2653 = vmatprep.subr.mxu0 0.0
    %2654 = vmatpush1.msra.mxu0 0.0
    %2655 = vmatprep.subr.mxu0 0.0
    %2656 = vmatpush1.msra.mxu0 0.0
    %2657 = vmatprep.subr.mxu0 0.0
    %2658 = vmatpush1.msra.mxu0 0.0
    %2659 = vmatprep.subr.mxu0 0.0
    %2660 = vmatpush1.msra.mxu0 0.0
    %2661 = vmatprep.subr.mxu0 0.0
    %2662 = vmatpush1.msra.mxu0 0.0
    %2663 = vmatprep.subr.mxu0 0.0
    %2664 = vmatpush1.msra.mxu0 0.0
    %2665 = vmatprep.subr.mxu0 0.0
    %2666 = vmatpush1.msra.mxu0 0.0
    %2667 = vmatprep.mubr.f32.mxu0 0.0
    %v2668 = vand.u32 %v2228, 4294901760
    %2669 = vmatmul.mubr.f32.gmra.mrb[0].mxu0 %v2668
    %v2670 = vpop.f32.mrb[0].mxu0
    %v2671 = vadd.f32 %v2580, %v2670
    %v2672 = vpop.f32.mrb[0].mxu0
    %2673 = vmatprep.mubr.f32.mxu0 0.0
    %v2674 = vand.u32 %v2231, 4294901760
    %2675 = vmatmul.mubr.f32.gmra.mrb[0].mxu0 %v2674
    %v2676 = vpop.f32.mrb[0].mxu0
    %v2677 = vadd.f32 %v2588, %v2676
    %v2678 = vpop.f32.mrb[0].mxu0
    %2679 = vdwg.mxu0
    %2680 = vmatprep.subr.mxu0 0.0
    %v2681 = vand.u32 %v2220, 4294901760
    %2682 = vmatpush1.msra.mxu0 %v2681
    %2683 = vmatprep.subr.mxu0 0.0
    %v2684 = vand.u32 %v2221, 4294901760
    %2685 = vmatpush1.msra.mxu0 %v2684
    %2686 = vmatprep.subr.mxu0 0.0
    %v2687 = vand.u32 %v2222, 4294901760
    %2688 = vmatpush1.msra.mxu0 %v2687
    %2689 = vmatprep.subr.mxu0 0.0
    %v2690 = vand.u32 %v2223, 4294901760
    %2691 = vmatpush1.msra.mxu0 %v2690
    %2692 = vmatprep.subr.mxu0 0.0
    %2693 = vmatpush1.msra.mxu0 0.0
    %2694 = vmatprep.subr.mxu0 0.0
    %2695 = vmatpush1.msra.mxu0 0.0
    %2696 = vmatprep.subr.mxu0 0.0
    %2697 = vmatpush1.msra.mxu0 0.0
    %2698 = vmatprep.subr.mxu0 0.0
    %2699 = vmatpush1.msra.mxu0 0.0
    %2700 = vmatprep.subr.mxu0 0.0
    %2701 = vmatpush1.msra.mxu0 0.0
    %2702 = vmatprep.subr.mxu0 0.0
    %2703 = vmatpush1.msra.mxu0 0.0
    %2704 = vmatprep.subr.mxu0 0.0
    %2705 = vmatpush1.msra.mxu0 0.0
    %2706 = vmatprep.subr.mxu0 0.0
    %2707 = vmatpush1.msra.mxu0 0.0
    %2708 = vmatprep.subr.mxu0 0.0
    %2709 = vmatpush1.msra.mxu0 0.0
    %2710 = vmatprep.subr.mxu0 0.0
    %2711 = vmatpush1.msra.mxu0 0.0
    %2712 = vmatprep.subr.mxu0 0.0
    %2713 = vmatpush1.msra.mxu0 0.0
    %2714 = vmatprep.subr.mxu0 0.0
    %2715 = vmatpush1.msra.mxu0 0.0
    %2716 = vmatprep.subr.mxu0 0.0
    %2717 = vmatpush1.msra.mxu0 0.0
    %2718 = vmatprep.subr.mxu0 0.0
    %2719 = vmatpush1.msra.mxu0 0.0
    %2720 = vmatprep.subr.mxu0 0.0
    %2721 = vmatpush1.msra.mxu0 0.0
    %2722 = vmatprep.subr.mxu0 0.0
    %2723 = vmatpush1.msra.mxu0 0.0
    %2724 = vmatprep.subr.mxu0 0.0
    %2725 = vmatpush1.msra.mxu0 0.0
    %2726 = vmatprep.subr.mxu0 0.0
    %2727 = vmatpush1.msra.mxu0 0.0
    %2728 = vmatprep.subr.mxu0 0.0
    %2729 = vmatpush1.msra.mxu0 0.0
    %2730 = vmatprep.subr.mxu0 0.0
    %2731 = vmatpush1.msra.mxu0 0.0
    %2732 = vmatprep.subr.mxu0 0.0
    %2733 = vmatpush1.msra.mxu0 0.0
    %2734 = vmatprep.subr.mxu0 0.0
    %2735 = vmatpush1.msra.mxu0 0.0
    %2736 = vmatprep.subr.mxu0 0.0
    %2737 = vmatpush1.msra.mxu0 0.0
    %2738 = vmatprep.subr.mxu0 0.0
    %2739 = vmatpush1.msra.mxu0 0.0
    %2740 = vmatprep.subr.mxu0 0.0
    %2741 = vmatpush1.msra.mxu0 0.0
    %2742 = vmatprep.subr.mxu0 0.0
    %2743 = vmatpush1.msra.mxu0 0.0
    %2744 = vmatprep.subr.mxu0 0.0
    %2745 = vmatpush1.msra.mxu0 0.0
    %2746 = vmatprep.subr.mxu0 0.0
    %2747 = vmatpush1.msra.mxu0 0.0
    %2748 = vmatprep.mubr.f32.mxu0 0.0
    %v2749 = vand.u32 %v2228, 4294901760
    %2750 = vmatmul.mubr.f32.gmra.mrb[0].mxu0 %v2749
    %v2751 = vpop.f32.mrb[0].mxu0
    %v2752 = vadd.f32 %v2671, %v2751
    %v2753 = vpop.f32.mrb[0].mxu0
    %2754 = vmatprep.mubr.f32.mxu0 0.0
    %v2755 = vand.u32 %v2231, 4294901760
    %2756 = vmatmul.mubr.f32.gmra.mrb[0].mxu0 %v2755
    %v2757 = vpop.f32.mrb[0].mxu0
    %v2758 = vadd.f32 %v2677, %v2757
    %v2759 = vpop.f32.mrb[0].mxu0
    %2760 = vdwg.mxu0
    %v2761 = vmul.f32 %v2752, %v2752
    %v2762 = vsub.f32 %v2758, %v2761
    %v2763 = vsub.f32 %v2217, %v2752
    %v2764 = vadd.f32 %v2762, 1e-05
    %v2765 = vrsqrt.pop %v2764
    %v2766 = vmul.f32 %v2763, %v2765
    %v2767 = vlaneseq
    %v2768 = vshrl.u32 %v2767, 7
    %v2769 = vsub.s32 0, %v2768
    %v2770 = vrot.slane %v2224, %v2769
    %v2771 = vmul.f32 %v2766, %v2770
    %v2772 = vlaneseq
    %v2773 = vshrl.u32 %v2772, 7
    %v2774 = vsub.s32 0, %v2773
    %v2775 = vrot.slane %v2225, %v2774
    %v2776 = vadd.f32 %v2771, %v2775
    %vm2777 = vcmp.ge.f32.partialorder %v2776, 0.0
    %v2778 = vmul.f32 %v2776, 0.01
    %v2779 = vsel %vm2777, %v2776, %v2778
    %v2780 = vld [vmem:[#allocation2 + $0x128] sm:$0xff]
    %v2781 = vld [vmem:[#allocation2 + $0x130] sm:$0xff]
    %v2782 = vld [vmem:[#allocation2 + $0x138] sm:$0xff]
    %v2783 = vld [vmem:[#allocation2 + $0x140] sm:$0xff]
    %v2784 = vld [vmem:[#allocation2 + $0x148] sm:$0x1]
    %v2785 = vlaneseq
    %v2786 = vshrl.u32 %v2785, 7
    %v2787 = vsub.s32 0, %v2786
    %v2788 = vrot.slane %v2784, %v2787
    %v2790 = vsel %vm35, %v2779, 0
    %2792 = vmatprep.subr.mxu0 0.0
    %v2793 = vand.u32 %v2780, 4294901760
    %2794 = vmatpush1.msra.mxu0 %v2793
    %2795 = vmatprep.subr.mxu0 0.0
    %v2796 = vand.u32 %v2781, 4294901760
    %2797 = vmatpush1.msra.mxu0 %v2796
    %2798 = vmatprep.subr.mxu0 0.0
    %v2799 = vand.u32 %v2782, 4294901760
    %2800 = vmatpush1.msra.mxu0 %v2799
    %2801 = vmatprep.subr.mxu0 0.0
    %v2802 = vand.u32 %v2783, 4294901760
    %2803 = vmatpush1.msra.mxu0 %v2802
    %2804 = vmatprep.subr.mxu0 0.0
    %2805 = vmatpush1.msra.mxu0 0.0
    %2806 = vmatprep.subr.mxu0 0.0
    %2807 = vmatpush1.msra.mxu0 0.0
    %2808 = vmatprep.subr.mxu0 0.0
    %2809 = vmatpush1.msra.mxu0 0.0
    %2810 = vmatprep.subr.mxu0 0.0
    %2811 = vmatpush1.msra.mxu0 0.0
    %2812 = vmatprep.subr.mxu0 0.0
    %2813 = vmatpush1.msra.mxu0 0.0
    %2814 = vmatprep.subr.mxu0 0.0
    %2815 = vmatpush1.msra.mxu0 0.0
    %2816 = vmatprep.subr.mxu0 0.0
    %2817 = vmatpush1.msra.mxu0 0.0
    %2818 = vmatprep.subr.mxu0 0.0
    %2819 = vmatpush1.msra.mxu0 0.0
    %2820 = vmatprep.subr.mxu0 0.0
    %2821 = vmatpush1.msra.mxu0 0.0
    %2822 = vmatprep.subr.mxu0 0.0
    %2823 = vmatpush1.msra.mxu0 0.0
    %2824 = vmatprep.subr.mxu0 0.0
    %2825 = vmatpush1.msra.mxu0 0.0
    %2826 = vmatprep.subr.mxu0 0.0
    %2827 = vmatpush1.msra.mxu0 0.0
    %2828 = vmatprep.subr.mxu0 0.0
    %2829 = vmatpush1.msra.mxu0 0.0
    %2830 = vmatprep.subr.mxu0 0.0
    %2831 = vmatpush1.msra.mxu0 0.0
    %2832 = vmatprep.subr.mxu0 0.0
    %2833 = vmatpush1.msra.mxu0 0.0
    %2834 = vmatprep.subr.mxu0 0.0
    %2835 = vmatpush1.msra.mxu0 0.0
    %2836 = vmatprep.subr.mxu0 0.0
    %2837 = vmatpush1.msra.mxu0 0.0
    %2838 = vmatprep.subr.mxu0 0.0
    %2839 = vmatpush1.msra.mxu0 0.0
    %2840 = vmatprep.subr.mxu0 0.0
    %2841 = vmatpush1.msra.mxu0 0.0
    %2842 = vmatprep.subr.mxu0 0.0
    %2843 = vmatpush1.msra.mxu0 0.0
    %2844 = vmatprep.subr.mxu0 0.0
    %2845 = vmatpush1.msra.mxu0 0.0
    %2846 = vmatprep.subr.mxu0 0.0
    %2847 = vmatpush1.msra.mxu0 0.0
    %2848 = vmatprep.subr.mxu0 0.0
    %2849 = vmatpush1.msra.mxu0 0.0
    %2850 = vmatprep.subr.mxu0 0.0
    %2851 = vmatpush1.msra.mxu0 0.0
    %2852 = vmatprep.subr.mxu0 0.0
    %2853 = vmatpush1.msra.mxu0 0.0
    %2854 = vmatprep.subr.mxu0 0.0
    %2855 = vmatpush1.msra.mxu0 0.0
    %2856 = vmatprep.subr.mxu0 0.0
    %2857 = vmatpush1.msra.mxu0 0.0
    %2858 = vmatprep.subr.mxu0 0.0
    %2859 = vmatpush1.msra.mxu0 0.0
    %2860 = vmatprep.mubr.f32.mxu0 0.0
    %v2861 = vand.u32 %v2790, 4294901760
    %v2862 = vsub.f32 %v2790, %v2861
    %v2863 = vand.u32 %v2862, 4294901760
    %v2864 = vsub.f32 %v2862, %v2863
    %v2865 = vand.u32 %v2864, 4294901760
    %2866 = vmatmul.mubr.f32.gmra.mrb[0].mxu0 %v2865
    %v2867 = vpop.f32.mrb[0].mxu0
    %v2868 = vadd.f32 %v2788, %v2867
    %v2869 = vpop.f32.mrb[0].mxu0
    %2870 = vdwg.mxu0
    %2871 = vmatprep.subr.mxu0 0.0
    %v2872 = vand.u32 %v2780, 4294901760
    %v2873 = vsub.f32 %v2780, %v2872
    %v2874 = vand.u32 %v2873, 4294901760
    %v2875 = vsub.f32 %v2873, %v2874
    %v2876 = vand.u32 %v2875, 4294901760
    %2877 = vmatpush1.msra.mxu0 %v2876
    %2878 = vmatprep.subr.mxu0 0.0
    %v2879 = vand.u32 %v2781, 4294901760
    %v2880 = vsub.f32 %v2781, %v2879
    %v2881 = vand.u32 %v2880, 4294901760
    %v2882 = vsub.f32 %v2880, %v2881
    %v2883 = vand.u32 %v2882, 4294901760
    %2884 = vmatpush1.msra.mxu0 %v2883
    %2885 = vmatprep.subr.mxu0 0.0
    %v2886 = vand.u32 %v2782, 4294901760
    %v2887 = vsub.f32 %v2782, %v2886
    %v2888 = vand.u32 %v2887, 4294901760
    %v2889 = vsub.f32 %v2887, %v2888
    %v2890 = vand.u32 %v2889, 4294901760
    %2891 = vmatpush1.msra.mxu0 %v2890
    %2892 = vmatprep.subr.mxu0 0.0
    %v2893 = vand.u32 %v2783, 4294901760
    %v2894 = vsub.f32 %v2783, %v2893
    %v2895 = vand.u32 %v2894, 4294901760
    %v2896 = vsub.f32 %v2894, %v2895
    %v2897 = vand.u32 %v2896, 4294901760
    %2898 = vmatpush1.msra.mxu0 %v2897
    %2899 = vmatprep.subr.mxu0 0.0
    %2900 = vmatpush1.msra.mxu0 0.0
    %2901 = vmatprep.subr.mxu0 0.0
    %2902 = vmatpush1.msra.mxu0 0.0
    %2903 = vmatprep.subr.mxu0 0.0
    %2904 = vmatpush1.msra.mxu0 0.0
    %2905 = vmatprep.subr.mxu0 0.0
    %2906 = vmatpush1.msra.mxu0 0.0
    %2907 = vmatprep.subr.mxu0 0.0
    %2908 = vmatpush1.msra.mxu0 0.0
    %2909 = vmatprep.subr.mxu0 0.0
    %2910 = vmatpush1.msra.mxu0 0.0
    %2911 = vmatprep.subr.mxu0 0.0
    %2912 = vmatpush1.msra.mxu0 0.0
    %2913 = vmatprep.subr.mxu0 0.0
    %2914 = vmatpush1.msra.mxu0 0.0
    %2915 = vmatprep.subr.mxu0 0.0
    %2916 = vmatpush1.msra.mxu0 0.0
    %2917 = vmatprep.subr.mxu0 0.0
    %2918 = vmatpush1.msra.mxu0 0.0
    %2919 = vmatprep.subr.mxu0 0.0
    %2920 = vmatpush1.msra.mxu0 0.0
    %2921 = vmatprep.subr.mxu0 0.0
    %2922 = vmatpush1.msra.mxu0 0.0
    %2923 = vmatprep.subr.mxu0 0.0
    %2924 = vmatpush1.msra.mxu0 0.0
    %2925 = vmatprep.subr.mxu0 0.0
    %2926 = vmatpush1.msra.mxu0 0.0
    %2927 = vmatprep.subr.mxu0 0.0
    %2928 = vmatpush1.msra.mxu0 0.0
    %2929 = vmatprep.subr.mxu0 0.0
    %2930 = vmatpush1.msra.mxu0 0.0
    %2931 = vmatprep.subr.mxu0 0.0
    %2932 = vmatpush1.msra.mxu0 0.0
    %2933 = vmatprep.subr.mxu0 0.0
    %2934 = vmatpush1.msra.mxu0 0.0
    %2935 = vmatprep.subr.mxu0 0.0
    %2936 = vmatpush1.msra.mxu0 0.0
    %2937 = vmatprep.subr.mxu0 0.0
    %2938 = vmatpush1.msra.mxu0 0.0
    %2939 = vmatprep.subr.mxu0 0.0
    %2940 = vmatpush1.msra.mxu0 0.0
    %2941 = vmatprep.subr.mxu0 0.0
    %2942 = vmatpush1.msra.mxu0 0.0
    %2943 = vmatprep.subr.mxu0 0.0
    %2944 = vmatpush1.msra.mxu0 0.0
    %2945 = vmatprep.subr.mxu0 0.0
    %2946 = vmatpush1.msra.mxu0 0.0
    %2947 = vmatprep.subr.mxu0 0.0
    %2948 = vmatpush1.msra.mxu0 0.0
    %2949 = vmatprep.subr.mxu0 0.0
    %2950 = vmatpush1.msra.mxu0 0.0
    %2951 = vmatprep.subr.mxu0 0.0
    %2952 = vmatpush1.msra.mxu0 0.0
    %2953 = vmatprep.subr.mxu0 0.0
    %2954 = vmatpush1.msra.mxu0 0.0
    %2955 = vmatprep.mubr.f32.mxu0 0.0
    %v2956 = vand.u32 %v2790, 4294901760
    %2957 = vmatmul.mubr.f32.gmra.mrb[0].mxu0 %v2956
    %v2958 = vpop.f32.mrb[0].mxu0
    %v2959 = vadd.f32 %v2868, %v2958
    %v2960 = vpop.f32.mrb[0].mxu0
    %2961 = vdwg.mxu0
    %2962 = vmatprep.subr.mxu0 0.0
    %v2963 = vand.u32 %v2780, 4294901760
    %v2964 = vsub.f32 %v2780, %v2963
    %2965 = vmatpush1.msra.mxu0 %v2964
    %2966 = vmatprep.subr.mxu0 0.0
    %v2967 = vand.u32 %v2781, 4294901760
    %v2968 = vsub.f32 %v2781, %v2967
    %2969 = vmatpush1.msra.mxu0 %v2968
    %2970 = vmatprep.subr.mxu0 0.0
    %v2971 = vand.u32 %v2782, 4294901760
    %v2972 = vsub.f32 %v2782, %v2971
    %2973 = vmatpush1.msra.mxu0 %v2972
    %2974 = vmatprep.subr.mxu0 0.0
    %v2975 = vand.u32 %v2783, 4294901760
    %v2976 = vsub.f32 %v2783, %v2975
    %2977 = vmatpush1.msra.mxu0 %v2976
    %2978 = vmatprep.subr.mxu0 0.0
    %2979 = vmatpush1.msra.mxu0 0.0
    %2980 = vmatprep.subr.mxu0 0.0
    %2981 = vmatpush1.msra.mxu0 0.0
    %2982 = vmatprep.subr.mxu0 0.0
    %2983 = vmatpush1.msra.mxu0 0.0
    %2984 = vmatprep.subr.mxu0 0.0
    %2985 = vmatpush1.msra.mxu0 0.0
    %2986 = vmatprep.subr.mxu0 0.0
    %2987 = vmatpush1.msra.mxu0 0.0
    %2988 = vmatprep.subr.mxu0 0.0
    %2989 = vmatpush1.msra.mxu0 0.0
    %2990 = vmatprep.subr.mxu0 0.0
    %2991 = vmatpush1.msra.mxu0 0.0
    %2992 = vmatprep.subr.mxu0 0.0
    %2993 = vmatpush1.msra.mxu0 0.0
    %2994 = vmatprep.subr.mxu0 0.0
    %2995 = vmatpush1.msra.mxu0 0.0
    %2996 = vmatprep.subr.mxu0 0.0
    %2997 = vmatpush1.msra.mxu0 0.0
    %2998 = vmatprep.subr.mxu0 0.0
    %2999 = vmatpush1.msra.mxu0 0.0
    %3000 = vmatprep.subr.mxu0 0.0
    %3001 = vmatpush1.msra.mxu0 0.0
    %3002 = vmatprep.subr.mxu0 0.0
    %3003 = vmatpush1.msra.mxu0 0.0
    %3004 = vmatprep.subr.mxu0 0.0
    %3005 = vmatpush1.msra.mxu0 0.0
    %3006 = vmatprep.subr.mxu0 0.0
    %3007 = vmatpush1.msra.mxu0 0.0
    %3008 = vmatprep.subr.mxu0 0.0
    %3009 = vmatpush1.msra.mxu0 0.0
    %3010 = vmatprep.subr.mxu0 0.0
    %3011 = vmatpush1.msra.mxu0 0.0
    %3012 = vmatprep.subr.mxu0 0.0
    %3013 = vmatpush1.msra.mxu0 0.0
    %3014 = vmatprep.subr.mxu0 0.0
    %3015 = vmatpush1.msra.mxu0 0.0
    %3016 = vmatprep.subr.mxu0 0.0
    %3017 = vmatpush1.msra.mxu0 0.0
    %3018 = vmatprep.subr.mxu0 0.0
    %3019 = vmatpush1.msra.mxu0 0.0
    %3020 = vmatprep.subr.mxu0 0.0
    %3021 = vmatpush1.msra.mxu0 0.0
    %3022 = vmatprep.subr.mxu0 0.0
    %3023 = vmatpush1.msra.mxu0 0.0
    %3024 = vmatprep.subr.mxu0 0.0
    %3025 = vmatpush1.msra.mxu0 0.0
    %3026 = vmatprep.subr.mxu0 0.0
    %3027 = vmatpush1.msra.mxu0 0.0
    %3028 = vmatprep.subr.mxu0 0.0
    %3029 = vmatpush1.msra.mxu0 0.0
    %3030 = vmatprep.subr.mxu0 0.0
    %3031 = vmatpush1.msra.mxu0 0.0
    %3032 = vmatprep.subr.mxu0 0.0
    %3033 = vmatpush1.msra.mxu0 0.0
    %3034 = vmatprep.mubr.f32.mxu0 0.0
    %v3035 = vand.u32 %v2790, 4294901760
    %v3036 = vsub.f32 %v2790, %v3035
    %3037 = vmatmul.mubr.f32.gmra.mrb[0].mxu0 %v3036
    %v3038 = vpop.f32.mrb[0].mxu0
    %v3039 = vadd.f32 %v2959, %v3038
    %v3040 = vpop.f32.mrb[0].mxu0
    %3041 = vdwg.mxu0
    %3042 = vmatprep.subr.mxu0 0.0
    %v3043 = vand.u32 %v2780, 4294901760
    %3044 = vmatpush1.msra.mxu0 %v3043
    %3045 = vmatprep.subr.mxu0 0.0
    %v3046 = vand.u32 %v2781, 4294901760
    %3047 = vmatpush1.msra.mxu0 %v3046
    %3048 = vmatprep.subr.mxu0 0.0
    %v3049 = vand.u32 %v2782, 4294901760
    %3050 = vmatpush1.msra.mxu0 %v3049
    %3051 = vmatprep.subr.mxu0 0.0
    %v3052 = vand.u32 %v2783, 4294901760
    %3053 = vmatpush1.msra.mxu0 %v3052
    %3054 = vmatprep.subr.mxu0 0.0
    %3055 = vmatpush1.msra.mxu0 0.0
    %3056 = vmatprep.subr.mxu0 0.0
    %3057 = vmatpush1.msra.mxu0 0.0
    %3058 = vmatprep.subr.mxu0 0.0
    %3059 = vmatpush1.msra.mxu0 0.0
    %3060 = vmatprep.subr.mxu0 0.0
    %3061 = vmatpush1.msra.mxu0 0.0
    %3062 = vmatprep.subr.mxu0 0.0
    %3063 = vmatpush1.msra.mxu0 0.0
    %3064 = vmatprep.subr.mxu0 0.0
    %3065 = vmatpush1.msra.mxu0 0.0
    %3066 = vmatprep.subr.mxu0 0.0
    %3067 = vmatpush1.msra.mxu0 0.0
    %3068 = vmatprep.subr.mxu0 0.0
    %3069 = vmatpush1.msra.mxu0 0.0
    %3070 = vmatprep.subr.mxu0 0.0
    %3071 = vmatpush1.msra.mxu0 0.0
    %3072 = vmatprep.subr.mxu0 0.0
    %3073 = vmatpush1.msra.mxu0 0.0
    %3074 = vmatprep.subr.mxu0 0.0
    %3075 = vmatpush1.msra.mxu0 0.0
    %3076 = vmatprep.subr.mxu0 0.0
    %3077 = vmatpush1.msra.mxu0 0.0
    %3078 = vmatprep.subr.mxu0 0.0
    %3079 = vmatpush1.msra.mxu0 0.0
    %3080 = vmatprep.subr.mxu0 0.0
    %3081 = vmatpush1.msra.mxu0 0.0
    %3082 = vmatprep.subr.mxu0 0.0
    %3083 = vmatpush1.msra.mxu0 0.0
    %3084 = vmatprep.subr.mxu0 0.0
    %3085 = vmatpush1.msra.mxu0 0.0
    %3086 = vmatprep.subr.mxu0 0.0
    %3087 = vmatpush1.msra.mxu0 0.0
    %3088 = vmatprep.subr.mxu0 0.0
    %3089 = vmatpush1.msra.mxu0 0.0
    %3090 = vmatprep.subr.mxu0 0.0
    %3091 = vmatpush1.msra.mxu0 0.0
    %3092 = vmatprep.subr.mxu0 0.0
    %3093 = vmatpush1.msra.mxu0 0.0
    %3094 = vmatprep.subr.mxu0 0.0
    %3095 = vmatpush1.msra.mxu0 0.0
    %3096 = vmatprep.subr.mxu0 0.0
    %3097 = vmatpush1.msra.mxu0 0.0
    %3098 = vmatprep.subr.mxu0 0.0
    %3099 = vmatpush1.msra.mxu0 0.0
    %3100 = vmatprep.subr.mxu0 0.0
    %3101 = vmatpush1.msra.mxu0 0.0
    %3102 = vmatprep.subr.mxu0 0.0
    %3103 = vmatpush1.msra.mxu0 0.0
    %3104 = vmatprep.subr.mxu0 0.0
    %3105 = vmatpush1.msra.mxu0 0.0
    %3106 = vmatprep.subr.mxu0 0.0
    %3107 = vmatpush1.msra.mxu0 0.0
    %3108 = vmatprep.subr.mxu0 0.0
    %3109 = vmatpush1.msra.mxu0 0.0
    %3110 = vmatprep.mubr.f32.mxu0 0.0
    %v3111 = vand.u32 %v2790, 4294901760
    %v3112 = vsub.f32 %v2790, %v3111
    %v3113 = vand.u32 %v3112, 4294901760
    %3114 = vmatmul.mubr.f32.gmra.mrb[0].mxu0 %v3113
    %v3115 = vpop.f32.mrb[0].mxu0
    %v3116 = vadd.f32 %v3039, %v3115
    %v3117 = vpop.f32.mrb[0].mxu0
    %3118 = vdwg.mxu0
    %3119 = vmatprep.subr.mxu0 0.0
    %v3120 = vand.u32 %v2780, 4294901760
    %v3121 = vsub.f32 %v2780, %v3120
    %v3122 = vand.u32 %v3121, 4294901760
    %3123 = vmatpush1.msra.mxu0 %v3122
    %3124 = vmatprep.subr.mxu0 0.0
    %v3125 = vand.u32 %v2781, 4294901760
    %v3126 = vsub.f32 %v2781, %v3125
    %v3127 = vand.u32 %v3126, 4294901760
    %3128 = vmatpush1.msra.mxu0 %v3127
    %3129 = vmatprep.subr.mxu0 0.0
    %v3130 = vand.u32 %v2782, 4294901760
    %v3131 = vsub.f32 %v2782, %v3130
    %v3132 = vand.u32 %v3131, 4294901760
    %3133 = vmatpush1.msra.mxu0 %v3132
    %3134 = vmatprep.subr.mxu0 0.0
    %v3135 = vand.u32 %v2783, 4294901760
    %v3136 = vsub.f32 %v2783, %v3135
    %v3137 = vand.u32 %v3136, 4294901760
    %3138 = vmatpush1.msra.mxu0 %v3137
    %3139 = vmatprep.subr.mxu0 0.0
    %3140 = vmatpush1.msra.mxu0 0.0
    %3141 = vmatprep.subr.mxu0 0.0
    %3142 = vmatpush1.msra.mxu0 0.0
    %3143 = vmatprep.subr.mxu0 0.0
    %3144 = vmatpush1.msra.mxu0 0.0
    %3145 = vmatprep.subr.mxu0 0.0
    %3146 = vmatpush1.msra.mxu0 0.0
    %3147 = vmatprep.subr.mxu0 0.0
    %3148 = vmatpush1.msra.mxu0 0.0
    %3149 = vmatprep.subr.mxu0 0.0
    %3150 = vmatpush1.msra.mxu0 0.0
    %3151 = vmatprep.subr.mxu0 0.0
    %3152 = vmatpush1.msra.mxu0 0.0
    %3153 = vmatprep.subr.mxu0 0.0
    %3154 = vmatpush1.msra.mxu0 0.0
    %3155 = vmatprep.subr.mxu0 0.0
    %3156 = vmatpush1.msra.mxu0 0.0
    %3157 = vmatprep.subr.mxu0 0.0
    %3158 = vmatpush1.msra.mxu0 0.0
    %3159 = vmatprep.subr.mxu0 0.0
    %3160 = vmatpush1.msra.mxu0 0.0
    %3161 = vmatprep.subr.mxu0 0.0
    %3162 = vmatpush1.msra.mxu0 0.0
    %3163 = vmatprep.subr.mxu0 0.0
    %3164 = vmatpush1.msra.mxu0 0.0
    %3165 = vmatprep.subr.mxu0 0.0
    %3166 = vmatpush1.msra.mxu0 0.0
    %3167 = vmatprep.subr.mxu0 0.0
    %3168 = vmatpush1.msra.mxu0 0.0
    %3169 = vmatprep.subr.mxu0 0.0
    %3170 = vmatpush1.msra.mxu0 0.0
    %3171 = vmatprep.subr.mxu0 0.0
    %3172 = vmatpush1.msra.mxu0 0.0
    %3173 = vmatprep.subr.mxu0 0.0
    %3174 = vmatpush1.msra.mxu0 0.0
    %3175 = vmatprep.subr.mxu0 0.0
    %3176 = vmatpush1.msra.mxu0 0.0
    %3177 = vmatprep.subr.mxu0 0.0
    %3178 = vmatpush1.msra.mxu0 0.0
    %3179 = vmatprep.subr.mxu0 0.0
    %3180 = vmatpush1.msra.mxu0 0.0
    %3181 = vmatprep.subr.mxu0 0.0
    %3182 = vmatpush1.msra.mxu0 0.0
    %3183 = vmatprep.subr.mxu0 0.0
    %3184 = vmatpush1.msra.mxu0 0.0
    %3185 = vmatprep.subr.mxu0 0.0
    %3186 = vmatpush1.msra.mxu0 0.0
    %3187 = vmatprep.subr.mxu0 0.0
    %3188 = vmatpush1.msra.mxu0 0.0
    %3189 = vmatprep.subr.mxu0 0.0
    %3190 = vmatpush1.msra.mxu0 0.0
    %3191 = vmatprep.subr.mxu0 0.0
    %3192 = vmatpush1.msra.mxu0 0.0
    %3193 = vmatprep.subr.mxu0 0.0
    %3194 = vmatpush1.msra.mxu0 0.0
    %3195 = vmatprep.mubr.f32.mxu0 0.0
    %v3196 = vand.u32 %v2790, 4294901760
    %3197 = vmatmul.mubr.f32.gmra.mrb[0].mxu0 %v3196
    %v3198 = vpop.f32.mrb[0].mxu0
    %v3199 = vadd.f32 %v3116, %v3198
    %v3200 = vpop.f32.mrb[0].mxu0
    %3201 = vdwg.mxu0
    %3202 = vmatprep.subr.mxu0 0.0
    %v3203 = vand.u32 %v2780, 4294901760
    %3204 = vmatpush1.msra.mxu0 %v3203
    %3205 = vmatprep.subr.mxu0 0.0
    %v3206 = vand.u32 %v2781, 4294901760
    %3207 = vmatpush1.msra.mxu0 %v3206
    %3208 = vmatprep.subr.mxu0 0.0
    %v3209 = vand.u32 %v2782, 4294901760
    %3210 = vmatpush1.msra.mxu0 %v3209
    %3211 = vmatprep.subr.mxu0 0.0
    %v3212 = vand.u32 %v2783, 4294901760
    %3213 = vmatpush1.msra.mxu0 %v3212
    %3214 = vmatprep.subr.mxu0 0.0
    %3215 = vmatpush1.msra.mxu0 0.0
    %3216 = vmatprep.subr.mxu0 0.0
    %3217 = vmatpush1.msra.mxu0 0.0
    %3218 = vmatprep.subr.mxu0 0.0
    %3219 = vmatpush1.msra.mxu0 0.0
    %3220 = vmatprep.subr.mxu0 0.0
    %3221 = vmatpush1.msra.mxu0 0.0
    %3222 = vmatprep.subr.mxu0 0.0
    %3223 = vmatpush1.msra.mxu0 0.0
    %3224 = vmatprep.subr.mxu0 0.0
    %3225 = vmatpush1.msra.mxu0 0.0
    %3226 = vmatprep.subr.mxu0 0.0
    %3227 = vmatpush1.msra.mxu0 0.0
    %3228 = vmatprep.subr.mxu0 0.0
    %3229 = vmatpush1.msra.mxu0 0.0
    %3230 = vmatprep.subr.mxu0 0.0
    %3231 = vmatpush1.msra.mxu0 0.0
    %3232 = vmatprep.subr.mxu0 0.0
    %3233 = vmatpush1.msra.mxu0 0.0
    %3234 = vmatprep.subr.mxu0 0.0
    %3235 = vmatpush1.msra.mxu0 0.0
    %3236 = vmatprep.subr.mxu0 0.0
    %3237 = vmatpush1.msra.mxu0 0.0
    %3238 = vmatprep.subr.mxu0 0.0
    %3239 = vmatpush1.msra.mxu0 0.0
    %3240 = vmatprep.subr.mxu0 0.0
    %3241 = vmatpush1.msra.mxu0 0.0
    %3242 = vmatprep.subr.mxu0 0.0
    %3243 = vmatpush1.msra.mxu0 0.0
    %3244 = vmatprep.subr.mxu0 0.0
    %3245 = vmatpush1.msra.mxu0 0.0
    %3246 = vmatprep.subr.mxu0 0.0
    %3247 = vmatpush1.msra.mxu0 0.0
    %3248 = vmatprep.subr.mxu0 0.0
    %3249 = vmatpush1.msra.mxu0 0.0
    %3250 = vmatprep.subr.mxu0 0.0
    %3251 = vmatpush1.msra.mxu0 0.0
    %3252 = vmatprep.subr.mxu0 0.0
    %3253 = vmatpush1.msra.mxu0 0.0
    %3254 = vmatprep.subr.mxu0 0.0
    %3255 = vmatpush1.msra.mxu0 0.0
    %3256 = vmatprep.subr.mxu0 0.0
    %3257 = vmatpush1.msra.mxu0 0.0
    %3258 = vmatprep.subr.mxu0 0.0
    %3259 = vmatpush1.msra.mxu0 0.0
    %3260 = vmatprep.subr.mxu0 0.0
    %3261 = vmatpush1.msra.mxu0 0.0
    %3262 = vmatprep.subr.mxu0 0.0
    %3263 = vmatpush1.msra.mxu0 0.0
    %3264 = vmatprep.subr.mxu0 0.0
    %3265 = vmatpush1.msra.mxu0 0.0
    %3266 = vmatprep.subr.mxu0 0.0
    %3267 = vmatpush1.msra.mxu0 0.0
    %3268 = vmatprep.subr.mxu0 0.0
    %3269 = vmatpush1.msra.mxu0 0.0
    %3270 = vmatprep.mubr.f32.mxu0 0.0
    %v3271 = vand.u32 %v2790, 4294901760
    %3272 = vmatmul.mubr.f32.gmra.mrb[0].mxu0 %v3271
    %v3273 = vpop.f32.mrb[0].mxu0
    %v3274 = vadd.f32 %v3199, %v3273
    %v3275 = vpop.f32.mrb[0].mxu0
    %3276 = vdwg.mxu0
    %v3277 = vtanh.pop %v3274
    %3278 = vst [vmem:[%s2] sm:$0xff] %v3277
    // Predicated region
    $region14: #{fn.1} parent=1 // pred_check
      _
    $region15: #{fn.1} parent=1 // pred_check_branch
      %3280 = sbr.rel (0) target = $region17
    $region16: #{fn.1} parent=1 // pred_region
      _
    $region17: #{fn.1} parent=1 // pred_fallthru
      _
    // Predicated region
    $region18: #{fn.1} parent=1 // pred_check
      _
    $region19: #{fn.1} parent=1 // pred_check_branch
      %3282 = sbr.rel (0) target = $region21
    $region20: #{fn.1} parent=1 // pred_region
      _
    $region21: #{fn.1} parent=1 // pred_fallthru
      _
    %3283 = vsyncpa [#allocation3], 1

</llo_original>
